<compile_context>
chip_gen: v6e
topology: v6e:2x2x1
jax: 0.10.0
libtpu: 0.0.40
codegen_flags: <defaults>
</compile_context>

<pallas_src>
import functools

import jax
import jax.numpy as jnp
import numpy as np
from jax import lax
from jax.experimental import pallas as pl
from jax.experimental.pallas import tpu as pltpu

_LANES = 128
_SUBLANES = 8


def _round_up(v, m):
    return ((v + m - 1) // m) * m


def _cdiv(a, b):
    return (a + b - 1) // b


def _sigmoid(x):
    # sigmoid(x) = 0.5*(1 + tanh(x/2)): one EUP push (tanh) + 2 cheap VPU ops,
    # instead of exp + reciprocal (2 EUP pushes).
    return 0.5 * (jnp.tanh(0.5 * x) + 1.0)


# ----------------------------------------------------------------------------
# Pallas kernel: one chunk of `chunk` timesteps per grid iteration.
#   x_ref   : (chunk, Bt, Ip) f32      m_ref : (chunk, Bt, 1) f32
#   wih_hbm : (Ip, 4*Hp)  in HBM (pl.ANY)     whh_hbm : (Hp, 4*Hp) in HBM
#   b_ref   : (1, 4*Hp) f32   h0_ref/c0_ref : (1, Hp) f32
#   out_ref : (chunk, Bt, Hp) f32
#   gx_scr  : (chunk, Bt, 4*Hp) f32   hoisted input-projection gates
#   h_scr / c_scr : (Bt, Hp) f32      persistent recurrent state
#   wih_vmem / whh_vmem : single-buffered resident weights
#   wsem    : DMA semaphores for the weight copies
# ----------------------------------------------------------------------------
def _lstm_chunk_kernel(x_ref, m_ref, wih_hbm, whh_hbm, b_ref, h0_ref, c0_ref,
                       out_ref, gx_scr, h_scr, c_scr, wih_vmem, whh_vmem,
                       wsem, *, chunk, hp, backward, unroll):
    ci = pl.program_id(1)          # time-chunk index (sequential axis)
    bt = h_scr.shape[0]

    # Start of each batch chunk: stage the weights once into single-buffered
    # VMEM scratch and (re)initialize the recurrent state.
    @pl.when(ci == 0)
    def _():
        cp_ih = pltpu.make_async_copy(wih_hbm, wih_vmem, wsem.at[0])
        cp_hh = pltpu.make_async_copy(whh_hbm, whh_vmem, wsem.at[1])
        cp_ih.start()
        cp_hh.start()
        h_scr[...] = jnp.broadcast_to(h0_ref[...], (bt, hp))
        c_scr[...] = jnp.broadcast_to(c0_ref[...], (bt, hp))
        cp_ih.wait()
        cp_hh.wait()

    mm_dtype = wih_vmem.dtype

    # ---- Hoisted input projection (off the serial path) --------------------
    # One big-M matmul for the whole chunk keeps the MXU full; the bias rides
    # along here so the recurrence only adds gx_scr[lt].
    x_all = x_ref[...].reshape(chunk * bt, -1).astype(mm_dtype)
    gx = jnp.dot(x_all, wih_vmem[...], preferred_element_type=jnp.float32)
    gx_scr[...] = (gx + b_ref[...]).reshape(chunk, bt, 4 * hp)

    whh = whh_vmem[...]

    def step(j, carry):
        lt = (chunk - 1 - j) if backward else j

        h_prev = h_scr[...]
        c_prev = c_scr[...]

        # Serial path: only the (Bt, Hp) x (Hp, 4*Hp) recurrent matmul.
        gates = gx_scr[lt] + jnp.dot(h_prev.astype(mm_dtype), whh,
                                     preferred_element_type=jnp.float32)

        # PyTorch LSTMCell gate order i, f, g, o; Hp is 128-lane aligned so
        # every gate slice is lane-dense.
        i_g = _sigmoid(gates[:, 0 * hp:1 * hp])
        f_g = _sigmoid(gates[:, 1 * hp:2 * hp])
        g_g = jnp.tanh(gates[:, 2 * hp:3 * hp])
        o_g = _sigmoid(gates[:, 3 * hp:4 * hp])

        c_new = f_g * c_prev + i_g * g_g
        h_new = o_g * jnp.tanh(c_new)

        # Exact convex blend (matches the reference for any mask value).
        m = m_ref[lt]                                   # (Bt, 1)
        h_next = h_prev + m * (h_new - h_prev)
        c_next = c_prev + m * (c_new - c_prev)

        h_scr[...] = h_next
        c_scr[...] = c_next
        out_ref[lt] = h_next
        return carry

    lax.fori_loop(0, chunk, step, 0, unroll=unroll)


# ----------------------------------------------------------------------------
# Wrapper (PyTorch-compatible (B, L, ...) layout on the outside).
# ----------------------------------------------------------------------------
@functools.partial(
    jax.jit,
    static_argnames=("backward", "time_block", "batch_block", "param_dtype"))
def lstm_rnn_forward(x, mask, w_ih, w_hh, b_ih, b_hh, h0, c0, backward=False,
                     time_block=32, batch_block=None,
                     param_dtype=jnp.float32):
    """x: (B, L, I) f32, mask: (B, L) f32  ->  (B, L, H) f32."""
    B, L, I = x.shape
    H = h0.shape[1]
    f32 = jnp.float32
    pdt = np.dtype(param_dtype)

    Hp = _round_up(H, _LANES)
    Ip = _round_up(I, _LANES)

    # Batch blocking: aim for >= 2 batch chunks so the "parallel" axis can be
    # split across both TensorCores on v7x (harmless on 1-TC v5e/v6e).
    if batch_block is None:
        b8 = _round_up(B, _SUBLANES)
        batch_block = min(128, _round_up(_cdiv(b8, 2), _SUBLANES))
    batch_block = max(_SUBLANES, _round_up(batch_block, _SUBLANES))
    Bp = _round_up(B, batch_block)

    time_block = int(max(1, min(time_block, _round_up(L, _SUBLANES))))
    Lp = _round_up(L, time_block)
    nb = Bp // batch_block
    nc = Lp // time_block

    # Fused, padded weights: gate g owns the lane-aligned columns
    # [g*Hp, (g+1)*Hp); padded rows/cols are zero so padded lanes never leak
    # into real lanes.
    wih_g = jnp.transpose(w_ih.astype(f32).reshape(4, H, I), (2, 0, 1))  # (I,4,H)
    whh_g = jnp.transpose(w_hh.astype(f32).reshape(4, H, H), (2, 0, 1))  # (H,4,H)
    b_g = (b_ih + b_hh).astype(f32).reshape(4, H)

    wih_f = jnp.zeros((Ip, 4, Hp), f32).at[:I, :, :H].set(wih_g)
    wih_f = wih_f.reshape(Ip, 4 * Hp).astype(pdt)
    whh_f = jnp.zeros((Hp, 4, Hp), f32).at[:H, :, :H].set(whh_g)
    whh_f = whh_f.reshape(Hp, 4 * Hp).astype(pdt)
    b_f = jnp.zeros((1, 4, Hp), f32).at[0, :, :H].set(b_g).reshape(1, 4 * Hp)

    h0p = jnp.zeros((1, Hp), f32).at[:, :H].set(h0.astype(f32))
    c0p = jnp.zeros((1, Hp), f32).at[:, :H].set(c0.astype(f32))

    # Time-major, padded operands.  Padded steps / batch rows have mask == 0,
    # so the state is frozen there and the outputs are sliced off below.
    x_p = jnp.zeros((Lp, Bp, Ip), f32).at[:L, :B, :I].set(
        jnp.transpose(x.astype(f32), (1, 0, 2)))
    m_p = jnp.zeros((Lp, Bp, 1), f32).at[:L, :B, 0].set(
        jnp.transpose(mask.astype(f32), (1, 0)))

    if backward:
        tmap = lambda bi, ci: (nc - 1 - ci, bi, 0)
    else:
        tmap = lambda bi, ci: (ci, bi, 0)
    cmap = lambda bi, ci: (0, 0)

    unroll = True if time_block <= 8 else 8
    kernel = functools.partial(_lstm_chunk_kernel, chunk=time_block, hp=Hp,
                               backward=backward, unroll=unroll)

    # Per-generation VMEM cap (~80% of physical: ~102 MiB on v5e/v6e, ~51 MiB
    # on v7x); conservative fallback if the query is unavailable.
    try:
        vmem_phys = int(pltpu.get_tpu_info().vmem_capacity_bytes)
    except Exception:
        vmem_phys = 64 * 2 ** 20
    vmem_cap = max(32 * 2 ** 20, int(0.8 * vmem_phys))

    psz = pdt.itemsize
    blk = time_block * batch_block * (Ip * 4 + 4)            # x + mask block
    blk += time_block * batch_block * Hp * 4                 # out block
    small = 4 * (4 * Hp + 2 * Hp)                            # bias, h0, c0
    weights = (Ip + Hp) * 4 * Hp * psz                       # single-buffered
    scratch = 4 * (time_block * batch_block * 4 * Hp + 2 * batch_block * Hp)
    est = 2 * (blk + small) + weights + scratch
    vmem_limit = int(min(vmem_cap, max(2 * est, 32 * 2 ** 20)))

    out = pl.pallas_call(
        kernel,
        out_shape=jax.ShapeDtypeStruct((Lp, Bp, Hp), f32),
        grid=(nb, nc),
        in_specs=[
            pl.BlockSpec((time_block, batch_block, Ip), tmap),   # x chunk
            pl.BlockSpec((time_block, batch_block, 1), tmap),    # mask chunk
            pl.BlockSpec(memory_space=pl.ANY),                   # W_ih (fused)
            pl.BlockSpec(memory_space=pl.ANY),                   # W_hh (fused)
            pl.BlockSpec((1, 4 * Hp), cmap),                     # fused bias
            pl.BlockSpec((1, Hp), cmap),                         # h0
            pl.BlockSpec((1, Hp), cmap),                         # c0
        ],
        out_specs=pl.BlockSpec((time_block, batch_block, Hp), tmap),
        scratch_shapes=[
            pltpu.VMEM((time_block, batch_block, 4 * Hp), jnp.float32),  # gx
            pltpu.VMEM((batch_block, Hp), jnp.float32),          # h state
            pltpu.VMEM((batch_block, Hp), jnp.float32),          # c state
            pltpu.VMEM((Ip, 4 * Hp), pdt),                       # W_ih resident
            pltpu.VMEM((Hp, 4 * Hp), pdt),                       # W_hh resident
            pltpu.SemaphoreType.DMA((2,)),                       # weight DMAs
        ],
        compiler_params=pltpu.CompilerParams(
            dimension_semantics=("parallel", "arbitrary"),
            vmem_limit_bytes=vmem_limit),
    )(x_p, m_p, wih_f, whh_f, b_f, h0p, c0p)

    return jnp.transpose(out, (1, 0, 2))[:B, :L, :H]


# ----------------------------------------------------------------------------
# Deterministic parameter init (mirrors LstmRnn.reset_parameters).
# ----------------------------------------------------------------------------
def init_params(key, input_dim, hidden_dim):
    k_ih, k_hh = jax.random.split(key)
    bound = np.sqrt(6.0 / (input_dim + 4 * hidden_dim))       # xavier_uniform_
    w_ih = jax.random.uniform(k_ih, (4 * hidden_dim, input_dim),
                              jnp.float32, -bound, bound)
    w_hh = jax.nn.initializers.orthogonal()(k_hh, (4 * hidden_dim, hidden_dim),
                                            jnp.float32)
    b_ih = jnp.zeros((4 * hidden_dim,), jnp.float32)
    b_hh = jnp.zeros((4 * hidden_dim,), jnp.float32)
    h0 = jnp.zeros((1, hidden_dim), jnp.float32)
    c0 = jnp.zeros((1, hidden_dim), jnp.float32)
    return w_ih, w_hh, b_ih, b_hh, h0, c0


# ----------------------------------------------------------------------------
# Pure-JAX reference (same math as the PyTorch forward), for verification.
# ----------------------------------------------------------------------------
def reference_forward(x, mask, w_ih, w_hh, b_ih, b_hh, h0, c0, backward=False):
    B, L, _ = x.shape
    H = h0.shape[1]
    prev_h = jnp.broadcast_to(h0, (B, H))
    prev_c = jnp.broadcast_to(c0, (B, H))
    hs = []
    order = range(L - 1, -1, -1) if backward else range(L)
    for idx in order:
        m = mask[:, idx, None]
        gates = x[:, idx] @ w_ih.T + prev_h @ w_hh.T + b_ih + b_hh
        i = jax.nn.sigmoid(gates[:, :H])
        f = jax.nn.sigmoid(gates[:, H:2 * H])
        g = jnp.tanh(gates[:, 2 * H:3 * H])
        o = jax.nn.sigmoid(gates[:, 3 * H:])
        c = f * prev_c + i * g
        h = o * jnp.tanh(c)
        prev_h = h * m + prev_h * (1.0 - m)
        prev_c = c * m + prev_c * (1.0 - m)
        hs.append(prev_h)
    hs = hs[::-1] if backward else hs
    return jnp.stack(hs, axis=1)


if __name__ == "__main__":
    # Small shapes that exercise every padding path:
    #   B=14 -> batch padded to 16 (2 batch chunks of 8 -> nb=2 for v7x),
    #   L=12 -> 2 time chunks of 8 (fp32 runs) / 1 chunk of 16 (bf16 run),
    #   I=20 -> 128 lanes, H=32 -> 128 lanes.
    B, L, I, H = 14, 12, 20, 32

    key = jax.random.PRNGKey(0)
    k_p, k_x, k_m, k_b1, k_b2 = jax.random.split(key, 5)
    w_ih, w_hh, b_ih, b_hh, h0, c0 = init_params(k_p, I, H)
    # The module inits biases to 0; use small random biases here so the fused
    # bias path is actually exercised by the check.
    b_ih = 0.1 * jax.random.normal(k_b1, (4 * H,), jnp.float32)
    b_hh = 0.1 * jax.random.normal(k_b2, (4 * H,), jnp.float32)

    x = jax.random.normal(k_x, (B, L, I), jnp.float32)
    mask = jax.random.bernoulli(k_m, 0.8, (B, L)).astype(jnp.float32)

    ok = True

    # fp32 path: exact agreement with the reference, forward + backward.
    for backward in (False, True):
        out = lstm_rnn_forward(x, mask, w_ih, w_hh, b_ih, b_hh, h0, c0,
                               backward=backward, time_block=8)
        out = jax.block_until_ready(out)
        ref = reference_forward(x, mask, w_ih, w_hh, b_ih, b_hh, h0, c0,
                                backward=backward)
        ok &= bool(np.allclose(np.asarray(out), np.asarray(ref),
                               rtol=1e-4, atol=1e-4))

    # bf16 fast path (bf16 MXU operands, fp32 accumulation/state): looser check.
    out_bf = lstm_rnn_forward(x, mask, w_ih, w_hh, b_ih, b_hh, h0, c0,
                              backward=False, param_dtype=jnp.bfloat16)
    out_bf = jax.block_until_ready(out_bf)
    ref_f = reference_forward(x, mask, w_ih, w_hh, b_ih, b_hh, h0, c0,
                              backward=False)
    ok &= bool(np.allclose(np.asarray(out_bf), np.asarray(ref_f),
                           rtol=1e-1, atol=1e-1))

    if ok:
        print("KERNEL_OK")
</pallas_src>

<mosaic_0001>
module attributes {stable_mosaic.version = 11 : i64} {
  func.func @_lstm_chunk_kernel(%arg0: i32, %arg1: i32, %arg2: memref<8x8x128xf32, #tpu.memory_space<vmem>>, %arg3: memref<8x8x1xf32, #tpu.memory_space<vmem>>, %arg4: memref<128x512xf32, #tpu.memory_space<any>>, %arg5: memref<128x512xf32, #tpu.memory_space<any>>, %arg6: memref<1x512xf32, #tpu.memory_space<vmem>>, %arg7: memref<1x128xf32, #tpu.memory_space<vmem>>, %arg8: memref<1x128xf32, #tpu.memory_space<vmem>>, %arg9: memref<8x8x128xf32, #tpu.memory_space<vmem>>, %arg10: memref<8x8x512xf32, #tpu.memory_space<vmem>>, %arg11: memref<8x128xf32, #tpu.memory_space<vmem>>, %arg12: memref<8x128xf32, #tpu.memory_space<vmem>>, %arg13: memref<128x512xf32, #tpu.memory_space<vmem>>, %arg14: memref<128x512xf32, #tpu.memory_space<vmem>>, %arg15: memref<2x!tpu.dma_semaphore, #tpu.memory_space<semaphore_mem>>) attributes {dimension_semantics = [#tpu.dimension_semantics<parallel>, #tpu.dimension_semantics<arbitrary>], iteration_bounds = array<i64: 2, 2>, scalar_prefetch = 0 : i64, scratch_operands = 6 : i64, tpu.core_type = #tpu.core_type<tc>, window_params = [{transform_indices = @transform_0, window_bounds = array<i64: 8, 8, 128>}, {transform_indices = @transform_1, window_bounds = array<i64: 8, 8, 1>}, {}, {}, {pipeline_mode = #tpu.pipeline_mode<synchronous>, transform_indices = @transform_4, window_bounds = array<i64: 1, 512>}, {pipeline_mode = #tpu.pipeline_mode<synchronous>, transform_indices = @transform_5, window_bounds = array<i64: 1, 128>}, {pipeline_mode = #tpu.pipeline_mode<synchronous>, transform_indices = @transform_6, window_bounds = array<i64: 1, 128>}, {transform_indices = @transform_7, window_bounds = array<i64: 8, 8, 128>}]} {
    %c0_i32 = arith.constant 0 : i32
    %0 = arith.cmpi eq, %arg1, %c0_i32 : i32
    %1 = arith.extui %0 : i1 to i32
    %c0_i32_0 = arith.constant 0 : i32
    %2 = arith.cmpi ne, %1, %c0_i32_0 : i32
    scf.if %2 {
      %c0_i32_205 = arith.constant 0 : i32
      %453 = tpu.memref_slice %arg15[%c0_i32_205] : memref<2x!tpu.dma_semaphore, #tpu.memory_space<semaphore_mem>> -> memref<1x!tpu.dma_semaphore, #tpu.memory_space<semaphore_mem>>
      %454 = tpu.memref_squeeze %453 : memref<1x!tpu.dma_semaphore, #tpu.memory_space<semaphore_mem>> -> memref<!tpu.dma_semaphore, #tpu.memory_space<semaphore_mem>>
      tpu.enqueue_dma source(%arg4 : memref<128x512xf32, #tpu.memory_space<any>>) target(%arg13 : memref<128x512xf32, #tpu.memory_space<vmem>>) target_semaphore(%454 : memref<!tpu.dma_semaphore, #tpu.memory_space<semaphore_mem>>)
      %c1_i32_206 = arith.constant 1 : i32
      %455 = tpu.memref_slice %arg15[%c1_i32_206] : memref<2x!tpu.dma_semaphore, #tpu.memory_space<semaphore_mem>> -> memref<1x!tpu.dma_semaphore, #tpu.memory_space<semaphore_mem>>
      %456 = tpu.memref_squeeze %455 : memref<1x!tpu.dma_semaphore, #tpu.memory_space<semaphore_mem>> -> memref<!tpu.dma_semaphore, #tpu.memory_space<semaphore_mem>>
      tpu.enqueue_dma source(%arg5 : memref<128x512xf32, #tpu.memory_space<any>>) target(%arg14 : memref<128x512xf32, #tpu.memory_space<vmem>>) target_semaphore(%456 : memref<!tpu.dma_semaphore, #tpu.memory_space<semaphore_mem>>)
      %c0_207 = arith.constant 0 : index
      %c0_208 = arith.constant 0 : index
      %457 = vector.load %arg7[%c0_207, %c0_208] : memref<1x128xf32, #tpu.memory_space<vmem>>, vector<1x128xf32>
      %458 = vector.shape_cast %457 : vector<1x128xf32> to vector<1x128xf32>
      %459 = vector.broadcast %458 : vector<1x128xf32> to vector<8x128xf32>
      %c0_209 = arith.constant 0 : index
      %c0_210 = arith.constant 0 : index
      %460 = vector.load %arg11[%c0_209, %c0_210] : memref<8x128xf32, #tpu.memory_space<vmem>>, vector<8x128xf32>
      tpu.vector_store %arg11[%c0_209, %c0_210], %459 {strides = array<i32>} : memref<8x128xf32, #tpu.memory_space<vmem>>, vector<8x128xf32>,
      %c0_211 = arith.constant 0 : index
      %c0_212 = arith.constant 0 : index
      %461 = vector.load %arg8[%c0_211, %c0_212] : memref<1x128xf32, #tpu.memory_space<vmem>>, vector<1x128xf32>
      %462 = vector.shape_cast %461 : vector<1x128xf32> to vector<1x128xf32>
      %463 = vector.broadcast %462 : vector<1x128xf32> to vector<8x128xf32>
      %c0_213 = arith.constant 0 : index
      %c0_214 = arith.constant 0 : index
      %464 = vector.load %arg12[%c0_213, %c0_214] : memref<8x128xf32, #tpu.memory_space<vmem>>, vector<8x128xf32>
      tpu.vector_store %arg12[%c0_213, %c0_214], %463 {strides = array<i32>} : memref<8x128xf32, #tpu.memory_space<vmem>>, vector<8x128xf32>,
      %c0_i32_215 = arith.constant 0 : i32
      %465 = tpu.memref_slice %arg15[%c0_i32_215] : memref<2x!tpu.dma_semaphore, #tpu.memory_space<semaphore_mem>> -> memref<1x!tpu.dma_semaphore, #tpu.memory_space<semaphore_mem>>
      %466 = tpu.memref_squeeze %465 : memref<1x!tpu.dma_semaphore, #tpu.memory_space<semaphore_mem>> -> memref<!tpu.dma_semaphore, #tpu.memory_space<semaphore_mem>>
      tpu.wait_dma2 semaphore(%466 : memref<!tpu.dma_semaphore, #tpu.memory_space<semaphore_mem>>) src(%arg4 : memref<128x512xf32, #tpu.memory_space<any>>) dst(%arg13 : memref<128x512xf32, #tpu.memory_space<vmem>>)
      %c1_i32_216 = arith.constant 1 : i32
      %467 = tpu.memref_slice %arg15[%c1_i32_216] : memref<2x!tpu.dma_semaphore, #tpu.memory_space<semaphore_mem>> -> memref<1x!tpu.dma_semaphore, #tpu.memory_space<semaphore_mem>>
      %468 = tpu.memref_squeeze %467 : memref<1x!tpu.dma_semaphore, #tpu.memory_space<semaphore_mem>> -> memref<!tpu.dma_semaphore, #tpu.memory_space<semaphore_mem>>
      tpu.wait_dma2 semaphore(%468 : memref<!tpu.dma_semaphore, #tpu.memory_space<semaphore_mem>>) src(%arg5 : memref<128x512xf32, #tpu.memory_space<any>>) dst(%arg14 : memref<128x512xf32, #tpu.memory_space<vmem>>)
    } else {
    }
    %c0 = arith.constant 0 : index
    %c0_1 = arith.constant 0 : index
    %c0_2 = arith.constant 0 : index
    %3 = vector.load %arg2[%c0, %c0_1, %c0_2] : memref<8x8x128xf32, #tpu.memory_space<vmem>>, vector<8x8x128xf32>
    %4 = vector.shape_cast %3 : vector<8x8x128xf32> to vector<64x128xf32>
    %c0_3 = arith.constant 0 : index
    %c0_4 = arith.constant 0 : index
    %5 = vector.load %arg13[%c0_3, %c0_4] : memref<128x512xf32, #tpu.memory_space<vmem>>, vector<128x512xf32>
    %cst = arith.constant dense<0.000000e+00> : vector<64x512xf32>
    %6 = tpu.matmul %4, %5, %cst {dimension_numbers = #tpu.dot_dimension_numbers<[1], [0], [0], [1], [0, 0, 1, 1], [], []>} : vector<64x128xf32>, vector<128x512xf32>, vector<64x512xf32> -> vector<64x512xf32>
    %c0_5 = arith.constant 0 : index
    %c0_6 = arith.constant 0 : index
    %7 = vector.load %arg6[%c0_5, %c0_6] : memref<1x512xf32, #tpu.memory_space<vmem>>, vector<1x512xf32>
    %8 = vector.broadcast %7 : vector<1x512xf32> to vector<64x512xf32>
    %9 = arith.addf %6, %8 : vector<64x512xf32>
    %10 = vector.shape_cast %9 : vector<64x512xf32> to vector<8x8x512xf32>
    %c0_7 = arith.constant 0 : index
    %c0_8 = arith.constant 0 : index
    %c0_9 = arith.constant 0 : index
    %11 = vector.load %arg10[%c0_7, %c0_8, %c0_9] : memref<8x8x512xf32, #tpu.memory_space<vmem>>, vector<8x8x512xf32>
    tpu.vector_store %arg10[%c0_7, %c0_8, %c0_9], %10 {strides = array<i32>} : memref<8x8x512xf32, #tpu.memory_space<vmem>>, vector<8x8x512xf32>,
    %c0_10 = arith.constant 0 : index
    %c0_11 = arith.constant 0 : index
    %12 = vector.load %arg14[%c0_10, %c0_11] : memref<128x512xf32, #tpu.memory_space<vmem>>, vector<128x512xf32>
    %c0_i32_12 = arith.constant 0 : i32
    %c0_13 = arith.constant 0 : index
    %c0_14 = arith.constant 0 : index
    %13 = vector.load %arg11[%c0_13, %c0_14] : memref<8x128xf32, #tpu.memory_space<vmem>>, vector<8x128xf32>
    %c0_15 = arith.constant 0 : index
    %c0_16 = arith.constant 0 : index
    %14 = vector.load %arg12[%c0_15, %c0_16] : memref<8x128xf32, #tpu.memory_space<vmem>>, vector<8x128xf32>
    %15 = arith.index_cast %c0_i32_12 : i32 to index
    %c0_17 = arith.constant 0 : index
    %c0_18 = arith.constant 0 : index
    %16 = vector.load %arg10[%15, %c0_17, %c0_18] : memref<8x8x512xf32, #tpu.memory_space<vmem>>, vector<1x8x512xf32>
    %17 = vector.shape_cast %16 : vector<1x8x512xf32> to vector<8x512xf32>
    %cst_19 = arith.constant dense<0.000000e+00> : vector<8x512xf32>
    %18 = tpu.matmul %13, %12, %cst_19 {dimension_numbers = #tpu.dot_dimension_numbers<[1], [0], [0], [1], [0, 0, 1, 1], [], []>} : vector<8x128xf32>, vector<128x512xf32>, vector<8x512xf32> -> vector<8x512xf32>
    %19 = arith.addf %17, %18 : vector<8x512xf32>
    %20 = vector.extract_strided_slice %19 {offsets = [0, 0], sizes = [8, 128], strides = [1, 1]} : vector<8x512xf32> to vector<8x128xf32>
    %cst_20 = arith.constant 5.000000e-01 : f32
    %21 = vector.broadcast %cst_20 : f32 to vector<8x128xf32>
    %22 = arith.mulf %21, %20 : vector<8x128xf32>
    %23 = math.tanh %22 : vector<8x128xf32>
    %cst_21 = arith.constant 1.000000e+00 : f32
    %24 = vector.broadcast %cst_21 : f32 to vector<8x128xf32>
    %25 = arith.addf %23, %24 : vector<8x128xf32>
    %cst_22 = arith.constant 5.000000e-01 : f32
    %26 = vector.broadcast %cst_22 : f32 to vector<8x128xf32>
    %27 = arith.mulf %26, %25 : vector<8x128xf32>
    %28 = vector.extract_strided_slice %19 {offsets = [0, 128], sizes = [8, 128], strides = [1, 1]} : vector<8x512xf32> to vector<8x128xf32>
    %cst_23 = arith.constant 5.000000e-01 : f32
    %29 = vector.broadcast %cst_23 : f32 to vector<8x128xf32>
    %30 = arith.mulf %29, %28 : vector<8x128xf32>
    %31 = math.tanh %30 : vector<8x128xf32>
    %cst_24 = arith.constant 1.000000e+00 : f32
    %32 = vector.broadcast %cst_24 : f32 to vector<8x128xf32>
    %33 = arith.addf %31, %32 : vector<8x128xf32>
    %cst_25 = arith.constant 5.000000e-01 : f32
    %34 = vector.broadcast %cst_25 : f32 to vector<8x128xf32>
    %35 = arith.mulf %34, %33 : vector<8x128xf32>
    %36 = vector.extract_strided_slice %19 {offsets = [0, 256], sizes = [8, 128], strides = [1, 1]} : vector<8x512xf32> to vector<8x128xf32>
    %37 = math.tanh %36 : vector<8x128xf32>
    %38 = vector.extract_strided_slice %19 {offsets = [0, 384], sizes = [8, 128], strides = [1, 1]} : vector<8x512xf32> to vector<8x128xf32>
    %cst_26 = arith.constant 5.000000e-01 : f32
    %39 = vector.broadcast %cst_26 : f32 to vector<8x128xf32>
    %40 = arith.mulf %39, %38 : vector<8x128xf32>
    %41 = math.tanh %40 : vector<8x128xf32>
    %cst_27 = arith.constant 1.000000e+00 : f32
    %42 = vector.broadcast %cst_27 : f32 to vector<8x128xf32>
    %43 = arith.addf %41, %42 : vector<8x128xf32>
    %cst_28 = arith.constant 5.000000e-01 : f32
    %44 = vector.broadcast %cst_28 : f32 to vector<8x128xf32>
    %45 = arith.mulf %44, %43 : vector<8x128xf32>
    %46 = arith.mulf %35, %14 : vector<8x128xf32>
    %47 = arith.mulf %27, %37 : vector<8x128xf32>
    %48 = arith.addf %46, %47 : vector<8x128xf32>
    %49 = math.tanh %48 : vector<8x128xf32>
    %50 = arith.mulf %45, %49 : vector<8x128xf32>
    %51 = arith.index_cast %c0_i32_12 : i32 to index
    %c0_29 = arith.constant 0 : index
    %c0_30 = arith.constant 0 : index
    %52 = vector.load %arg3[%51, %c0_29, %c0_30] : memref<8x8x1xf32, #tpu.memory_space<vmem>>, vector<1x8x1xf32>
    %53 = vector.shape_cast %52 : vector<1x8x1xf32> to vector<8x1xf32>
    %54 = arith.subf %50, %13 : vector<8x128xf32>
    %55 = vector.broadcast %53 : vector<8x1xf32> to vector<8x128xf32>
    %56 = arith.mulf %55, %54 : vector<8x128xf32>
    %57 = arith.addf %13, %56 : vector<8x128xf32>
    %58 = arith.subf %48, %14 : vector<8x128xf32>
    %59 = vector.broadcast %53 : vector<8x1xf32> to vector<8x128xf32>
    %60 = arith.mulf %59, %58 : vector<8x128xf32>
    %61 = arith.addf %14, %60 : vector<8x128xf32>
    %c0_31 = arith.constant 0 : index
    %c0_32 = arith.constant 0 : index
    %62 = vector.load %arg11[%c0_31, %c0_32] : memref<8x128xf32, #tpu.memory_space<vmem>>, vector<8x128xf32>
    tpu.vector_store %arg11[%c0_31, %c0_32], %57 {strides = array<i32>} : memref<8x128xf32, #tpu.memory_space<vmem>>, vector<8x128xf32>,
    %c0_33 = arith.constant 0 : index
    %c0_34 = arith.constant 0 : index
    %63 = vector.load %arg12[%c0_33, %c0_34] : memref<8x128xf32, #tpu.memory_space<vmem>>, vector<8x128xf32>
    tpu.vector_store %arg12[%c0_33, %c0_34], %61 {strides = array<i32>} : memref<8x128xf32, #tpu.memory_space<vmem>>, vector<8x128xf32>,
    %64 = arith.index_cast %c0_i32_12 : i32 to index
    %c0_35 = arith.constant 0 : index
    %c0_36 = arith.constant 0 : index
    %65 = vector.load %arg9[%64, %c0_35, %c0_36] : memref<8x8x128xf32, #tpu.memory_space<vmem>>, vector<1x8x128xf32>
    %66 = vector.shape_cast %65 : vector<1x8x128xf32> to vector<8x128xf32>
    %67 = vector.shape_cast %57 : vector<8x128xf32> to vector<1x8x128xf32>
    tpu.vector_store %arg9[%64, %c0_35, %c0_36], %67 {strides = array<i32>} : memref<8x8x128xf32, #tpu.memory_space<vmem>>, vector<1x8x128xf32>,
    %c1_i32 = arith.constant 1 : i32
    %c0_37 = arith.constant 0 : index
    %c0_38 = arith.constant 0 : index
    %68 = vector.load %arg11[%c0_37, %c0_38] : memref<8x128xf32, #tpu.memory_space<vmem>>, vector<8x128xf32>
    %c0_39 = arith.constant 0 : index
    %c0_40 = arith.constant 0 : index
    %69 = vector.load %arg12[%c0_39, %c0_40] : memref<8x128xf32, #tpu.memory_space<vmem>>, vector<8x128xf32>
    %70 = arith.index_cast %c1_i32 : i32 to index
    %c0_41 = arith.constant 0 : index
    %c0_42 = arith.constant 0 : index
    %71 = vector.load %arg10[%70, %c0_41, %c0_42] : memref<8x8x512xf32, #tpu.memory_space<vmem>>, vector<1x8x512xf32>
    %72 = vector.shape_cast %71 : vector<1x8x512xf32> to vector<8x512xf32>
    %cst_43 = arith.constant dense<0.000000e+00> : vector<8x512xf32>
    %73 = tpu.matmul %68, %12, %cst_43 {dimension_numbers = #tpu.dot_dimension_numbers<[1], [0], [0], [1], [0, 0, 1, 1], [], []>} : vector<8x128xf32>, vector<128x512xf32>, vector<8x512xf32> -> vector<8x512xf32>
    %74 = arith.addf %72, %73 : vector<8x512xf32>
    %75 = vector.extract_strided_slice %74 {offsets = [0, 0], sizes = [8, 128], strides = [1, 1]} : vector<8x512xf32> to vector<8x128xf32>
    %cst_44 = arith.constant 5.000000e-01 : f32
    %76 = vector.broadcast %cst_44 : f32 to vector<8x128xf32>
    %77 = arith.mulf %76, %75 : vector<8x128xf32>
    %78 = math.tanh %77 : vector<8x128xf32>
    %cst_45 = arith.constant 1.000000e+00 : f32
    %79 = vector.broadcast %cst_45 : f32 to vector<8x128xf32>
    %80 = arith.addf %78, %79 : vector<8x128xf32>
    %cst_46 = arith.constant 5.000000e-01 : f32
    %81 = vector.broadcast %cst_46 : f32 to vector<8x128xf32>
    %82 = arith.mulf %81, %80 : vector<8x128xf32>
    %83 = vector.extract_strided_slice %74 {offsets = [0, 128], sizes = [8, 128], strides = [1, 1]} : vector<8x512xf32> to vector<8x128xf32>
    %cst_47 = arith.constant 5.000000e-01 : f32
    %84 = vector.broadcast %cst_47 : f32 to vector<8x128xf32>
    %85 = arith.mulf %84, %83 : vector<8x128xf32>
    %86 = math.tanh %85 : vector<8x128xf32>
    %cst_48 = arith.constant 1.000000e+00 : f32
    %87 = vector.broadcast %cst_48 : f32 to vector<8x128xf32>
    %88 = arith.addf %86, %87 : vector<8x128xf32>
    %cst_49 = arith.constant 5.000000e-01 : f32
    %89 = vector.broadcast %cst_49 : f32 to vector<8x128xf32>
    %90 = arith.mulf %89, %88 : vector<8x128xf32>
    %91 = vector.extract_strided_slice %74 {offsets = [0, 256], sizes = [8, 128], strides = [1, 1]} : vector<8x512xf32> to vector<8x128xf32>
    %92 = math.tanh %91 : vector<8x128xf32>
    %93 = vector.extract_strided_slice %74 {offsets = [0, 384], sizes = [8, 128], strides = [1, 1]} : vector<8x512xf32> to vector<8x128xf32>
    %cst_50 = arith.constant 5.000000e-01 : f32
    %94 = vector.broadcast %cst_50 : f32 to vector<8x128xf32>
    %95 = arith.mulf %94, %93 : vector<8x128xf32>
    %96 = math.tanh %95 : vector<8x128xf32>
    %cst_51 = arith.constant 1.000000e+00 : f32
    %97 = vector.broadcast %cst_51 : f32 to vector<8x128xf32>
    %98 = arith.addf %96, %97 : vector<8x128xf32>
    %cst_52 = arith.constant 5.000000e-01 : f32
    %99 = vector.broadcast %cst_52 : f32 to vector<8x128xf32>
    %100 = arith.mulf %99, %98 : vector<8x128xf32>
    %101 = arith.mulf %90, %69 : vector<8x128xf32>
    %102 = arith.mulf %82, %92 : vector<8x128xf32>
    %103 = arith.addf %101, %102 : vector<8x128xf32>
    %104 = math.tanh %103 : vector<8x128xf32>
    %105 = arith.mulf %100, %104 : vector<8x128xf32>
    %106 = arith.index_cast %c1_i32 : i32 to index
    %c0_53 = arith.constant 0 : index
    %c0_54 = arith.constant 0 : index
    %107 = vector.load %arg3[%106, %c0_53, %c0_54] : memref<8x8x1xf32, #tpu.memory_space<vmem>>, vector<1x8x1xf32>
    %108 = vector.shape_cast %107 : vector<1x8x1xf32> to vector<8x1xf32>
    %109 = arith.subf %105, %68 : vector<8x128xf32>
    %110 = vector.broadcast %108 : vector<8x1xf32> to vector<8x128xf32>
    %111 = arith.mulf %110, %109 : vector<8x128xf32>
    %112 = arith.addf %68, %111 : vector<8x128xf32>
    %113 = arith.subf %103, %69 : vector<8x128xf32>
    %114 = vector.broadcast %108 : vector<8x1xf32> to vector<8x128xf32>
    %115 = arith.mulf %114, %113 : vector<8x128xf32>
    %116 = arith.addf %69, %115 : vector<8x128xf32>
    %c0_55 = arith.constant 0 : index
    %c0_56 = arith.constant 0 : index
    %117 = vector.load %arg11[%c0_55, %c0_56] : memref<8x128xf32, #tpu.memory_space<vmem>>, vector<8x128xf32>
    tpu.vector_store %arg11[%c0_55, %c0_56], %112 {strides = array<i32>} : memref<8x128xf32, #tpu.memory_space<vmem>>, vector<8x128xf32>,
    %c0_57 = arith.constant 0 : index
    %c0_58 = arith.constant 0 : index
    %118 = vector.load %arg12[%c0_57, %c0_58] : memref<8x128xf32, #tpu.memory_space<vmem>>, vector<8x128xf32>
    tpu.vector_store %arg12[%c0_57, %c0_58], %116 {strides = array<i32>} : memref<8x128xf32, #tpu.memory_space<vmem>>, vector<8x128xf32>,
    %119 = arith.index_cast %c1_i32 : i32 to index
    %c0_59 = arith.constant 0 : index
    %c0_60 = arith.constant 0 : index
    %120 = vector.load %arg9[%119, %c0_59, %c0_60] : memref<8x8x128xf32, #tpu.memory_space<vmem>>, vector<1x8x128xf32>
    %121 = vector.shape_cast %120 : vector<1x8x128xf32> to vector<8x128xf32>
    %122 = vector.shape_cast %112 : vector<8x128xf32> to vector<1x8x128xf32>
    tpu.vector_store %arg9[%119, %c0_59, %c0_60], %122 {strides = array<i32>} : memref<8x8x128xf32, #tpu.memory_space<vmem>>, vector<1x8x128xf32>,
    %c2_i32 = arith.constant 2 : i32
    %c0_61 = arith.constant 0 : index
    %c0_62 = arith.constant 0 : index
    %123 = vector.load %arg11[%c0_61, %c0_62] : memref<8x128xf32, #tpu.memory_space<vmem>>, vector<8x128xf32>
    %c0_63 = arith.constant 0 : index
    %c0_64 = arith.constant 0 : index
    %124 = vector.load %arg12[%c0_63, %c0_64] : memref<8x128xf32, #tpu.memory_space<vmem>>, vector<8x128xf32>
    %125 = arith.index_cast %c2_i32 : i32 to index
    %c0_65 = arith.constant 0 : index
    %c0_66 = arith.constant 0 : index
    %126 = vector.load %arg10[%125, %c0_65, %c0_66] : memref<8x8x512xf32, #tpu.memory_space<vmem>>, vector<1x8x512xf32>
    %127 = vector.shape_cast %126 : vector<1x8x512xf32> to vector<8x512xf32>
    %cst_67 = arith.constant dense<0.000000e+00> : vector<8x512xf32>
    %128 = tpu.matmul %123, %12, %cst_67 {dimension_numbers = #tpu.dot_dimension_numbers<[1], [0], [0], [1], [0, 0, 1, 1], [], []>} : vector<8x128xf32>, vector<128x512xf32>, vector<8x512xf32> -> vector<8x512xf32>
    %129 = arith.addf %127, %128 : vector<8x512xf32>
    %130 = vector.extract_strided_slice %129 {offsets = [0, 0], sizes = [8, 128], strides = [1, 1]} : vector<8x512xf32> to vector<8x128xf32>
    %cst_68 = arith.constant 5.000000e-01 : f32
    %131 = vector.broadcast %cst_68 : f32 to vector<8x128xf32>
    %132 = arith.mulf %131, %130 : vector<8x128xf32>
    %133 = math.tanh %132 : vector<8x128xf32>
    %cst_69 = arith.constant 1.000000e+00 : f32
    %134 = vector.broadcast %cst_69 : f32 to vector<8x128xf32>
    %135 = arith.addf %133, %134 : vector<8x128xf32>
    %cst_70 = arith.constant 5.000000e-01 : f32
    %136 = vector.broadcast %cst_70 : f32 to vector<8x128xf32>
    %137 = arith.mulf %136, %135 : vector<8x128xf32>
    %138 = vector.extract_strided_slice %129 {offsets = [0, 128], sizes = [8, 128], strides = [1, 1]} : vector<8x512xf32> to vector<8x128xf32>
    %cst_71 = arith.constant 5.000000e-01 : f32
    %139 = vector.broadcast %cst_71 : f32 to vector<8x128xf32>
    %140 = arith.mulf %139, %138 : vector<8x128xf32>
    %141 = math.tanh %140 : vector<8x128xf32>
    %cst_72 = arith.constant 1.000000e+00 : f32
    %142 = vector.broadcast %cst_72 : f32 to vector<8x128xf32>
    %143 = arith.addf %141, %142 : vector<8x128xf32>
    %cst_73 = arith.constant 5.000000e-01 : f32
    %144 = vector.broadcast %cst_73 : f32 to vector<8x128xf32>
    %145 = arith.mulf %144, %143 : vector<8x128xf32>
    %146 = vector.extract_strided_slice %129 {offsets = [0, 256], sizes = [8, 128], strides = [1, 1]} : vector<8x512xf32> to vector<8x128xf32>
    %147 = math.tanh %146 : vector<8x128xf32>
    %148 = vector.extract_strided_slice %129 {offsets = [0, 384], sizes = [8, 128], strides = [1, 1]} : vector<8x512xf32> to vector<8x128xf32>
    %cst_74 = arith.constant 5.000000e-01 : f32
    %149 = vector.broadcast %cst_74 : f32 to vector<8x128xf32>
    %150 = arith.mulf %149, %148 : vector<8x128xf32>
    %151 = math.tanh %150 : vector<8x128xf32>
    %cst_75 = arith.constant 1.000000e+00 : f32
    %152 = vector.broadcast %cst_75 : f32 to vector<8x128xf32>
    %153 = arith.addf %151, %152 : vector<8x128xf32>
    %cst_76 = arith.constant 5.000000e-01 : f32
    %154 = vector.broadcast %cst_76 : f32 to vector<8x128xf32>
    %155 = arith.mulf %154, %153 : vector<8x128xf32>
    %156 = arith.mulf %145, %124 : vector<8x128xf32>
    %157 = arith.mulf %137, %147 : vector<8x128xf32>
    %158 = arith.addf %156, %157 : vector<8x128xf32>
    %159 = math.tanh %158 : vector<8x128xf32>
    %160 = arith.mulf %155, %159 : vector<8x128xf32>
    %161 = arith.index_cast %c2_i32 : i32 to index
    %c0_77 = arith.constant 0 : index
    %c0_78 = arith.constant 0 : index
    %162 = vector.load %arg3[%161, %c0_77, %c0_78] : memref<8x8x1xf32, #tpu.memory_space<vmem>>, vector<1x8x1xf32>
    %163 = vector.shape_cast %162 : vector<1x8x1xf32> to vector<8x1xf32>
    %164 = arith.subf %160, %123 : vector<8x128xf32>
    %165 = vector.broadcast %163 : vector<8x1xf32> to vector<8x128xf32>
    %166 = arith.mulf %165, %164 : vector<8x128xf32>
    %167 = arith.addf %123, %166 : vector<8x128xf32>
    %168 = arith.subf %158, %124 : vector<8x128xf32>
    %169 = vector.broadcast %163 : vector<8x1xf32> to vector<8x128xf32>
    %170 = arith.mulf %169, %168 : vector<8x128xf32>
    %171 = arith.addf %124, %170 : vector<8x128xf32>
    %c0_79 = arith.constant 0 : index
    %c0_80 = arith.constant 0 : index
    %172 = vector.load %arg11[%c0_79, %c0_80] : memref<8x128xf32, #tpu.memory_space<vmem>>, vector<8x128xf32>
    tpu.vector_store %arg11[%c0_79, %c0_80], %167 {strides = array<i32>} : memref<8x128xf32, #tpu.memory_space<vmem>>, vector<8x128xf32>,
    %c0_81 = arith.constant 0 : index
    %c0_82 = arith.constant 0 : index
    %173 = vector.load %arg12[%c0_81, %c0_82] : memref<8x128xf32, #tpu.memory_space<vmem>>, vector<8x128xf32>
    tpu.vector_store %arg12[%c0_81, %c0_82], %171 {strides = array<i32>} : memref<8x128xf32, #tpu.memory_space<vmem>>, vector<8x128xf32>,
    %174 = arith.index_cast %c2_i32 : i32 to index
    %c0_83 = arith.constant 0 : index
    %c0_84 = arith.constant 0 : index
    %175 = vector.load %arg9[%174, %c0_83, %c0_84] : memref<8x8x128xf32, #tpu.memory_space<vmem>>, vector<1x8x128xf32>
    %176 = vector.shape_cast %175 : vector<1x8x128xf32> to vector<8x128xf32>
    %177 = vector.shape_cast %167 : vector<8x128xf32> to vector<1x8x128xf32>
    tpu.vector_store %arg9[%174, %c0_83, %c0_84], %177 {strides = array<i32>} : memref<8x8x128xf32, #tpu.memory_space<vmem>>, vector<1x8x128xf32>,
    %c3_i32 = arith.constant 3 : i32
    %c0_85 = arith.constant 0 : index
    %c0_86 = arith.constant 0 : index
    %178 = vector.load %arg11[%c0_85, %c0_86] : memref<8x128xf32, #tpu.memory_space<vmem>>, vector<8x128xf32>
    %c0_87 = arith.constant 0 : index
    %c0_88 = arith.constant 0 : index
    %179 = vector.load %arg12[%c0_87, %c0_88] : memref<8x128xf32, #tpu.memory_space<vmem>>, vector<8x128xf32>
    %180 = arith.index_cast %c3_i32 : i32 to index
    %c0_89 = arith.constant 0 : index
    %c0_90 = arith.constant 0 : index
    %181 = vector.load %arg10[%180, %c0_89, %c0_90] : memref<8x8x512xf32, #tpu.memory_space<vmem>>, vector<1x8x512xf32>
    %182 = vector.shape_cast %181 : vector<1x8x512xf32> to vector<8x512xf32>
    %cst_91 = arith.constant dense<0.000000e+00> : vector<8x512xf32>
    %183 = tpu.matmul %178, %12, %cst_91 {dimension_numbers = #tpu.dot_dimension_numbers<[1], [0], [0], [1], [0, 0, 1, 1], [], []>} : vector<8x128xf32>, vector<128x512xf32>, vector<8x512xf32> -> vector<8x512xf32>
    %184 = arith.addf %182, %183 : vector<8x512xf32>
    %185 = vector.extract_strided_slice %184 {offsets = [0, 0], sizes = [8, 128], strides = [1, 1]} : vector<8x512xf32> to vector<8x128xf32>
    %cst_92 = arith.constant 5.000000e-01 : f32
    %186 = vector.broadcast %cst_92 : f32 to vector<8x128xf32>
    %187 = arith.mulf %186, %185 : vector<8x128xf32>
    %188 = math.tanh %187 : vector<8x128xf32>
    %cst_93 = arith.constant 1.000000e+00 : f32
    %189 = vector.broadcast %cst_93 : f32 to vector<8x128xf32>
    %190 = arith.addf %188, %189 : vector<8x128xf32>
    %cst_94 = arith.constant 5.000000e-01 : f32
    %191 = vector.broadcast %cst_94 : f32 to vector<8x128xf32>
    %192 = arith.mulf %191, %190 : vector<8x128xf32>
    %193 = vector.extract_strided_slice %184 {offsets = [0, 128], sizes = [8, 128], strides = [1, 1]} : vector<8x512xf32> to vector<8x128xf32>
    %cst_95 = arith.constant 5.000000e-01 : f32
    %194 = vector.broadcast %cst_95 : f32 to vector<8x128xf32>
    %195 = arith.mulf %194, %193 : vector<8x128xf32>
    %196 = math.tanh %195 : vector<8x128xf32>
    %cst_96 = arith.constant 1.000000e+00 : f32
    %197 = vector.broadcast %cst_96 : f32 to vector<8x128xf32>
    %198 = arith.addf %196, %197 : vector<8x128xf32>
    %cst_97 = arith.constant 5.000000e-01 : f32
    %199 = vector.broadcast %cst_97 : f32 to vector<8x128xf32>
    %200 = arith.mulf %199, %198 : vector<8x128xf32>
    %201 = vector.extract_strided_slice %184 {offsets = [0, 256], sizes = [8, 128], strides = [1, 1]} : vector<8x512xf32> to vector<8x128xf32>
    %202 = math.tanh %201 : vector<8x128xf32>
    %203 = vector.extract_strided_slice %184 {offsets = [0, 384], sizes = [8, 128], strides = [1, 1]} : vector<8x512xf32> to vector<8x128xf32>
    %cst_98 = arith.constant 5.000000e-01 : f32
    %204 = vector.broadcast %cst_98 : f32 to vector<8x128xf32>
    %205 = arith.mulf %204, %203 : vector<8x128xf32>
    %206 = math.tanh %205 : vector<8x128xf32>
    %cst_99 = arith.constant 1.000000e+00 : f32
    %207 = vector.broadcast %cst_99 : f32 to vector<8x128xf32>
    %208 = arith.addf %206, %207 : vector<8x128xf32>
    %cst_100 = arith.constant 5.000000e-01 : f32
    %209 = vector.broadcast %cst_100 : f32 to vector<8x128xf32>
    %210 = arith.mulf %209, %208 : vector<8x128xf32>
    %211 = arith.mulf %200, %179 : vector<8x128xf32>
    %212 = arith.mulf %192, %202 : vector<8x128xf32>
    %213 = arith.addf %211, %212 : vector<8x128xf32>
    %214 = math.tanh %213 : vector<8x128xf32>
    %215 = arith.mulf %210, %214 : vector<8x128xf32>
    %216 = arith.index_cast %c3_i32 : i32 to index
    %c0_101 = arith.constant 0 : index
    %c0_102 = arith.constant 0 : index
    %217 = vector.load %arg3[%216, %c0_101, %c0_102] : memref<8x8x1xf32, #tpu.memory_space<vmem>>, vector<1x8x1xf32>
    %218 = vector.shape_cast %217 : vector<1x8x1xf32> to vector<8x1xf32>
    %219 = arith.subf %215, %178 : vector<8x128xf32>
    %220 = vector.broadcast %218 : vector<8x1xf32> to vector<8x128xf32>
    %221 = arith.mulf %220, %219 : vector<8x128xf32>
    %222 = arith.addf %178, %221 : vector<8x128xf32>
    %223 = arith.subf %213, %179 : vector<8x128xf32>
    %224 = vector.broadcast %218 : vector<8x1xf32> to vector<8x128xf32>
    %225 = arith.mulf %224, %223 : vector<8x128xf32>
    %226 = arith.addf %179, %225 : vector<8x128xf32>
    %c0_103 = arith.constant 0 : index
    %c0_104 = arith.constant 0 : index
    %227 = vector.load %arg11[%c0_103, %c0_104] : memref<8x128xf32, #tpu.memory_space<vmem>>, vector<8x128xf32>
    tpu.vector_store %arg11[%c0_103, %c0_104], %222 {strides = array<i32>} : memref<8x128xf32, #tpu.memory_space<vmem>>, vector<8x128xf32>,
    %c0_105 = arith.constant 0 : index
    %c0_106 = arith.constant 0 : index
    %228 = vector.load %arg12[%c0_105, %c0_106] : memref<8x128xf32, #tpu.memory_space<vmem>>, vector<8x128xf32>
    tpu.vector_store %arg12[%c0_105, %c0_106], %226 {strides = array<i32>} : memref<8x128xf32, #tpu.memory_space<vmem>>, vector<8x128xf32>,
    %229 = arith.index_cast %c3_i32 : i32 to index
    %c0_107 = arith.constant 0 : index
    %c0_108 = arith.constant 0 : index
    %230 = vector.load %arg9[%229, %c0_107, %c0_108] : memref<8x8x128xf32, #tpu.memory_space<vmem>>, vector<1x8x128xf32>
    %231 = vector.shape_cast %230 : vector<1x8x128xf32> to vector<8x128xf32>
    %232 = vector.shape_cast %222 : vector<8x128xf32> to vector<1x8x128xf32>
    tpu.vector_store %arg9[%229, %c0_107, %c0_108], %232 {strides = array<i32>} : memref<8x8x128xf32, #tpu.memory_space<vmem>>, vector<1x8x128xf32>,
    %c4_i32 = arith.constant 4 : i32
    %c0_109 = arith.constant 0 : index
    %c0_110 = arith.constant 0 : index
    %233 = vector.load %arg11[%c0_109, %c0_110] : memref<8x128xf32, #tpu.memory_space<vmem>>, vector<8x128xf32>
    %c0_111 = arith.constant 0 : index
    %c0_112 = arith.constant 0 : index
    %234 = vector.load %arg12[%c0_111, %c0_112] : memref<8x128xf32, #tpu.memory_space<vmem>>, vector<8x128xf32>
    %235 = arith.index_cast %c4_i32 : i32 to index
    %c0_113 = arith.constant 0 : index
    %c0_114 = arith.constant 0 : index
    %236 = vector.load %arg10[%235, %c0_113, %c0_114] : memref<8x8x512xf32, #tpu.memory_space<vmem>>, vector<1x8x512xf32>
    %237 = vector.shape_cast %236 : vector<1x8x512xf32> to vector<8x512xf32>
    %cst_115 = arith.constant dense<0.000000e+00> : vector<8x512xf32>
    %238 = tpu.matmul %233, %12, %cst_115 {dimension_numbers = #tpu.dot_dimension_numbers<[1], [0], [0], [1], [0, 0, 1, 1], [], []>} : vector<8x128xf32>, vector<128x512xf32>, vector<8x512xf32> -> vector<8x512xf32>
    %239 = arith.addf %237, %238 : vector<8x512xf32>
    %240 = vector.extract_strided_slice %239 {offsets = [0, 0], sizes = [8, 128], strides = [1, 1]} : vector<8x512xf32> to vector<8x128xf32>
    %cst_116 = arith.constant 5.000000e-01 : f32
    %241 = vector.broadcast %cst_116 : f32 to vector<8x128xf32>
    %242 = arith.mulf %241, %240 : vector<8x128xf32>
    %243 = math.tanh %242 : vector<8x128xf32>
    %cst_117 = arith.constant 1.000000e+00 : f32
    %244 = vector.broadcast %cst_117 : f32 to vector<8x128xf32>
    %245 = arith.addf %243, %244 : vector<8x128xf32>
    %cst_118 = arith.constant 5.000000e-01 : f32
    %246 = vector.broadcast %cst_118 : f32 to vector<8x128xf32>
    %247 = arith.mulf %246, %245 : vector<8x128xf32>
    %248 = vector.extract_strided_slice %239 {offsets = [0, 128], sizes = [8, 128], strides = [1, 1]} : vector<8x512xf32> to vector<8x128xf32>
    %cst_119 = arith.constant 5.000000e-01 : f32
    %249 = vector.broadcast %cst_119 : f32 to vector<8x128xf32>
    %250 = arith.mulf %249, %248 : vector<8x128xf32>
    %251 = math.tanh %250 : vector<8x128xf32>
    %cst_120 = arith.constant 1.000000e+00 : f32
    %252 = vector.broadcast %cst_120 : f32 to vector<8x128xf32>
    %253 = arith.addf %251, %252 : vector<8x128xf32>
    %cst_121 = arith.constant 5.000000e-01 : f32
    %254 = vector.broadcast %cst_121 : f32 to vector<8x128xf32>
    %255 = arith.mulf %254, %253 : vector<8x128xf32>
    %256 = vector.extract_strided_slice %239 {offsets = [0, 256], sizes = [8, 128], strides = [1, 1]} : vector<8x512xf32> to vector<8x128xf32>
    %257 = math.tanh %256 : vector<8x128xf32>
    %258 = vector.extract_strided_slice %239 {offsets = [0, 384], sizes = [8, 128], strides = [1, 1]} : vector<8x512xf32> to vector<8x128xf32>
    %cst_122 = arith.constant 5.000000e-01 : f32
    %259 = vector.broadcast %cst_122 : f32 to vector<8x128xf32>
    %260 = arith.mulf %259, %258 : vector<8x128xf32>
    %261 = math.tanh %260 : vector<8x128xf32>
    %cst_123 = arith.constant 1.000000e+00 : f32
    %262 = vector.broadcast %cst_123 : f32 to vector<8x128xf32>
    %263 = arith.addf %261, %262 : vector<8x128xf32>
    %cst_124 = arith.constant 5.000000e-01 : f32
    %264 = vector.broadcast %cst_124 : f32 to vector<8x128xf32>
    %265 = arith.mulf %264, %263 : vector<8x128xf32>
    %266 = arith.mulf %255, %234 : vector<8x128xf32>
    %267 = arith.mulf %247, %257 : vector<8x128xf32>
    %268 = arith.addf %266, %267 : vector<8x128xf32>
    %269 = math.tanh %268 : vector<8x128xf32>
    %270 = arith.mulf %265, %269 : vector<8x128xf32>
    %271 = arith.index_cast %c4_i32 : i32 to index
    %c0_125 = arith.constant 0 : index
    %c0_126 = arith.constant 0 : index
    %272 = vector.load %arg3[%271, %c0_125, %c0_126] : memref<8x8x1xf32, #tpu.memory_space<vmem>>, vector<1x8x1xf32>
    %273 = vector.shape_cast %272 : vector<1x8x1xf32> to vector<8x1xf32>
    %274 = arith.subf %270, %233 : vector<8x128xf32>
    %275 = vector.broadcast %273 : vector<8x1xf32> to vector<8x128xf32>
    %276 = arith.mulf %275, %274 : vector<8x128xf32>
    %277 = arith.addf %233, %276 : vector<8x128xf32>
    %278 = arith.subf %268, %234 : vector<8x128xf32>
    %279 = vector.broadcast %273 : vector<8x1xf32> to vector<8x128xf32>
    %280 = arith.mulf %279, %278 : vector<8x128xf32>
    %281 = arith.addf %234, %280 : vector<8x128xf32>
    %c0_127 = arith.constant 0 : index
    %c0_128 = arith.constant 0 : index
    %282 = vector.load %arg11[%c0_127, %c0_128] : memref<8x128xf32, #tpu.memory_space<vmem>>, vector<8x128xf32>
    tpu.vector_store %arg11[%c0_127, %c0_128], %277 {strides = array<i32>} : memref<8x128xf32, #tpu.memory_space<vmem>>, vector<8x128xf32>,
    %c0_129 = arith.constant 0 : index
    %c0_130 = arith.constant 0 : index
    %283 = vector.load %arg12[%c0_129, %c0_130] : memref<8x128xf32, #tpu.memory_space<vmem>>, vector<8x128xf32>
    tpu.vector_store %arg12[%c0_129, %c0_130], %281 {strides = array<i32>} : memref<8x128xf32, #tpu.memory_space<vmem>>, vector<8x128xf32>,
    %284 = arith.index_cast %c4_i32 : i32 to index
    %c0_131 = arith.constant 0 : index
    %c0_132 = arith.constant 0 : index
    %285 = vector.load %arg9[%284, %c0_131, %c0_132] : memref<8x8x128xf32, #tpu.memory_space<vmem>>, vector<1x8x128xf32>
    %286 = vector.shape_cast %285 : vector<1x8x128xf32> to vector<8x128xf32>
    %287 = vector.shape_cast %277 : vector<8x128xf32> to vector<1x8x128xf32>
    tpu.vector_store %arg9[%284, %c0_131, %c0_132], %287 {strides = array<i32>} : memref<8x8x128xf32, #tpu.memory_space<vmem>>, vector<1x8x128xf32>,
    %c5_i32 = arith.constant 5 : i32
    %c0_133 = arith.constant 0 : index
    %c0_134 = arith.constant 0 : index
    %288 = vector.load %arg11[%c0_133, %c0_134] : memref<8x128xf32, #tpu.memory_space<vmem>>, vector<8x128xf32>
    %c0_135 = arith.constant 0 : index
    %c0_136 = arith.constant 0 : index
    %289 = vector.load %arg12[%c0_135, %c0_136] : memref<8x128xf32, #tpu.memory_space<vmem>>, vector<8x128xf32>
    %290 = arith.index_cast %c5_i32 : i32 to index
    %c0_137 = arith.constant 0 : index
    %c0_138 = arith.constant 0 : index
    %291 = vector.load %arg10[%290, %c0_137, %c0_138] : memref<8x8x512xf32, #tpu.memory_space<vmem>>, vector<1x8x512xf32>
    %292 = vector.shape_cast %291 : vector<1x8x512xf32> to vector<8x512xf32>
    %cst_139 = arith.constant dense<0.000000e+00> : vector<8x512xf32>
    %293 = tpu.matmul %288, %12, %cst_139 {dimension_numbers = #tpu.dot_dimension_numbers<[1], [0], [0], [1], [0, 0, 1, 1], [], []>} : vector<8x128xf32>, vector<128x512xf32>, vector<8x512xf32> -> vector<8x512xf32>
    %294 = arith.addf %292, %293 : vector<8x512xf32>
    %295 = vector.extract_strided_slice %294 {offsets = [0, 0], sizes = [8, 128], strides = [1, 1]} : vector<8x512xf32> to vector<8x128xf32>
    %cst_140 = arith.constant 5.000000e-01 : f32
    %296 = vector.broadcast %cst_140 : f32 to vector<8x128xf32>
    %297 = arith.mulf %296, %295 : vector<8x128xf32>
    %298 = math.tanh %297 : vector<8x128xf32>
    %cst_141 = arith.constant 1.000000e+00 : f32
    %299 = vector.broadcast %cst_141 : f32 to vector<8x128xf32>
    %300 = arith.addf %298, %299 : vector<8x128xf32>
    %cst_142 = arith.constant 5.000000e-01 : f32
    %301 = vector.broadcast %cst_142 : f32 to vector<8x128xf32>
    %302 = arith.mulf %301, %300 : vector<8x128xf32>
    %303 = vector.extract_strided_slice %294 {offsets = [0, 128], sizes = [8, 128], strides = [1, 1]} : vector<8x512xf32> to vector<8x128xf32>
    %cst_143 = arith.constant 5.000000e-01 : f32
    %304 = vector.broadcast %cst_143 : f32 to vector<8x128xf32>
    %305 = arith.mulf %304, %303 : vector<8x128xf32>
    %306 = math.tanh %305 : vector<8x128xf32>
    %cst_144 = arith.constant 1.000000e+00 : f32
    %307 = vector.broadcast %cst_144 : f32 to vector<8x128xf32>
    %308 = arith.addf %306, %307 : vector<8x128xf32>
    %cst_145 = arith.constant 5.000000e-01 : f32
    %309 = vector.broadcast %cst_145 : f32 to vector<8x128xf32>
    %310 = arith.mulf %309, %308 : vector<8x128xf32>
    %311 = vector.extract_strided_slice %294 {offsets = [0, 256], sizes = [8, 128], strides = [1, 1]} : vector<8x512xf32> to vector<8x128xf32>
    %312 = math.tanh %311 : vector<8x128xf32>
    %313 = vector.extract_strided_slice %294 {offsets = [0, 384], sizes = [8, 128], strides = [1, 1]} : vector<8x512xf32> to vector<8x128xf32>
    %cst_146 = arith.constant 5.000000e-01 : f32
    %314 = vector.broadcast %cst_146 : f32 to vector<8x128xf32>
    %315 = arith.mulf %314, %313 : vector<8x128xf32>
    %316 = math.tanh %315 : vector<8x128xf32>
    %cst_147 = arith.constant 1.000000e+00 : f32
    %317 = vector.broadcast %cst_147 : f32 to vector<8x128xf32>
    %318 = arith.addf %316, %317 : vector<8x128xf32>
    %cst_148 = arith.constant 5.000000e-01 : f32
    %319 = vector.broadcast %cst_148 : f32 to vector<8x128xf32>
    %320 = arith.mulf %319, %318 : vector<8x128xf32>
    %321 = arith.mulf %310, %289 : vector<8x128xf32>
    %322 = arith.mulf %302, %312 : vector<8x128xf32>
    %323 = arith.addf %321, %322 : vector<8x128xf32>
    %324 = math.tanh %323 : vector<8x128xf32>
    %325 = arith.mulf %320, %324 : vector<8x128xf32>
    %326 = arith.index_cast %c5_i32 : i32 to index
    %c0_149 = arith.constant 0 : index
    %c0_150 = arith.constant 0 : index
    %327 = vector.load %arg3[%326, %c0_149, %c0_150] : memref<8x8x1xf32, #tpu.memory_space<vmem>>, vector<1x8x1xf32>
    %328 = vector.shape_cast %327 : vector<1x8x1xf32> to vector<8x1xf32>
    %329 = arith.subf %325, %288 : vector<8x128xf32>
    %330 = vector.broadcast %328 : vector<8x1xf32> to vector<8x128xf32>
    %331 = arith.mulf %330, %329 : vector<8x128xf32>
    %332 = arith.addf %288, %331 : vector<8x128xf32>
    %333 = arith.subf %323, %289 : vector<8x128xf32>
    %334 = vector.broadcast %328 : vector<8x1xf32> to vector<8x128xf32>
    %335 = arith.mulf %334, %333 : vector<8x128xf32>
    %336 = arith.addf %289, %335 : vector<8x128xf32>
    %c0_151 = arith.constant 0 : index
    %c0_152 = arith.constant 0 : index
    %337 = vector.load %arg11[%c0_151, %c0_152] : memref<8x128xf32, #tpu.memory_space<vmem>>, vector<8x128xf32>
    tpu.vector_store %arg11[%c0_151, %c0_152], %332 {strides = array<i32>} : memref<8x128xf32, #tpu.memory_space<vmem>>, vector<8x128xf32>,
    %c0_153 = arith.constant 0 : index
    %c0_154 = arith.constant 0 : index
    %338 = vector.load %arg12[%c0_153, %c0_154] : memref<8x128xf32, #tpu.memory_space<vmem>>, vector<8x128xf32>
    tpu.vector_store %arg12[%c0_153, %c0_154], %336 {strides = array<i32>} : memref<8x128xf32, #tpu.memory_space<vmem>>, vector<8x128xf32>,
    %339 = arith.index_cast %c5_i32 : i32 to index
    %c0_155 = arith.constant 0 : index
    %c0_156 = arith.constant 0 : index
    %340 = vector.load %arg9[%339, %c0_155, %c0_156] : memref<8x8x128xf32, #tpu.memory_space<vmem>>, vector<1x8x128xf32>
    %341 = vector.shape_cast %340 : vector<1x8x128xf32> to vector<8x128xf32>
    %342 = vector.shape_cast %332 : vector<8x128xf32> to vector<1x8x128xf32>
    tpu.vector_store %arg9[%339, %c0_155, %c0_156], %342 {strides = array<i32>} : memref<8x8x128xf32, #tpu.memory_space<vmem>>, vector<1x8x128xf32>,
    %c6_i32 = arith.constant 6 : i32
    %c0_157 = arith.constant 0 : index
    %c0_158 = arith.constant 0 : index
    %343 = vector.load %arg11[%c0_157, %c0_158] : memref<8x128xf32, #tpu.memory_space<vmem>>, vector<8x128xf32>
    %c0_159 = arith.constant 0 : index
    %c0_160 = arith.constant 0 : index
    %344 = vector.load %arg12[%c0_159, %c0_160] : memref<8x128xf32, #tpu.memory_space<vmem>>, vector<8x128xf32>
    %345 = arith.index_cast %c6_i32 : i32 to index
    %c0_161 = arith.constant 0 : index
    %c0_162 = arith.constant 0 : index
    %346 = vector.load %arg10[%345, %c0_161, %c0_162] : memref<8x8x512xf32, #tpu.memory_space<vmem>>, vector<1x8x512xf32>
    %347 = vector.shape_cast %346 : vector<1x8x512xf32> to vector<8x512xf32>
    %cst_163 = arith.constant dense<0.000000e+00> : vector<8x512xf32>
    %348 = tpu.matmul %343, %12, %cst_163 {dimension_numbers = #tpu.dot_dimension_numbers<[1], [0], [0], [1], [0, 0, 1, 1], [], []>} : vector<8x128xf32>, vector<128x512xf32>, vector<8x512xf32> -> vector<8x512xf32>
    %349 = arith.addf %347, %348 : vector<8x512xf32>
    %350 = vector.extract_strided_slice %349 {offsets = [0, 0], sizes = [8, 128], strides = [1, 1]} : vector<8x512xf32> to vector<8x128xf32>
    %cst_164 = arith.constant 5.000000e-01 : f32
    %351 = vector.broadcast %cst_164 : f32 to vector<8x128xf32>
    %352 = arith.mulf %351, %350 : vector<8x128xf32>
    %353 = math.tanh %352 : vector<8x128xf32>
    %cst_165 = arith.constant 1.000000e+00 : f32
    %354 = vector.broadcast %cst_165 : f32 to vector<8x128xf32>
    %355 = arith.addf %353, %354 : vector<8x128xf32>
    %cst_166 = arith.constant 5.000000e-01 : f32
    %356 = vector.broadcast %cst_166 : f32 to vector<8x128xf32>
    %357 = arith.mulf %356, %355 : vector<8x128xf32>
    %358 = vector.extract_strided_slice %349 {offsets = [0, 128], sizes = [8, 128], strides = [1, 1]} : vector<8x512xf32> to vector<8x128xf32>
    %cst_167 = arith.constant 5.000000e-01 : f32
    %359 = vector.broadcast %cst_167 : f32 to vector<8x128xf32>
    %360 = arith.mulf %359, %358 : vector<8x128xf32>
    %361 = math.tanh %360 : vector<8x128xf32>
    %cst_168 = arith.constant 1.000000e+00 : f32
    %362 = vector.broadcast %cst_168 : f32 to vector<8x128xf32>
    %363 = arith.addf %361, %362 : vector<8x128xf32>
    %cst_169 = arith.constant 5.000000e-01 : f32
    %364 = vector.broadcast %cst_169 : f32 to vector<8x128xf32>
    %365 = arith.mulf %364, %363 : vector<8x128xf32>
    %366 = vector.extract_strided_slice %349 {offsets = [0, 256], sizes = [8, 128], strides = [1, 1]} : vector<8x512xf32> to vector<8x128xf32>
    %367 = math.tanh %366 : vector<8x128xf32>
    %368 = vector.extract_strided_slice %349 {offsets = [0, 384], sizes = [8, 128], strides = [1, 1]} : vector<8x512xf32> to vector<8x128xf32>
    %cst_170 = arith.constant 5.000000e-01 : f32
    %369 = vector.broadcast %cst_170 : f32 to vector<8x128xf32>
    %370 = arith.mulf %369, %368 : vector<8x128xf32>
    %371 = math.tanh %370 : vector<8x128xf32>
    %cst_171 = arith.constant 1.000000e+00 : f32
    %372 = vector.broadcast %cst_171 : f32 to vector<8x128xf32>
    %373 = arith.addf %371, %372 : vector<8x128xf32>
    %cst_172 = arith.constant 5.000000e-01 : f32
    %374 = vector.broadcast %cst_172 : f32 to vector<8x128xf32>
    %375 = arith.mulf %374, %373 : vector<8x128xf32>
    %376 = arith.mulf %365, %344 : vector<8x128xf32>
    %377 = arith.mulf %357, %367 : vector<8x128xf32>
    %378 = arith.addf %376, %377 : vector<8x128xf32>
    %379 = math.tanh %378 : vector<8x128xf32>
    %380 = arith.mulf %375, %379 : vector<8x128xf32>
    %381 = arith.index_cast %c6_i32 : i32 to index
    %c0_173 = arith.constant 0 : index
    %c0_174 = arith.constant 0 : index
    %382 = vector.load %arg3[%381, %c0_173, %c0_174] : memref<8x8x1xf32, #tpu.memory_space<vmem>>, vector<1x8x1xf32>
    %383 = vector.shape_cast %382 : vector<1x8x1xf32> to vector<8x1xf32>
    %384 = arith.subf %380, %343 : vector<8x128xf32>
    %385 = vector.broadcast %383 : vector<8x1xf32> to vector<8x128xf32>
    %386 = arith.mulf %385, %384 : vector<8x128xf32>
    %387 = arith.addf %343, %386 : vector<8x128xf32>
    %388 = arith.subf %378, %344 : vector<8x128xf32>
    %389 = vector.broadcast %383 : vector<8x1xf32> to vector<8x128xf32>
    %390 = arith.mulf %389, %388 : vector<8x128xf32>
    %391 = arith.addf %344, %390 : vector<8x128xf32>
    %c0_175 = arith.constant 0 : index
    %c0_176 = arith.constant 0 : index
    %392 = vector.load %arg11[%c0_175, %c0_176] : memref<8x128xf32, #tpu.memory_space<vmem>>, vector<8x128xf32>
    tpu.vector_store %arg11[%c0_175, %c0_176], %387 {strides = array<i32>} : memref<8x128xf32, #tpu.memory_space<vmem>>, vector<8x128xf32>,
    %c0_177 = arith.constant 0 : index
    %c0_178 = arith.constant 0 : index
    %393 = vector.load %arg12[%c0_177, %c0_178] : memref<8x128xf32, #tpu.memory_space<vmem>>, vector<8x128xf32>
    tpu.vector_store %arg12[%c0_177, %c0_178], %391 {strides = array<i32>} : memref<8x128xf32, #tpu.memory_space<vmem>>, vector<8x128xf32>,
    %394 = arith.index_cast %c6_i32 : i32 to index
    %c0_179 = arith.constant 0 : index
    %c0_180 = arith.constant 0 : index
    %395 = vector.load %arg9[%394, %c0_179, %c0_180] : memref<8x8x128xf32, #tpu.memory_space<vmem>>, vector<1x8x128xf32>
    %396 = vector.shape_cast %395 : vector<1x8x128xf32> to vector<8x128xf32>
    %397 = vector.shape_cast %387 : vector<8x128xf32> to vector<1x8x128xf32>
    tpu.vector_store %arg9[%394, %c0_179, %c0_180], %397 {strides = array<i32>} : memref<8x8x128xf32, #tpu.memory_space<vmem>>, vector<1x8x128xf32>,
    %c7_i32 = arith.constant 7 : i32
    %c0_181 = arith.constant 0 : index
    %c0_182 = arith.constant 0 : index
    %398 = vector.load %arg11[%c0_181, %c0_182] : memref<8x128xf32, #tpu.memory_space<vmem>>, vector<8x128xf32>
    %c0_183 = arith.constant 0 : index
    %c0_184 = arith.constant 0 : index
    %399 = vector.load %arg12[%c0_183, %c0_184] : memref<8x128xf32, #tpu.memory_space<vmem>>, vector<8x128xf32>
    %400 = arith.index_cast %c7_i32 : i32 to index
    %c0_185 = arith.constant 0 : index
    %c0_186 = arith.constant 0 : index
    %401 = vector.load %arg10[%400, %c0_185, %c0_186] : memref<8x8x512xf32, #tpu.memory_space<vmem>>, vector<1x8x512xf32>
    %402 = vector.shape_cast %401 : vector<1x8x512xf32> to vector<8x512xf32>
    %cst_187 = arith.constant dense<0.000000e+00> : vector<8x512xf32>
    %403 = tpu.matmul %398, %12, %cst_187 {dimension_numbers = #tpu.dot_dimension_numbers<[1], [0], [0], [1], [0, 0, 1, 1], [], []>} : vector<8x128xf32>, vector<128x512xf32>, vector<8x512xf32> -> vector<8x512xf32>
    %404 = arith.addf %402, %403 : vector<8x512xf32>
    %405 = vector.extract_strided_slice %404 {offsets = [0, 0], sizes = [8, 128], strides = [1, 1]} : vector<8x512xf32> to vector<8x128xf32>
    %cst_188 = arith.constant 5.000000e-01 : f32
    %406 = vector.broadcast %cst_188 : f32 to vector<8x128xf32>
    %407 = arith.mulf %406, %405 : vector<8x128xf32>
    %408 = math.tanh %407 : vector<8x128xf32>
    %cst_189 = arith.constant 1.000000e+00 : f32
    %409 = vector.broadcast %cst_189 : f32 to vector<8x128xf32>
    %410 = arith.addf %408, %409 : vector<8x128xf32>
    %cst_190 = arith.constant 5.000000e-01 : f32
    %411 = vector.broadcast %cst_190 : f32 to vector<8x128xf32>
    %412 = arith.mulf %411, %410 : vector<8x128xf32>
    %413 = vector.extract_strided_slice %404 {offsets = [0, 128], sizes = [8, 128], strides = [1, 1]} : vector<8x512xf32> to vector<8x128xf32>
    %cst_191 = arith.constant 5.000000e-01 : f32
    %414 = vector.broadcast %cst_191 : f32 to vector<8x128xf32>
    %415 = arith.mulf %414, %413 : vector<8x128xf32>
    %416 = math.tanh %415 : vector<8x128xf32>
    %cst_192 = arith.constant 1.000000e+00 : f32
    %417 = vector.broadcast %cst_192 : f32 to vector<8x128xf32>
    %418 = arith.addf %416, %417 : vector<8x128xf32>
    %cst_193 = arith.constant 5.000000e-01 : f32
    %419 = vector.broadcast %cst_193 : f32 to vector<8x128xf32>
    %420 = arith.mulf %419, %418 : vector<8x128xf32>
    %421 = vector.extract_strided_slice %404 {offsets = [0, 256], sizes = [8, 128], strides = [1, 1]} : vector<8x512xf32> to vector<8x128xf32>
    %422 = math.tanh %421 : vector<8x128xf32>
    %423 = vector.extract_strided_slice %404 {offsets = [0, 384], sizes = [8, 128], strides = [1, 1]} : vector<8x512xf32> to vector<8x128xf32>
    %cst_194 = arith.constant 5.000000e-01 : f32
    %424 = vector.broadcast %cst_194 : f32 to vector<8x128xf32>
    %425 = arith.mulf %424, %423 : vector<8x128xf32>
    %426 = math.tanh %425 : vector<8x128xf32>
    %cst_195 = arith.constant 1.000000e+00 : f32
    %427 = vector.broadcast %cst_195 : f32 to vector<8x128xf32>
    %428 = arith.addf %426, %427 : vector<8x128xf32>
    %cst_196 = arith.constant 5.000000e-01 : f32
    %429 = vector.broadcast %cst_196 : f32 to vector<8x128xf32>
    %430 = arith.mulf %429, %428 : vector<8x128xf32>
    %431 = arith.mulf %420, %399 : vector<8x128xf32>
    %432 = arith.mulf %412, %422 : vector<8x128xf32>
    %433 = arith.addf %431, %432 : vector<8x128xf32>
    %434 = math.tanh %433 : vector<8x128xf32>
    %435 = arith.mulf %430, %434 : vector<8x128xf32>
    %436 = arith.index_cast %c7_i32 : i32 to index
    %c0_197 = arith.constant 0 : index
    %c0_198 = arith.constant 0 : index
    %437 = vector.load %arg3[%436, %c0_197, %c0_198] : memref<8x8x1xf32, #tpu.memory_space<vmem>>, vector<1x8x1xf32>
    %438 = vector.shape_cast %437 : vector<1x8x1xf32> to vector<8x1xf32>
    %439 = arith.subf %435, %398 : vector<8x128xf32>
    %440 = vector.broadcast %438 : vector<8x1xf32> to vector<8x128xf32>
    %441 = arith.mulf %440, %439 : vector<8x128xf32>
    %442 = arith.addf %398, %441 : vector<8x128xf32>
    %443 = arith.subf %433, %399 : vector<8x128xf32>
    %444 = vector.broadcast %438 : vector<8x1xf32> to vector<8x128xf32>
    %445 = arith.mulf %444, %443 : vector<8x128xf32>
    %446 = arith.addf %399, %445 : vector<8x128xf32>
    %c0_199 = arith.constant 0 : index
    %c0_200 = arith.constant 0 : index
    %447 = vector.load %arg11[%c0_199, %c0_200] : memref<8x128xf32, #tpu.memory_space<vmem>>, vector<8x128xf32>
    tpu.vector_store %arg11[%c0_199, %c0_200], %442 {strides = array<i32>} : memref<8x128xf32, #tpu.memory_space<vmem>>, vector<8x128xf32>,
    %c0_201 = arith.constant 0 : index
    %c0_202 = arith.constant 0 : index
    %448 = vector.load %arg12[%c0_201, %c0_202] : memref<8x128xf32, #tpu.memory_space<vmem>>, vector<8x128xf32>
    tpu.vector_store %arg12[%c0_201, %c0_202], %446 {strides = array<i32>} : memref<8x128xf32, #tpu.memory_space<vmem>>, vector<8x128xf32>,
    %449 = arith.index_cast %c7_i32 : i32 to index
    %c0_203 = arith.constant 0 : index
    %c0_204 = arith.constant 0 : index
    %450 = vector.load %arg9[%449, %c0_203, %c0_204] : memref<8x8x128xf32, #tpu.memory_space<vmem>>, vector<1x8x128xf32>
    %451 = vector.shape_cast %450 : vector<1x8x128xf32> to vector<8x128xf32>
    %452 = vector.shape_cast %442 : vector<8x128xf32> to vector<1x8x128xf32>
    tpu.vector_store %arg9[%449, %c0_203, %c0_204], %452 {strides = array<i32>} : memref<8x8x128xf32, #tpu.memory_space<vmem>>, vector<1x8x128xf32>,
    %c8_i32 = arith.constant 8 : i32
    return
  }
  func.func @transform_0(%arg0: i32, %arg1: i32) -> (i32, i32, i32) {
    %c0_i32 = arith.constant 0 : i32
    %c0_i32_0 = arith.constant 0 : i32
    return %arg1, %arg0, %c0_i32 : i32, i32, i32
  }
  func.func @transform_1(%arg0: i32, %arg1: i32) -> (i32, i32, i32) {
    %c0_i32 = arith.constant 0 : i32
    %c0_i32_0 = arith.constant 0 : i32
    return %arg1, %arg0, %c0_i32 : i32, i32, i32
  }
  func.func @transform_4(%arg0: i32, %arg1: i32) -> (i32, i32) {
    %c0_i32 = arith.constant 0 : i32
    %c0_i32_0 = arith.constant 0 : i32
    %c0_i32_1 = arith.constant 0 : i32
    return %c0_i32, %c0_i32_0 : i32, i32
  }
  func.func @transform_5(%arg0: i32, %arg1: i32) -> (i32, i32) {
    %c0_i32 = arith.constant 0 : i32
    %c0_i32_0 = arith.constant 0 : i32
    %c0_i32_1 = arith.constant 0 : i32
    return %c0_i32, %c0_i32_0 : i32, i32
  }
  func.func @transform_6(%arg0: i32, %arg1: i32) -> (i32, i32) {
    %c0_i32 = arith.constant 0 : i32
    %c0_i32_0 = arith.constant 0 : i32
    %c0_i32_1 = arith.constant 0 : i32
    return %c0_i32, %c0_i32_0 : i32, i32
  }
  func.func @transform_7(%arg0: i32, %arg1: i32) -> (i32, i32, i32) {
    %c0_i32 = arith.constant 0 : i32
    %c0_i32_0 = arith.constant 0 : i32
    return %arg1, %arg0, %c0_i32 : i32, i32, i32
  }
}

</mosaic_0001>

<llo_original>
// kernel: lstm_rnn_forward.1
$region0: #{lstm_rnn_forward.1}
  #allocation0 [shape = 'u32[]', space=smem, size = 0x4, offset = 0x4, fixed_abs, tag = 'smem constant byte address 0x4 - core index']
  #allocation1 [shape = 'u32[144,128]{1,0:T(1,128)}', space=vmem, size = 0x12000, scoped, tag = 'internal scratch']
  #allocation2 [shape = 'f32[8,8,512]{2,1,0:T(8,128)}', space=vmem, size = 0x20000, scoped, tag = 'scratch operand']
  #allocation3 [shape = 'f32[8,128]{1,0:T(8,128)}', space=vmem, size = 0x1000, scoped, tag = 'scratch operand']
  #allocation4 [shape = 'f32[8,128]{1,0:T(8,128)}', space=vmem, size = 0x1000, scoped, tag = 'scratch operand']
  #allocation5 [shape = 'f32[128,512]{1,0:T(8,128)}', space=vmem, size = 0x40000, scoped, tag = 'scratch operand']
  #allocation6 [shape = 'f32[128,512]{1,0:T(8,128)}', space=vmem, size = 0x40000, scoped, tag = 'scratch operand']
  #allocation7 [shape = 's32[2]{0}', space=sflag, size = 0x8, scoped, tag = 'scratch operand']
  #allocation11 [shape = 's32[]', space=sflag, size = 0x4, offset = 0, fixed_abs, tag = 'sflag constant byte address 0x0 - dummy sync flag']
  #allocation12 [shape = 's32[]', space=sflag, size = 0x4, offset = 0, fixed_abs, tag = 'sflag constant byte address 0x0 - dummy sync flag']
  %s0 = inlined_call_operand.vmem [shape: f32[16,16,128], index: 0, kind: input, shape index: {}]
  %s1 = inlined_call_operand.vmem [shape: f32[16,16,1], index: 1, kind: input, shape index: {}]
  %s2 = inlined_call_operand.vmem [shape: f32[128,512], index: 2, kind: input, shape index: {}]
  %s3 = inlined_call_operand.vmem [shape: f32[128,512], index: 3, kind: input, shape index: {}]
  %s4 = inlined_call_operand.vmem [shape: f32[1,512], index: 4, kind: input, shape index: {}]
  %s5 = inlined_call_operand.vmem [shape: f32[1,128], index: 5, kind: input, shape index: {}]
  %s6 = inlined_call_operand.vmem [shape: f32[1,128], index: 6, kind: input, shape index: {}]
  %s7 = inlined_call_operand.vmem [shape: f32[16,16,128], index: 7, kind: output, shape index: {}]
  %s8 = sld [smem:[#allocation0]]
  $region235: #{lstm_rnn_forward.1} parent=0
    _
  %s10 = ssub.s32 1, %s8
  %s11 = scalar_select 0, %s10, %s8
  $region1: #{lstm_rnn_forward.1} parent=0
    #allocation8 [shape = 'u8[65536]{0}', space=vmem, size = 0x10000, scoped, tag = 'input window, operand 0']
    #allocation9 [shape = 'u8[65536]{0}', space=vmem, size = 0x10000, scoped, tag = 'input window, operand 1']
    #allocation10 [shape = 'u8[65536]{0}', space=vmem, size = 0x10000, scoped, tag = 'output window, operand 0']
    loop: start=0, step=1, limit=6
    $region2: #{lstm_rnn_forward.1} parent=1 // loop_pre_header
      _
    $region3: #{lstm_rnn_forward.1} parent=1 // loop_header
      %s13 = sphi 0, %s17
      %p14 = scmp.ge.s32.totalorder %s13, 6
      %s20 = sphi 0, %s32
      %s21 = sphi 0, %s28
      %s22 = sphi 0, %s20
      %s23 = sphi 0, %s21
      %s24 = sphi 0, %s22
      %s25 = sphi 0, %s23
      %s37 = sphi 0, %s39
      %s40 = sphi 0, %s37
      %s41 = sphi 0, %s40
      %s57 = sphi 0, %s41
      %s65 = sphi 0, %s67
      %s68 = sphi 0, %s65
      %s69 = sphi 0, %s68
      %s85 = sphi 0, %s69
      %s89 = sphi 0, %s89
      %s91 = sphi 0, %s89
      %s92 = sphi 0, %s91
      %s106 = sphi 0, %s92
      %s110 = sphi 0, %s110
      %s112 = sphi 0, %s110
      %s113 = sphi 0, %s112
      %s127 = sphi 0, %s113
      %s131 = sphi 0, %s131
      %s133 = sphi 0, %s131
      %s134 = sphi 0, %s133
      %s148 = sphi 0, %s134
      %s156 = sphi 0, %s158
      %s159 = sphi 0, %s156
      %s160 = sphi 0, %s159
      %s176 = sphi 0, %s160
    $region4: #{lstm_rnn_forward.1} parent=1 // loop_header_branch
      %16 = sbr.rel (%p14) target = $region8
    $region5: #{lstm_rnn_forward.1} parent=1 // loop_body
      %s18 = ssub.s32 %s13, 1
      %s19 = ssub.s32 %s13, 2
      %s26 = sadd.s32 1, %s21
      %p27 = scmp.ge.s32.totalorder %s26, 2
      %s28 = scalar_select %p27, 0, %s26
      %s29 = sadd.s32 1, %s20
      %s30 = scalar_select %p27, %s29, %s20
      %p31 = scmp.ge.s32.totalorder %s30, 2
      %s32 = scalar_select %p31, 0, %s30
      %s33 = ssub.s32 %s21, %s28
      %s34 = ssub.s32 %s20, %s32
      %s35 = sor.u32 %s33, %s34
      %p36 = scmp.eq.s32.totalorder %s35, 0
      %s38 = sadd.s32 %s37, 1
      %s39 = scalar_select %p36, %s37, %s38
      %p42 = pneg %p36
      %p43 = scmp.eq.s32.totalorder %s13, 3
      %p44 = por %p42, %p43
      %p45 = scmp.ne.s32.totalorder %s37, %s40
      %p46 = scmp.eq.s32.totalorder %s13, 0
      %p47 = por %p45, %p46
      %p48 = scmp.ne.s32.totalorder %s37, %s40
      %p49 = scmp.eq.s32.totalorder %s18, 3
      %p50 = por %p48, %p49
      %p51 = scmp.ne.s32.totalorder %s40, %s41
      %p52 = scmp.eq.s32.totalorder %s18, 0
      %p53 = por %p51, %p52
      %p54 = scmp.ne.s32.totalorder %s40, %s41
      %p55 = scmp.eq.s32.totalorder %s19, 3
      %p56 = por %p54, %p55
      %p58 = scmp.ne.s32.totalorder %s41, %s57
      %p59 = scmp.eq.s32.totalorder %s19, 0
      %p60 = por %p58, %p59
      %s61 = ssub.s32 %s21, %s28
      %s62 = ssub.s32 %s20, %s32
      %s63 = sor.u32 %s61, %s62
      %p64 = scmp.eq.s32.totalorder %s63, 0
      %s66 = sadd.s32 %s65, 1
      %s67 = scalar_select %p64, %s65, %s66
      %p70 = pneg %p64
      %p71 = scmp.eq.s32.totalorder %s13, 3
      %p72 = por %p70, %p71
      %p73 = scmp.ne.s32.totalorder %s65, %s68
      %p74 = scmp.eq.s32.totalorder %s13, 0
      %p75 = por %p73, %p74
      %p76 = scmp.ne.s32.totalorder %s65, %s68
      %p77 = scmp.eq.s32.totalorder %s18, 3
      %p78 = por %p76, %p77
      %p79 = scmp.ne.s32.totalorder %s68, %s69
      %p80 = scmp.eq.s32.totalorder %s18, 0
      %p81 = por %p79, %p80
      %p82 = scmp.ne.s32.totalorder %s68, %s69
      %p83 = scmp.eq.s32.totalorder %s19, 3
      %p84 = por %p82, %p83
      %p86 = scmp.ne.s32.totalorder %s69, %s85
      %p87 = scmp.eq.s32.totalorder %s19, 0
      %p88 = por %p86, %p87
      %s90 = sadd.s32 %s89, 1
      %p93 = scmp.eq.s32.totalorder %s13, 3
      %p94 = scmp.ne.s32.totalorder %s89, %s91
      %p95 = scmp.eq.s32.totalorder %s13, 0
      %p96 = por %p94, %p95
      %p97 = scmp.ne.s32.totalorder %s89, %s91
      %p98 = scmp.eq.s32.totalorder %s18, 3
      %p99 = por %p97, %p98
      %p100 = scmp.ne.s32.totalorder %s91, %s92
      %p101 = scmp.eq.s32.totalorder %s18, 0
      %p102 = por %p100, %p101
      %p103 = scmp.ne.s32.totalorder %s91, %s92
      %p104 = scmp.eq.s32.totalorder %s19, 3
      %p105 = por %p103, %p104
      %p107 = scmp.ne.s32.totalorder %s92, %s106
      %p108 = scmp.eq.s32.totalorder %s19, 0
      %p109 = por %p107, %p108
      %s111 = sadd.s32 %s110, 1
      %p114 = scmp.eq.s32.totalorder %s13, 3
      %p115 = scmp.ne.s32.totalorder %s110, %s112
      %p116 = scmp.eq.s32.totalorder %s13, 0
      %p117 = por %p115, %p116
      %p118 = scmp.ne.s32.totalorder %s110, %s112
      %p119 = scmp.eq.s32.totalorder %s18, 3
      %p120 = por %p118, %p119
      %p121 = scmp.ne.s32.totalorder %s112, %s113
      %p122 = scmp.eq.s32.totalorder %s18, 0
      %p123 = por %p121, %p122
      %p124 = scmp.ne.s32.totalorder %s112, %s113
      %p125 = scmp.eq.s32.totalorder %s19, 3
      %p126 = por %p124, %p125
      %p128 = scmp.ne.s32.totalorder %s113, %s127
      %p129 = scmp.eq.s32.totalorder %s19, 0
      %p130 = por %p128, %p129
      %s132 = sadd.s32 %s131, 1
      %p135 = scmp.eq.s32.totalorder %s13, 3
      %p136 = scmp.ne.s32.totalorder %s131, %s133
      %p137 = scmp.eq.s32.totalorder %s13, 0
      %p138 = por %p136, %p137
      %p139 = scmp.ne.s32.totalorder %s131, %s133
      %p140 = scmp.eq.s32.totalorder %s18, 3
      %p141 = por %p139, %p140
      %p142 = scmp.ne.s32.totalorder %s133, %s134
      %p143 = scmp.eq.s32.totalorder %s18, 0
      %p144 = por %p142, %p143
      %p145 = scmp.ne.s32.totalorder %s133, %s134
      %p146 = scmp.eq.s32.totalorder %s19, 3
      %p147 = por %p145, %p146
      %p149 = scmp.ne.s32.totalorder %s134, %s148
      %p150 = scmp.eq.s32.totalorder %s19, 0
      %p151 = por %p149, %p150
      %s152 = ssub.s32 %s21, %s28
      %s153 = ssub.s32 %s20, %s32
      %s154 = sor.u32 %s152, %s153
      %p155 = scmp.eq.s32.totalorder %s154, 0
      %s157 = sadd.s32 %s156, 1
      %s158 = scalar_select %p155, %s156, %s157
      %p161 = pneg %p155
      %p162 = scmp.eq.s32.totalorder %s13, 3
      %p163 = por %p161, %p162
      %p164 = scmp.ne.s32.totalorder %s156, %s159
      %p165 = scmp.eq.s32.totalorder %s13, 0
      %p166 = por %p164, %p165
      %p167 = scmp.ne.s32.totalorder %s156, %s159
      %p168 = scmp.eq.s32.totalorder %s18, 3
      %p169 = por %p167, %p168
      %p170 = scmp.ne.s32.totalorder %s159, %s160
      %p171 = scmp.eq.s32.totalorder %s18, 0
      %p172 = por %p170, %p171
      %p173 = scmp.ne.s32.totalorder %s159, %s160
      %p174 = scmp.eq.s32.totalorder %s19, 3
      %p175 = por %p173, %p174
      %p177 = scmp.ne.s32.totalorder %s160, %s176
      %p178 = scmp.eq.s32.totalorder %s19, 0
      %p179 = por %p177, %p178
      %p180 = scmp.le.s32.totalorder 1, %s13
      %p181 = scmp.lt.s32.totalorder %s13, 5
      %p182 = pnand %p180, %p181
      %p183 = pneg %p182
      // Predicated region
      $region9: #{lstm_rnn_forward.1} parent=5 // pred_check
        _
      $region10: #{lstm_rnn_forward.1} parent=5 // pred_check_branch
        %185 = sbr.rel (%p182) target = $region12
      $region11: #{lstm_rnn_forward.1} parent=5 // pred_region
        %s186 = ssub.s32 %s13, 1
        // Predicated region
        $region13: #{lstm_rnn_forward.1} parent=11 // pred_check
          %p187 = pneg %p102
        $region14: #{lstm_rnn_forward.1} parent=11 // pred_check_branch
          %189 = sbr.rel (%p187) target = $region16
        $region15: #{lstm_rnn_forward.1} parent=11 // pred_region
          _
        $region16: #{lstm_rnn_forward.1} parent=11 // pred_fallthru
          _
        // Predicated region
        $region17: #{lstm_rnn_forward.1} parent=11 // pred_check
          %p190 = pneg %p123
        $region18: #{lstm_rnn_forward.1} parent=11 // pred_check_branch
          %192 = sbr.rel (%p190) target = $region20
        $region19: #{lstm_rnn_forward.1} parent=11 // pred_region
          _
        $region20: #{lstm_rnn_forward.1} parent=11 // pred_fallthru
          _
        // Predicated region
        $region21: #{lstm_rnn_forward.1} parent=11 // pred_check
          %p193 = pneg %p144
        $region22: #{lstm_rnn_forward.1} parent=11 // pred_check_branch
          %195 = sbr.rel (%p193) target = $region24
        $region23: #{lstm_rnn_forward.1} parent=11 // pred_region
          _
        $region24: #{lstm_rnn_forward.1} parent=11 // pred_fallthru
          _
      $region12: #{lstm_rnn_forward.1} parent=5 // pred_fallthru
        _
      %p196 = scmp.lt.s32.totalorder %s13, 4
      // Predicated region
      $region25: #{lstm_rnn_forward.1} parent=5 // pred_check
        %p197 = pneg %p196
      $region26: #{lstm_rnn_forward.1} parent=5 // pred_check_branch
        %199 = sbr.rel (%p197) target = $region28
      $region27: #{lstm_rnn_forward.1} parent=5 // pred_region
        // Predicated region
        $region29: #{lstm_rnn_forward.1} parent=27 // pred_check
          %p200 = pneg %p47
        $region30: #{lstm_rnn_forward.1} parent=27 // pred_check_branch
          %202 = sbr.rel (%p200) target = $region32
        $region31: #{lstm_rnn_forward.1} parent=27 // pred_region
          %s203 = sand.u32 %s37, 1
          %s204 = sand.u32 %s37, 1
          %s205 = smul.addr %s204, 64
          %s206 = scalar_lea.vmem [#allocation8], %s205
          %s207 = smul.u32 8, %s21
          %s208 = smul.addr %s207, 2
          %s209 = sadd.s32 %s20, %s208
          %s210 = smul.addr %s209, 8
          %s211 = scalar_lea.vmem %s0, %s210
          // Predicated region
          $region33: #{lstm_rnn_forward.1} parent=31 // pred_check
            _
          $region34: #{lstm_rnn_forward.1} parent=31 // pred_check_branch
            %213 = sbr.rel (0) target = $region36
          $region35: #{lstm_rnn_forward.1} parent=31 // pred_region
            // Predicated region
            $region37: #{lstm_rnn_forward.1} parent=35 // pred_check
              _
            $region38: #{lstm_rnn_forward.1} parent=35 // pred_check_branch
              %215 = sbr.rel (0) target = $region40
            $region39: #{lstm_rnn_forward.1} parent=35 // pred_region
              // Predicated region
              $region52: #{lstm_rnn_forward.1} parent=39 // pred_check
                _
              $region53: #{lstm_rnn_forward.1} parent=39 // pred_check_branch
                %245 = sbr.rel (0) target = $region55
              $region54: #{lstm_rnn_forward.1} parent=39 // pred_region
                loop: start=0, step=1, limit=1
                $region56: #{lstm_rnn_forward.1} parent=54 // loop_pre_header
                  _
                $region57: #{lstm_rnn_forward.1} parent=54 // loop_header
                  %s247 = sphi 0, %s251
                  %p248 = scmp.ge.s32.totalorder %s247, 1
                  %s252 = sphi %s211, %s211
                  %s253 = sphi %s206, %s206
                $region58: #{lstm_rnn_forward.1} parent=54 // loop_header_branch
                  %250 = sbr.rel (%p248) target = $region62
                $region59: #{lstm_rnn_forward.1} parent=54 // loop_body
                  %v254 = vld [vmem:[%s252] sm:$0xff]
                  %255 = vst [vmem:[%s253] sm:$0xff] %v254
                  %v256 = vld [vmem:[%s252 + $0x10] sm:$0xff]
                  %257 = vst [vmem:[%s253 + $0x8] sm:$0xff] %v256
                  %v258 = vld [vmem:[%s252 + $0x20] sm:$0xff]
                  %259 = vst [vmem:[%s253 + $0x10] sm:$0xff] %v258
                  %v260 = vld [vmem:[%s252 + $0x30] sm:$0xff]
                  %261 = vst [vmem:[%s253 + $0x18] sm:$0xff] %v260
                  %v262 = vld [vmem:[%s252 + $0x40] sm:$0xff]
                  %263 = vst [vmem:[%s253 + $0x20] sm:$0xff] %v262
                  %v264 = vld [vmem:[%s252 + $0x50] sm:$0xff]
                  %265 = vst [vmem:[%s253 + $0x28] sm:$0xff] %v264
                  %v266 = vld [vmem:[%s252 + $0x60] sm:$0xff]
                  %267 = vst [vmem:[%s253 + $0x30] sm:$0xff] %v266
                  %v268 = vld [vmem:[%s252 + $0x70] sm:$0xff]
                  %269 = vst [vmem:[%s253 + $0x38] sm:$0xff] %v268
                $region60: #{lstm_rnn_forward.1} parent=54 // loop_footer
                  %s251 = sadd.s32 1, %s247
                $region61: #{lstm_rnn_forward.1} parent=54 // loop_footer_branch
                  %246 = sbr.rel target = $region57
                $region62: #{lstm_rnn_forward.1} parent=54 // loop_exit
                  _
              $region55: #{lstm_rnn_forward.1} parent=39 // pred_fallthru
                _
              // Predicated region
              $region63: #{lstm_rnn_forward.1} parent=39 // pred_check
                _
              $region64: #{lstm_rnn_forward.1} parent=39 // pred_check_branch
                %271 = sbr.rel target = $region66
              $region65: #{lstm_rnn_forward.1} parent=39 // pred_region
                _
              $region66: #{lstm_rnn_forward.1} parent=39 // pred_fallthru
                _
            $region40: #{lstm_rnn_forward.1} parent=35 // pred_fallthru
              _
            // Predicated region
            $region41: #{lstm_rnn_forward.1} parent=35 // pred_check
              _
            $region42: #{lstm_rnn_forward.1} parent=35 // pred_check_branch
              %217 = sbr.rel target = $region44
            $region43: #{lstm_rnn_forward.1} parent=35 // pred_region
              %s219 = ssub.s32 256, 1
              loop: start=0, step=1, limit=1
              $region45: #{lstm_rnn_forward.1} parent=43 // loop_pre_header
                _
              $region46: #{lstm_rnn_forward.1} parent=43 // loop_header
                %s221 = sphi 0, %s225
                %p222 = scmp.ge.s32.totalorder %s221, 1
                %s226 = sphi %s211, %s211
                %s227 = sphi %s206, %s206
              $region47: #{lstm_rnn_forward.1} parent=43 // loop_header_branch
                %224 = sbr.rel (%p222) target = $region51
              $region48: #{lstm_rnn_forward.1} parent=43 // loop_body
                %v228 = vld [vmem:[%s226] sm:%s219]
                %229 = vst [vmem:[%s227] sm:%s219] %v228
                %v230 = vld [vmem:[%s226 + $0x10] sm:%s219]
                %231 = vst [vmem:[%s227 + $0x8] sm:%s219] %v230
                %v232 = vld [vmem:[%s226 + $0x20] sm:%s219]
                %233 = vst [vmem:[%s227 + $0x10] sm:%s219] %v232
                %v234 = vld [vmem:[%s226 + $0x30] sm:%s219]
                %235 = vst [vmem:[%s227 + $0x18] sm:%s219] %v234
                %v236 = vld [vmem:[%s226 + $0x40] sm:%s219]
                %237 = vst [vmem:[%s227 + $0x20] sm:%s219] %v236
                %v238 = vld [vmem:[%s226 + $0x50] sm:%s219]
                %239 = vst [vmem:[%s227 + $0x28] sm:%s219] %v238
                %v240 = vld [vmem:[%s226 + $0x60] sm:%s219]
                %241 = vst [vmem:[%s227 + $0x30] sm:%s219] %v240
                %v242 = vld [vmem:[%s226 + $0x70] sm:%s219]
                %243 = vst [vmem:[%s227 + $0x38] sm:%s219] %v242
              $region49: #{lstm_rnn_forward.1} parent=43 // loop_footer
                %s225 = sadd.s32 1, %s221
              $region50: #{lstm_rnn_forward.1} parent=43 // loop_footer_branch
                %220 = sbr.rel target = $region46
              $region51: #{lstm_rnn_forward.1} parent=43 // loop_exit
                _
            $region44: #{lstm_rnn_forward.1} parent=35 // pred_fallthru
              _
          $region36: #{lstm_rnn_forward.1} parent=31 // pred_fallthru
            _
          %272 = vnop
        $region32: #{lstm_rnn_forward.1} parent=27 // pred_fallthru
          _
        // Predicated region
        $region67: #{lstm_rnn_forward.1} parent=27 // pred_check
          %p273 = pneg %p75
        $region68: #{lstm_rnn_forward.1} parent=27 // pred_check_branch
          %275 = sbr.rel (%p273) target = $region70
        $region69: #{lstm_rnn_forward.1} parent=27 // pred_region
          %s276 = sand.u32 %s65, 1
          %s277 = sand.u32 %s65, 1
          %s278 = smul.addr %s277, 64
          %s279 = scalar_lea.vmem [#allocation9], %s278
          %s280 = smul.u32 8, %s21
          %s281 = smul.addr %s280, 2
          %s282 = sadd.s32 %s20, %s281
          %s283 = smul.addr %s282, 8
          %s284 = scalar_lea.vmem %s1, %s283
          // Predicated region
          $region71: #{lstm_rnn_forward.1} parent=69 // pred_check
            _
          $region72: #{lstm_rnn_forward.1} parent=69 // pred_check_branch
            %286 = sbr.rel (0) target = $region74
          $region73: #{lstm_rnn_forward.1} parent=69 // pred_region
            // Predicated region
            $region75: #{lstm_rnn_forward.1} parent=73 // pred_check
              _
            $region76: #{lstm_rnn_forward.1} parent=73 // pred_check_branch
              %288 = sbr.rel (0) target = $region78
            $region77: #{lstm_rnn_forward.1} parent=73 // pred_region
              // Predicated region
              $region90: #{lstm_rnn_forward.1} parent=77 // pred_check
                _
              $region91: #{lstm_rnn_forward.1} parent=77 // pred_check_branch
                %318 = sbr.rel (0) target = $region93
              $region92: #{lstm_rnn_forward.1} parent=77 // pred_region
                loop: start=0, step=1, limit=1
                $region94: #{lstm_rnn_forward.1} parent=92 // loop_pre_header
                  _
                $region95: #{lstm_rnn_forward.1} parent=92 // loop_header
                  %s320 = sphi 0, %s324
                  %p321 = scmp.ge.s32.totalorder %s320, 1
                  %s325 = sphi %s284, %s284
                  %s326 = sphi %s279, %s279
                $region96: #{lstm_rnn_forward.1} parent=92 // loop_header_branch
                  %323 = sbr.rel (%p321) target = $region100
                $region97: #{lstm_rnn_forward.1} parent=92 // loop_body
                  %v327 = vld [vmem:[%s325] sm:$0xff]
                  %328 = vst [vmem:[%s326] sm:$0xff] %v327
                  %v329 = vld [vmem:[%s325 + $0x10] sm:$0xff]
                  %330 = vst [vmem:[%s326 + $0x8] sm:$0xff] %v329
                  %v331 = vld [vmem:[%s325 + $0x20] sm:$0xff]
                  %332 = vst [vmem:[%s326 + $0x10] sm:$0xff] %v331
                  %v333 = vld [vmem:[%s325 + $0x30] sm:$0xff]
                  %334 = vst [vmem:[%s326 + $0x18] sm:$0xff] %v333
                  %v335 = vld [vmem:[%s325 + $0x40] sm:$0xff]
                  %336 = vst [vmem:[%s326 + $0x20] sm:$0xff] %v335
                  %v337 = vld [vmem:[%s325 + $0x50] sm:$0xff]
                  %338 = vst [vmem:[%s326 + $0x28] sm:$0xff] %v337
                  %v339 = vld [vmem:[%s325 + $0x60] sm:$0xff]
                  %340 = vst [vmem:[%s326 + $0x30] sm:$0xff] %v339
                  %v341 = vld [vmem:[%s325 + $0x70] sm:$0xff]
                  %342 = vst [vmem:[%s326 + $0x38] sm:$0xff] %v341
                $region98: #{lstm_rnn_forward.1} parent=92 // loop_footer
                  %s324 = sadd.s32 1, %s320
                $region99: #{lstm_rnn_forward.1} parent=92 // loop_footer_branch
                  %319 = sbr.rel target = $region95
                $region100: #{lstm_rnn_forward.1} parent=92 // loop_exit
                  _
              $region93: #{lstm_rnn_forward.1} parent=77 // pred_fallthru
                _
              // Predicated region
              $region101: #{lstm_rnn_forward.1} parent=77 // pred_check
                _
              $region102: #{lstm_rnn_forward.1} parent=77 // pred_check_branch
                %344 = sbr.rel target = $region104
              $region103: #{lstm_rnn_forward.1} parent=77 // pred_region
                _
              $region104: #{lstm_rnn_forward.1} parent=77 // pred_fallthru
                _
            $region78: #{lstm_rnn_forward.1} parent=73 // pred_fallthru
              _
            // Predicated region
            $region79: #{lstm_rnn_forward.1} parent=73 // pred_check
              _
            $region80: #{lstm_rnn_forward.1} parent=73 // pred_check_branch
              %290 = sbr.rel target = $region82
            $region81: #{lstm_rnn_forward.1} parent=73 // pred_region
              %s292 = ssub.s32 256, 1
              loop: start=0, step=1, limit=1
              $region83: #{lstm_rnn_forward.1} parent=81 // loop_pre_header
                _
              $region84: #{lstm_rnn_forward.1} parent=81 // loop_header
                %s294 = sphi 0, %s298
                %p295 = scmp.ge.s32.totalorder %s294, 1
                %s299 = sphi %s284, %s284
                %s300 = sphi %s279, %s279
              $region85: #{lstm_rnn_forward.1} parent=81 // loop_header_branch
                %297 = sbr.rel (%p295) target = $region89
              $region86: #{lstm_rnn_forward.1} parent=81 // loop_body
                %v301 = vld [vmem:[%s299] sm:%s292]
                %302 = vst [vmem:[%s300] sm:%s292] %v301
                %v303 = vld [vmem:[%s299 + $0x10] sm:%s292]
                %304 = vst [vmem:[%s300 + $0x8] sm:%s292] %v303
                %v305 = vld [vmem:[%s299 + $0x20] sm:%s292]
                %306 = vst [vmem:[%s300 + $0x10] sm:%s292] %v305
                %v307 = vld [vmem:[%s299 + $0x30] sm:%s292]
                %308 = vst [vmem:[%s300 + $0x18] sm:%s292] %v307
                %v309 = vld [vmem:[%s299 + $0x40] sm:%s292]
                %310 = vst [vmem:[%s300 + $0x20] sm:%s292] %v309
                %v311 = vld [vmem:[%s299 + $0x50] sm:%s292]
                %312 = vst [vmem:[%s300 + $0x28] sm:%s292] %v311
                %v313 = vld [vmem:[%s299 + $0x60] sm:%s292]
                %314 = vst [vmem:[%s300 + $0x30] sm:%s292] %v313
                %v315 = vld [vmem:[%s299 + $0x70] sm:%s292]
                %316 = vst [vmem:[%s300 + $0x38] sm:%s292] %v315
              $region87: #{lstm_rnn_forward.1} parent=81 // loop_footer
                %s298 = sadd.s32 1, %s294
              $region88: #{lstm_rnn_forward.1} parent=81 // loop_footer_branch
                %293 = sbr.rel target = $region84
              $region89: #{lstm_rnn_forward.1} parent=81 // loop_exit
                _
            $region82: #{lstm_rnn_forward.1} parent=73 // pred_fallthru
              _
          $region74: #{lstm_rnn_forward.1} parent=69 // pred_fallthru
            _
          %345 = vnop
        $region70: #{lstm_rnn_forward.1} parent=27 // pred_fallthru
          _
      $region28: #{lstm_rnn_forward.1} parent=5 // pred_fallthru
        _
      %p346 = scmp.le.s32.totalorder 1, %s13
      %p347 = scmp.lt.s32.totalorder %s13, 5
      %p348 = pnand %p346, %p347
      %p349 = pneg %p348
      // Predicated region
      $region105: #{lstm_rnn_forward.1} parent=5 // pred_check
        _
      $region106: #{lstm_rnn_forward.1} parent=5 // pred_check_branch
        %351 = sbr.rel (%p348) target = $region108
      $region107: #{lstm_rnn_forward.1} parent=5 // pred_region
        %s352 = ssub.s32 %s13, 1
        %s353 = sand.u32 %s40, 1
        %s354 = sand.u32 %s40, 1
        %s355 = smul.addr %s354, 64
        %s356 = scalar_lea.vmem [#allocation8], %s355
        // Predicated region
        $region109: #{lstm_rnn_forward.1} parent=107 // pred_check
          %p357 = pneg %p53
        $region110: #{lstm_rnn_forward.1} parent=107 // pred_check_branch
          %359 = sbr.rel (%p357) target = $region112
        $region111: #{lstm_rnn_forward.1} parent=107 // pred_region
          _
        $region112: #{lstm_rnn_forward.1} parent=107 // pred_fallthru
          _
        %s360 = sand.u32 %s68, 1
        %s361 = sand.u32 %s68, 1
        %s362 = smul.addr %s361, 64
        %s363 = scalar_lea.vmem [#allocation9], %s362
        // Predicated region
        $region113: #{lstm_rnn_forward.1} parent=107 // pred_check
          %p364 = pneg %p81
        $region114: #{lstm_rnn_forward.1} parent=107 // pred_check_branch
          %366 = sbr.rel (%p364) target = $region116
        $region115: #{lstm_rnn_forward.1} parent=107 // pred_region
          _
        $region116: #{lstm_rnn_forward.1} parent=107 // pred_fallthru
          _
        %s367 = sand.u32 %s40, 1
        %s368 = sand.u32 %s40, 1
        %s369 = smul.addr %s368, 64
        %s370 = scalar_lea.vmem [#allocation8], %s369
        %p371 = pneg %p53
        %p372 = pneg %p50
        %s373 = sand.u32 %s68, 1
        %s374 = sand.u32 %s68, 1
        %s375 = smul.addr %s374, 64
        %s376 = scalar_lea.vmem [#allocation9], %s375
        %p377 = pneg %p81
        %p378 = pneg %p78
        %p379 = pneg %p102
        %p380 = pneg %p99
        %p381 = pneg %p123
        %p382 = pneg %p120
        %p383 = pneg %p144
        %p384 = pneg %p141
        %p385 = pneg %p172
        %p386 = pneg %p169
        %s387 = sand.u32 %s159, 1
        %s388 = sand.u32 %s159, 1
        %s389 = smul.addr %s388, 64
        %s390 = scalar_lea.vmem [#allocation10], %s389
        %s391 = smul.u32 8, %s23
        %s392 = smul.u32 8, %s23
        %s393 = smul.u32 8, %s23
        %p394 = scmp.eq.s32.totalorder %s23, 0
        // Predicated region
        $region117: #{lstm_rnn_forward.1} parent=107 // pred_check
          %p395 = pneg %p394
        $region118: #{lstm_rnn_forward.1} parent=107 // pred_check_branch
          %397 = sbr.rel (%p395) target = $region120
        $region119: #{lstm_rnn_forward.1} parent=107 // pred_region
          %p399 = scmp.lt.u32.totalorder 512, 8
          %p400 = pneg %p399
          // Predicated region
          $region121: #{lstm_rnn_forward.1} parent=119 // pred_check
            _
          $region122: #{lstm_rnn_forward.1} parent=119 // pred_check_branch
            %402 = sbr.rel (%p399) target = $region124
          $region123: #{lstm_rnn_forward.1} parent=119 // pred_region
            %s418 = sand.u32 512, 7
            %p419 = scmp.eq.s32.totalorder %s418, 0
            // Predicated region
            $region136: #{lstm_rnn_forward.1} parent=123 // pred_check
              %p420 = pneg %p419
            $region137: #{lstm_rnn_forward.1} parent=123 // pred_check_branch
              %422 = sbr.rel (%p420) target = $region139
            $region138: #{lstm_rnn_forward.1} parent=123 // pred_region
              loop: start=0, step=1, limit=1
              $region140: #{lstm_rnn_forward.1} parent=138 // loop_pre_header
                _
              $region141: #{lstm_rnn_forward.1} parent=138 // loop_header
                %s424 = sphi 0, %s428
                %p425 = scmp.ge.s32.totalorder %s424, 1
                %s429 = sphi %s2, %s2
                %s430 = sphi [#allocation5], [#allocation5]
              $region142: #{lstm_rnn_forward.1} parent=138 // loop_header_branch
                %427 = sbr.rel (%p425) target = $region146
              $region143: #{lstm_rnn_forward.1} parent=138 // loop_body
                %v431 = vld [vmem:[%s429] sm:$0xff]
                %432 = vst [vmem:[%s430] sm:$0xff] %v431
                %v433 = vld [vmem:[%s429 + $0x8] sm:$0xff]
                %434 = vst [vmem:[%s430 + $0x8] sm:$0xff] %v433
                %v435 = vld [vmem:[%s429 + $0x10] sm:$0xff]
                %436 = vst [vmem:[%s430 + $0x10] sm:$0xff] %v435
                %v437 = vld [vmem:[%s429 + $0x18] sm:$0xff]
                %438 = vst [vmem:[%s430 + $0x18] sm:$0xff] %v437
                %v439 = vld [vmem:[%s429 + $0x20] sm:$0xff]
                %440 = vst [vmem:[%s430 + $0x20] sm:$0xff] %v439
                %v441 = vld [vmem:[%s429 + $0x28] sm:$0xff]
                %442 = vst [vmem:[%s430 + $0x28] sm:$0xff] %v441
                %v443 = vld [vmem:[%s429 + $0x30] sm:$0xff]
                %444 = vst [vmem:[%s430 + $0x30] sm:$0xff] %v443
                %v445 = vld [vmem:[%s429 + $0x38] sm:$0xff]
                %446 = vst [vmem:[%s430 + $0x38] sm:$0xff] %v445
                %v447 = vld [vmem:[%s429 + $0x40] sm:$0xff]
                %448 = vst [vmem:[%s430 + $0x40] sm:$0xff] %v447
                %v449 = vld [vmem:[%s429 + $0x48] sm:$0xff]
                %450 = vst [vmem:[%s430 + $0x48] sm:$0xff] %v449
                %v451 = vld [vmem:[%s429 + $0x50] sm:$0xff]
                %452 = vst [vmem:[%s430 + $0x50] sm:$0xff] %v451
                %v453 = vld [vmem:[%s429 + $0x58] sm:$0xff]
                %454 = vst [vmem:[%s430 + $0x58] sm:$0xff] %v453
                %v455 = vld [vmem:[%s429 + $0x60] sm:$0xff]
                %456 = vst [vmem:[%s430 + $0x60] sm:$0xff] %v455
                %v457 = vld [vmem:[%s429 + $0x68] sm:$0xff]
                %458 = vst [vmem:[%s430 + $0x68] sm:$0xff] %v457
                %v459 = vld [vmem:[%s429 + $0x70] sm:$0xff]
                %460 = vst [vmem:[%s430 + $0x70] sm:$0xff] %v459
                %v461 = vld [vmem:[%s429 + $0x78] sm:$0xff]
                %462 = vst [vmem:[%s430 + $0x78] sm:$0xff] %v461
                %v463 = vld [vmem:[%s429 + $0x80] sm:$0xff]
                %464 = vst [vmem:[%s430 + $0x80] sm:$0xff] %v463
                %v465 = vld [vmem:[%s429 + $0x88] sm:$0xff]
                %466 = vst [vmem:[%s430 + $0x88] sm:$0xff] %v465
                %v467 = vld [vmem:[%s429 + $0x90] sm:$0xff]
                %468 = vst [vmem:[%s430 + $0x90] sm:$0xff] %v467
                %v469 = vld [vmem:[%s429 + $0x98] sm:$0xff]
                %470 = vst [vmem:[%s430 + $0x98] sm:$0xff] %v469
                %v471 = vld [vmem:[%s429 + $0xa0] sm:$0xff]
                %472 = vst [vmem:[%s430 + $0xa0] sm:$0xff] %v471
                %v473 = vld [vmem:[%s429 + $0xa8] sm:$0xff]
                %474 = vst [vmem:[%s430 + $0xa8] sm:$0xff] %v473
                %v475 = vld [vmem:[%s429 + $0xb0] sm:$0xff]
                %476 = vst [vmem:[%s430 + $0xb0] sm:$0xff] %v475
                %v477 = vld [vmem:[%s429 + $0xb8] sm:$0xff]
                %478 = vst [vmem:[%s430 + $0xb8] sm:$0xff] %v477
                %v479 = vld [vmem:[%s429 + $0xc0] sm:$0xff]
                %480 = vst [vmem:[%s430 + $0xc0] sm:$0xff] %v479
                %v481 = vld [vmem:[%s429 + $0xc8] sm:$0xff]
                %482 = vst [vmem:[%s430 + $0xc8] sm:$0xff] %v481
                %v483 = vld [vmem:[%s429 + $0xd0] sm:$0xff]
                %484 = vst [vmem:[%s430 + $0xd0] sm:$0xff] %v483
                %v485 = vld [vmem:[%s429 + $0xd8] sm:$0xff]
                %486 = vst [vmem:[%s430 + $0xd8] sm:$0xff] %v485
                %v487 = vld [vmem:[%s429 + $0xe0] sm:$0xff]
                %488 = vst [vmem:[%s430 + $0xe0] sm:$0xff] %v487
                %v489 = vld [vmem:[%s429 + $0xe8] sm:$0xff]
                %490 = vst [vmem:[%s430 + $0xe8] sm:$0xff] %v489
                %v491 = vld [vmem:[%s429 + $0xf0] sm:$0xff]
                %492 = vst [vmem:[%s430 + $0xf0] sm:$0xff] %v491
                %v493 = vld [vmem:[%s429 + $0xf8] sm:$0xff]
                %494 = vst [vmem:[%s430 + $0xf8] sm:$0xff] %v493
                %v495 = vld [vmem:[%s429 + $0x100] sm:$0xff]
                %496 = vst [vmem:[%s430 + $0x100] sm:$0xff] %v495
                %v497 = vld [vmem:[%s429 + $0x108] sm:$0xff]
                %498 = vst [vmem:[%s430 + $0x108] sm:$0xff] %v497
                %v499 = vld [vmem:[%s429 + $0x110] sm:$0xff]
                %500 = vst [vmem:[%s430 + $0x110] sm:$0xff] %v499
                %v501 = vld [vmem:[%s429 + $0x118] sm:$0xff]
                %502 = vst [vmem:[%s430 + $0x118] sm:$0xff] %v501
                %v503 = vld [vmem:[%s429 + $0x120] sm:$0xff]
                %504 = vst [vmem:[%s430 + $0x120] sm:$0xff] %v503
                %v505 = vld [vmem:[%s429 + $0x128] sm:$0xff]
                %506 = vst [vmem:[%s430 + $0x128] sm:$0xff] %v505
                %v507 = vld [vmem:[%s429 + $0x130] sm:$0xff]
                %508 = vst [vmem:[%s430 + $0x130] sm:$0xff] %v507
                %v509 = vld [vmem:[%s429 + $0x138] sm:$0xff]
                %510 = vst [vmem:[%s430 + $0x138] sm:$0xff] %v509
                %v511 = vld [vmem:[%s429 + $0x140] sm:$0xff]
                %512 = vst [vmem:[%s430 + $0x140] sm:$0xff] %v511
                %v513 = vld [vmem:[%s429 + $0x148] sm:$0xff]
                %514 = vst [vmem:[%s430 + $0x148] sm:$0xff] %v513
                %v515 = vld [vmem:[%s429 + $0x150] sm:$0xff]
                %516 = vst [vmem:[%s430 + $0x150] sm:$0xff] %v515
                %v517 = vld [vmem:[%s429 + $0x158] sm:$0xff]
                %518 = vst [vmem:[%s430 + $0x158] sm:$0xff] %v517
                %v519 = vld [vmem:[%s429 + $0x160] sm:$0xff]
                %520 = vst [vmem:[%s430 + $0x160] sm:$0xff] %v519
                %v521 = vld [vmem:[%s429 + $0x168] sm:$0xff]
                %522 = vst [vmem:[%s430 + $0x168] sm:$0xff] %v521
                %v523 = vld [vmem:[%s429 + $0x170] sm:$0xff]
                %524 = vst [vmem:[%s430 + $0x170] sm:$0xff] %v523
                %v525 = vld [vmem:[%s429 + $0x178] sm:$0xff]
                %526 = vst [vmem:[%s430 + $0x178] sm:$0xff] %v525
                %v527 = vld [vmem:[%s429 + $0x180] sm:$0xff]
                %528 = vst [vmem:[%s430 + $0x180] sm:$0xff] %v527
                %v529 = vld [vmem:[%s429 + $0x188] sm:$0xff]
                %530 = vst [vmem:[%s430 + $0x188] sm:$0xff] %v529
                %v531 = vld [vmem:[%s429 + $0x190] sm:$0xff]
                %532 = vst [vmem:[%s430 + $0x190] sm:$0xff] %v531
                %v533 = vld [vmem:[%s429 + $0x198] sm:$0xff]
                %534 = vst [vmem:[%s430 + $0x198] sm:$0xff] %v533
                %v535 = vld [vmem:[%s429 + $0x1a0] sm:$0xff]
                %536 = vst [vmem:[%s430 + $0x1a0] sm:$0xff] %v535
                %v537 = vld [vmem:[%s429 + $0x1a8] sm:$0xff]
                %538 = vst [vmem:[%s430 + $0x1a8] sm:$0xff] %v537
                %v539 = vld [vmem:[%s429 + $0x1b0] sm:$0xff]
                %540 = vst [vmem:[%s430 + $0x1b0] sm:$0xff] %v539
                %v541 = vld [vmem:[%s429 + $0x1b8] sm:$0xff]
                %542 = vst [vmem:[%s430 + $0x1b8] sm:$0xff] %v541
                %v543 = vld [vmem:[%s429 + $0x1c0] sm:$0xff]
                %544 = vst [vmem:[%s430 + $0x1c0] sm:$0xff] %v543
                %v545 = vld [vmem:[%s429 + $0x1c8] sm:$0xff]
                %546 = vst [vmem:[%s430 + $0x1c8] sm:$0xff] %v545
                %v547 = vld [vmem:[%s429 + $0x1d0] sm:$0xff]
                %548 = vst [vmem:[%s430 + $0x1d0] sm:$0xff] %v547
                %v549 = vld [vmem:[%s429 + $0x1d8] sm:$0xff]
                %550 = vst [vmem:[%s430 + $0x1d8] sm:$0xff] %v549
                %v551 = vld [vmem:[%s429 + $0x1e0] sm:$0xff]
                %552 = vst [vmem:[%s430 + $0x1e0] sm:$0xff] %v551
                %v553 = vld [vmem:[%s429 + $0x1e8] sm:$0xff]
                %554 = vst [vmem:[%s430 + $0x1e8] sm:$0xff] %v553
                %v555 = vld [vmem:[%s429 + $0x1f0] sm:$0xff]
                %556 = vst [vmem:[%s430 + $0x1f0] sm:$0xff] %v555
                %v557 = vld [vmem:[%s429 + $0x1f8] sm:$0xff]
                %558 = vst [vmem:[%s430 + $0x1f8] sm:$0xff] %v557
              $region144: #{lstm_rnn_forward.1} parent=138 // loop_footer
                %s428 = sadd.s32 1, %s424
              $region145: #{lstm_rnn_forward.1} parent=138 // loop_footer_branch
                %423 = sbr.rel target = $region141
              $region146: #{lstm_rnn_forward.1} parent=138 // loop_exit
                _
            $region139: #{lstm_rnn_forward.1} parent=123 // pred_fallthru
              _
            %p559 = pneg %p419
            // Predicated region
            $region147: #{lstm_rnn_forward.1} parent=123 // pred_check
              _
            $region148: #{lstm_rnn_forward.1} parent=123 // pred_check_branch
              %561 = sbr.rel (%p419) target = $region150
            $region149: #{lstm_rnn_forward.1} parent=123 // pred_region
              %s562 = sand.u32 512, 7
            $region150: #{lstm_rnn_forward.1} parent=123 // pred_fallthru
              _
          $region124: #{lstm_rnn_forward.1} parent=119 // pred_fallthru
            _
          // Predicated region
          $region125: #{lstm_rnn_forward.1} parent=119 // pred_check
            %p403 = pneg %p399
          $region126: #{lstm_rnn_forward.1} parent=119 // pred_check_branch
            %405 = sbr.rel (%p403) target = $region128
          $region127: #{lstm_rnn_forward.1} parent=119 // pred_region
            %s406 = sshll.u32 1, 512
            %s407 = ssub.s32 %s406, 1
            loop: start=0, step=1, limit=1
            $region129: #{lstm_rnn_forward.1} parent=127 // loop_pre_header
              _
            $region130: #{lstm_rnn_forward.1} parent=127 // loop_header
              %s409 = sphi 0, %s413
              %p410 = scmp.ge.s32.totalorder %s409, 1
              %s414 = sphi %s2, %s2
              %s415 = sphi [#allocation5], [#allocation5]
            $region131: #{lstm_rnn_forward.1} parent=127 // loop_header_branch
              %412 = sbr.rel (%p410) target = $region135
            $region132: #{lstm_rnn_forward.1} parent=127 // loop_body
              %v416 = vld [vmem:[%s414] sm:%s407]
              %417 = vst [vmem:[%s415] sm:%s407] %v416
            $region133: #{lstm_rnn_forward.1} parent=127 // loop_footer
              %s413 = sadd.s32 1, %s409
            $region134: #{lstm_rnn_forward.1} parent=127 // loop_footer_branch
              %408 = sbr.rel target = $region130
            $region135: #{lstm_rnn_forward.1} parent=127 // loop_exit
              _
          $region128: #{lstm_rnn_forward.1} parent=119 // pred_fallthru
            _
          // Predicated region
          $region151: #{lstm_rnn_forward.1} parent=119 // pred_check
            _
          $region152: #{lstm_rnn_forward.1} parent=119 // pred_check_branch
            %565 = sbr.rel (0) target = $region154
          $region153: #{lstm_rnn_forward.1} parent=119 // pred_region
            %566 = vsyncadd [#allocation7], 8192
          $region154: #{lstm_rnn_forward.1} parent=119 // pred_fallthru
            _
          %s567 = scalar_lea.sflag [#allocation7], 1
          %p569 = scmp.lt.u32.totalorder 512, 8
          %p570 = pneg %p569
          // Predicated region
          $region155: #{lstm_rnn_forward.1} parent=119 // pred_check
            _
          $region156: #{lstm_rnn_forward.1} parent=119 // pred_check_branch
            %572 = sbr.rel (%p569) target = $region158
          $region157: #{lstm_rnn_forward.1} parent=119 // pred_region
            %s588 = sand.u32 512, 7
            %p589 = scmp.eq.s32.totalorder %s588, 0
            // Predicated region
            $region170: #{lstm_rnn_forward.1} parent=157 // pred_check
              %p590 = pneg %p589
            $region171: #{lstm_rnn_forward.1} parent=157 // pred_check_branch
              %592 = sbr.rel (%p590) target = $region173
            $region172: #{lstm_rnn_forward.1} parent=157 // pred_region
              loop: start=0, step=1, limit=1
              $region174: #{lstm_rnn_forward.1} parent=172 // loop_pre_header
                _
              $region175: #{lstm_rnn_forward.1} parent=172 // loop_header
                %s594 = sphi 0, %s598
                %p595 = scmp.ge.s32.totalorder %s594, 1
                %s599 = sphi %s3, %s3
                %s600 = sphi [#allocation6], [#allocation6]
              $region176: #{lstm_rnn_forward.1} parent=172 // loop_header_branch
                %597 = sbr.rel (%p595) target = $region180
              $region177: #{lstm_rnn_forward.1} parent=172 // loop_body
                %v601 = vld [vmem:[%s599] sm:$0xff]
                %602 = vst [vmem:[%s600] sm:$0xff] %v601
                %v603 = vld [vmem:[%s599 + $0x8] sm:$0xff]
                %604 = vst [vmem:[%s600 + $0x8] sm:$0xff] %v603
                %v605 = vld [vmem:[%s599 + $0x10] sm:$0xff]
                %606 = vst [vmem:[%s600 + $0x10] sm:$0xff] %v605
                %v607 = vld [vmem:[%s599 + $0x18] sm:$0xff]
                %608 = vst [vmem:[%s600 + $0x18] sm:$0xff] %v607
                %v609 = vld [vmem:[%s599 + $0x20] sm:$0xff]
                %610 = vst [vmem:[%s600 + $0x20] sm:$0xff] %v609
                %v611 = vld [vmem:[%s599 + $0x28] sm:$0xff]
                %612 = vst [vmem:[%s600 + $0x28] sm:$0xff] %v611
                %v613 = vld [vmem:[%s599 + $0x30] sm:$0xff]
                %614 = vst [vmem:[%s600 + $0x30] sm:$0xff] %v613
                %v615 = vld [vmem:[%s599 + $0x38] sm:$0xff]
                %616 = vst [vmem:[%s600 + $0x38] sm:$0xff] %v615
                %v617 = vld [vmem:[%s599 + $0x40] sm:$0xff]
                %618 = vst [vmem:[%s600 + $0x40] sm:$0xff] %v617
                %v619 = vld [vmem:[%s599 + $0x48] sm:$0xff]
                %620 = vst [vmem:[%s600 + $0x48] sm:$0xff] %v619
                %v621 = vld [vmem:[%s599 + $0x50] sm:$0xff]
                %622 = vst [vmem:[%s600 + $0x50] sm:$0xff] %v621
                %v623 = vld [vmem:[%s599 + $0x58] sm:$0xff]
                %624 = vst [vmem:[%s600 + $0x58] sm:$0xff] %v623
                %v625 = vld [vmem:[%s599 + $0x60] sm:$0xff]
                %626 = vst [vmem:[%s600 + $0x60] sm:$0xff] %v625
                %v627 = vld [vmem:[%s599 + $0x68] sm:$0xff]
                %628 = vst [vmem:[%s600 + $0x68] sm:$0xff] %v627
                %v629 = vld [vmem:[%s599 + $0x70] sm:$0xff]
                %630 = vst [vmem:[%s600 + $0x70] sm:$0xff] %v629
                %v631 = vld [vmem:[%s599 + $0x78] sm:$0xff]
                %632 = vst [vmem:[%s600 + $0x78] sm:$0xff] %v631
                %v633 = vld [vmem:[%s599 + $0x80] sm:$0xff]
                %634 = vst [vmem:[%s600 + $0x80] sm:$0xff] %v633
                %v635 = vld [vmem:[%s599 + $0x88] sm:$0xff]
                %636 = vst [vmem:[%s600 + $0x88] sm:$0xff] %v635
                %v637 = vld [vmem:[%s599 + $0x90] sm:$0xff]
                %638 = vst [vmem:[%s600 + $0x90] sm:$0xff] %v637
                %v639 = vld [vmem:[%s599 + $0x98] sm:$0xff]
                %640 = vst [vmem:[%s600 + $0x98] sm:$0xff] %v639
                %v641 = vld [vmem:[%s599 + $0xa0] sm:$0xff]
                %642 = vst [vmem:[%s600 + $0xa0] sm:$0xff] %v641
                %v643 = vld [vmem:[%s599 + $0xa8] sm:$0xff]
                %644 = vst [vmem:[%s600 + $0xa8] sm:$0xff] %v643
                %v645 = vld [vmem:[%s599 + $0xb0] sm:$0xff]
                %646 = vst [vmem:[%s600 + $0xb0] sm:$0xff] %v645
                %v647 = vld [vmem:[%s599 + $0xb8] sm:$0xff]
                %648 = vst [vmem:[%s600 + $0xb8] sm:$0xff] %v647
                %v649 = vld [vmem:[%s599 + $0xc0] sm:$0xff]
                %650 = vst [vmem:[%s600 + $0xc0] sm:$0xff] %v649
                %v651 = vld [vmem:[%s599 + $0xc8] sm:$0xff]
                %652 = vst [vmem:[%s600 + $0xc8] sm:$0xff] %v651
                %v653 = vld [vmem:[%s599 + $0xd0] sm:$0xff]
                %654 = vst [vmem:[%s600 + $0xd0] sm:$0xff] %v653
                %v655 = vld [vmem:[%s599 + $0xd8] sm:$0xff]
                %656 = vst [vmem:[%s600 + $0xd8] sm:$0xff] %v655
                %v657 = vld [vmem:[%s599 + $0xe0] sm:$0xff]
                %658 = vst [vmem:[%s600 + $0xe0] sm:$0xff] %v657
                %v659 = vld [vmem:[%s599 + $0xe8] sm:$0xff]
                %660 = vst [vmem:[%s600 + $0xe8] sm:$0xff] %v659
                %v661 = vld [vmem:[%s599 + $0xf0] sm:$0xff]
                %662 = vst [vmem:[%s600 + $0xf0] sm:$0xff] %v661
                %v663 = vld [vmem:[%s599 + $0xf8] sm:$0xff]
                %664 = vst [vmem:[%s600 + $0xf8] sm:$0xff] %v663
                %v665 = vld [vmem:[%s599 + $0x100] sm:$0xff]
                %666 = vst [vmem:[%s600 + $0x100] sm:$0xff] %v665
                %v667 = vld [vmem:[%s599 + $0x108] sm:$0xff]
                %668 = vst [vmem:[%s600 + $0x108] sm:$0xff] %v667
                %v669 = vld [vmem:[%s599 + $0x110] sm:$0xff]
                %670 = vst [vmem:[%s600 + $0x110] sm:$0xff] %v669
                %v671 = vld [vmem:[%s599 + $0x118] sm:$0xff]
                %672 = vst [vmem:[%s600 + $0x118] sm:$0xff] %v671
                %v673 = vld [vmem:[%s599 + $0x120] sm:$0xff]
                %674 = vst [vmem:[%s600 + $0x120] sm:$0xff] %v673
                %v675 = vld [vmem:[%s599 + $0x128] sm:$0xff]
                %676 = vst [vmem:[%s600 + $0x128] sm:$0xff] %v675
                %v677 = vld [vmem:[%s599 + $0x130] sm:$0xff]
                %678 = vst [vmem:[%s600 + $0x130] sm:$0xff] %v677
                %v679 = vld [vmem:[%s599 + $0x138] sm:$0xff]
                %680 = vst [vmem:[%s600 + $0x138] sm:$0xff] %v679
                %v681 = vld [vmem:[%s599 + $0x140] sm:$0xff]
                %682 = vst [vmem:[%s600 + $0x140] sm:$0xff] %v681
                %v683 = vld [vmem:[%s599 + $0x148] sm:$0xff]
                %684 = vst [vmem:[%s600 + $0x148] sm:$0xff] %v683
                %v685 = vld [vmem:[%s599 + $0x150] sm:$0xff]
                %686 = vst [vmem:[%s600 + $0x150] sm:$0xff] %v685
                %v687 = vld [vmem:[%s599 + $0x158] sm:$0xff]
                %688 = vst [vmem:[%s600 + $0x158] sm:$0xff] %v687
                %v689 = vld [vmem:[%s599 + $0x160] sm:$0xff]
                %690 = vst [vmem:[%s600 + $0x160] sm:$0xff] %v689
                %v691 = vld [vmem:[%s599 + $0x168] sm:$0xff]
                %692 = vst [vmem:[%s600 + $0x168] sm:$0xff] %v691
                %v693 = vld [vmem:[%s599 + $0x170] sm:$0xff]
                %694 = vst [vmem:[%s600 + $0x170] sm:$0xff] %v693
                %v695 = vld [vmem:[%s599 + $0x178] sm:$0xff]
                %696 = vst [vmem:[%s600 + $0x178] sm:$0xff] %v695
                %v697 = vld [vmem:[%s599 + $0x180] sm:$0xff]
                %698 = vst [vmem:[%s600 + $0x180] sm:$0xff] %v697
                %v699 = vld [vmem:[%s599 + $0x188] sm:$0xff]
                %700 = vst [vmem:[%s600 + $0x188] sm:$0xff] %v699
                %v701 = vld [vmem:[%s599 + $0x190] sm:$0xff]
                %702 = vst [vmem:[%s600 + $0x190] sm:$0xff] %v701
                %v703 = vld [vmem:[%s599 + $0x198] sm:$0xff]
                %704 = vst [vmem:[%s600 + $0x198] sm:$0xff] %v703
                %v705 = vld [vmem:[%s599 + $0x1a0] sm:$0xff]
                %706 = vst [vmem:[%s600 + $0x1a0] sm:$0xff] %v705
                %v707 = vld [vmem:[%s599 + $0x1a8] sm:$0xff]
                %708 = vst [vmem:[%s600 + $0x1a8] sm:$0xff] %v707
                %v709 = vld [vmem:[%s599 + $0x1b0] sm:$0xff]
                %710 = vst [vmem:[%s600 + $0x1b0] sm:$0xff] %v709
                %v711 = vld [vmem:[%s599 + $0x1b8] sm:$0xff]
                %712 = vst [vmem:[%s600 + $0x1b8] sm:$0xff] %v711
                %v713 = vld [vmem:[%s599 + $0x1c0] sm:$0xff]
                %714 = vst [vmem:[%s600 + $0x1c0] sm:$0xff] %v713
                %v715 = vld [vmem:[%s599 + $0x1c8] sm:$0xff]
                %716 = vst [vmem:[%s600 + $0x1c8] sm:$0xff] %v715
                %v717 = vld [vmem:[%s599 + $0x1d0] sm:$0xff]
                %718 = vst [vmem:[%s600 + $0x1d0] sm:$0xff] %v717
                %v719 = vld [vmem:[%s599 + $0x1d8] sm:$0xff]
                %720 = vst [vmem:[%s600 + $0x1d8] sm:$0xff] %v719
                %v721 = vld [vmem:[%s599 + $0x1e0] sm:$0xff]
                %722 = vst [vmem:[%s600 + $0x1e0] sm:$0xff] %v721
                %v723 = vld [vmem:[%s599 + $0x1e8] sm:$0xff]
                %724 = vst [vmem:[%s600 + $0x1e8] sm:$0xff] %v723
                %v725 = vld [vmem:[%s599 + $0x1f0] sm:$0xff]
                %726 = vst [vmem:[%s600 + $0x1f0] sm:$0xff] %v725
                %v727 = vld [vmem:[%s599 + $0x1f8] sm:$0xff]
                %728 = vst [vmem:[%s600 + $0x1f8] sm:$0xff] %v727
              $region178: #{lstm_rnn_forward.1} parent=172 // loop_footer
                %s598 = sadd.s32 1, %s594
              $region179: #{lstm_rnn_forward.1} parent=172 // loop_footer_branch
                %593 = sbr.rel target = $region175
              $region180: #{lstm_rnn_forward.1} parent=172 // loop_exit
                _
            $region173: #{lstm_rnn_forward.1} parent=157 // pred_fallthru
              _
            %p729 = pneg %p589
            // Predicated region
            $region181: #{lstm_rnn_forward.1} parent=157 // pred_check
              _
            $region182: #{lstm_rnn_forward.1} parent=157 // pred_check_branch
              %731 = sbr.rel (%p589) target = $region184
            $region183: #{lstm_rnn_forward.1} parent=157 // pred_region
              %s732 = sand.u32 512, 7
            $region184: #{lstm_rnn_forward.1} parent=157 // pred_fallthru
              _
          $region158: #{lstm_rnn_forward.1} parent=119 // pred_fallthru
            _
          // Predicated region
          $region159: #{lstm_rnn_forward.1} parent=119 // pred_check
            %p573 = pneg %p569
          $region160: #{lstm_rnn_forward.1} parent=119 // pred_check_branch
            %575 = sbr.rel (%p573) target = $region162
          $region161: #{lstm_rnn_forward.1} parent=119 // pred_region
            %s576 = sshll.u32 1, 512
            %s577 = ssub.s32 %s576, 1
            loop: start=0, step=1, limit=1
            $region163: #{lstm_rnn_forward.1} parent=161 // loop_pre_header
              _
            $region164: #{lstm_rnn_forward.1} parent=161 // loop_header
              %s579 = sphi 0, %s583
              %p580 = scmp.ge.s32.totalorder %s579, 1
              %s584 = sphi %s3, %s3
              %s585 = sphi [#allocation6], [#allocation6]
            $region165: #{lstm_rnn_forward.1} parent=161 // loop_header_branch
              %582 = sbr.rel (%p580) target = $region169
            $region166: #{lstm_rnn_forward.1} parent=161 // loop_body
              %v586 = vld [vmem:[%s584] sm:%s577]
              %587 = vst [vmem:[%s585] sm:%s577] %v586
            $region167: #{lstm_rnn_forward.1} parent=161 // loop_footer
              %s583 = sadd.s32 1, %s579
            $region168: #{lstm_rnn_forward.1} parent=161 // loop_footer_branch
              %578 = sbr.rel target = $region164
            $region169: #{lstm_rnn_forward.1} parent=161 // loop_exit
              _
          $region162: #{lstm_rnn_forward.1} parent=119 // pred_fallthru
            _
          // Predicated region
          $region185: #{lstm_rnn_forward.1} parent=119 // pred_check
            _
          $region186: #{lstm_rnn_forward.1} parent=119 // pred_check_branch
            %735 = sbr.rel (0) target = $region188
          $region187: #{lstm_rnn_forward.1} parent=119 // pred_region
            %736 = vsyncadd %s567, 8192
          $region188: #{lstm_rnn_forward.1} parent=119 // pred_fallthru
            _
          %v737 = vld [vmem:[%s5] sm:$0x1]
          %v739 = vlaneseq
          %v740 = vshrl.u32 %v739, 7
          %v741 = vsub.s32 0, %v740
          %v742 = vrot.slane %v737, %v741
          %744 = vst [vmem:[#allocation3] sm:$0xff] %v742
          %v745 = vld [vmem:[%s6] sm:$0x1]
          %v747 = vlaneseq
          %v748 = vshrl.u32 %v747, 7
          %v749 = vsub.s32 0, %v748
          %v750 = vrot.slane %v745, %v749
          %752 = vst [vmem:[#allocation4] sm:$0xff] %v750
          %s753 = smul.u32 8, 16
          %s754 = smul.u32 %s753, 4
          %s755 = sshll.u32 %s754, 4
          %756 = dma.done [#allocation7], %s755
          %s757 = sshll.u32 %s754, 4
          %758 = dma.done %s567, %s757
        $region120: #{lstm_rnn_forward.1} parent=107 // pred_fallthru
          _
        %v759 = vld [vmem:[%s356] sm:$0xff]
        %v760 = vld [vmem:[%s356 + $0x8] sm:$0xff]
        %v761 = vld [vmem:[%s356 + $0x10] sm:$0xff]
        %v762 = vld [vmem:[%s356 + $0x18] sm:$0xff]
        %v763 = vld [vmem:[%s356 + $0x20] sm:$0xff]
        %v764 = vld [vmem:[%s356 + $0x28] sm:$0xff]
        %v765 = vld [vmem:[%s356 + $0x30] sm:$0xff]
        %v766 = vld [vmem:[%s356 + $0x38] sm:$0xff]
        %v767 = vld [vmem:[#allocation5] sm:$0xff]
        %v768 = vld [vmem:[#allocation5 + $0x8] sm:$0xff]
        %v769 = vld [vmem:[#allocation5 + $0x10] sm:$0xff]
        %v770 = vld [vmem:[#allocation5 + $0x18] sm:$0xff]
        %v771 = vld [vmem:[#allocation5 + $0x20] sm:$0xff]
        %v772 = vld [vmem:[#allocation5 + $0x28] sm:$0xff]
        %v773 = vld [vmem:[#allocation5 + $0x30] sm:$0xff]
        %v774 = vld [vmem:[#allocation5 + $0x38] sm:$0xff]
        %v775 = vld [vmem:[#allocation5 + $0x40] sm:$0xff]
        %v776 = vld [vmem:[#allocation5 + $0x48] sm:$0xff]
        %v777 = vld [vmem:[#allocation5 + $0x50] sm:$0xff]
        %v778 = vld [vmem:[#allocation5 + $0x58] sm:$0xff]
        %v779 = vld [vmem:[#allocation5 + $0x60] sm:$0xff]
        %v780 = vld [vmem:[#allocation5 + $0x68] sm:$0xff]
        %v781 = vld [vmem:[#allocation5 + $0x70] sm:$0xff]
        %v782 = vld [vmem:[#allocation5 + $0x78] sm:$0xff]
        %v783 = vld [vmem:[#allocation5 + $0x80] sm:$0xff]
        %v784 = vld [vmem:[#allocation5 + $0x88] sm:$0xff]
        %v785 = vld [vmem:[#allocation5 + $0x90] sm:$0xff]
        %v786 = vld [vmem:[#allocation5 + $0x98] sm:$0xff]
        %v787 = vld [vmem:[#allocation5 + $0xa0] sm:$0xff]
        %v788 = vld [vmem:[#allocation5 + $0xa8] sm:$0xff]
        %v789 = vld [vmem:[#allocation5 + $0xb0] sm:$0xff]
        %v790 = vld [vmem:[#allocation5 + $0xb8] sm:$0xff]
        %v791 = vld [vmem:[#allocation5 + $0xc0] sm:$0xff]
        %v792 = vld [vmem:[#allocation5 + $0xc8] sm:$0xff]
        %v793 = vld [vmem:[#allocation5 + $0xd0] sm:$0xff]
        %v794 = vld [vmem:[#allocation5 + $0xd8] sm:$0xff]
        %v795 = vld [vmem:[#allocation5 + $0xe0] sm:$0xff]
        %v796 = vld [vmem:[#allocation5 + $0xe8] sm:$0xff]
        %v797 = vld [vmem:[#allocation5 + $0xf0] sm:$0xff]
        %v798 = vld [vmem:[#allocation5 + $0xf8] sm:$0xff]
        %v799 = vld [vmem:[#allocation5 + $0x100] sm:$0xff]
        %v800 = vld [vmem:[#allocation5 + $0x108] sm:$0xff]
        %v801 = vld [vmem:[#allocation5 + $0x110] sm:$0xff]
        %v802 = vld [vmem:[#allocation5 + $0x118] sm:$0xff]
        %v803 = vld [vmem:[#allocation5 + $0x120] sm:$0xff]
        %v804 = vld [vmem:[#allocation5 + $0x128] sm:$0xff]
        %v805 = vld [vmem:[#allocation5 + $0x130] sm:$0xff]
        %v806 = vld [vmem:[#allocation5 + $0x138] sm:$0xff]
        %v807 = vld [vmem:[#allocation5 + $0x140] sm:$0xff]
        %v808 = vld [vmem:[#allocation5 + $0x148] sm:$0xff]
        %v809 = vld [vmem:[#allocation5 + $0x150] sm:$0xff]
        %v810 = vld [vmem:[#allocation5 + $0x158] sm:$0xff]
        %v811 = vld [vmem:[#allocation5 + $0x160] sm:$0xff]
        %v812 = vld [vmem:[#allocation5 + $0x168] sm:$0xff]
        %v813 = vld [vmem:[#allocation5 + $0x170] sm:$0xff]
        %v814 = vld [vmem:[#allocation5 + $0x178] sm:$0xff]
        %v815 = vld [vmem:[#allocation5 + $0x180] sm:$0xff]
        %v816 = vld [vmem:[#allocation5 + $0x188] sm:$0xff]
        %v817 = vld [vmem:[#allocation5 + $0x190] sm:$0xff]
        %v818 = vld [vmem:[#allocation5 + $0x198] sm:$0xff]
        %v819 = vld [vmem:[#allocation5 + $0x1a0] sm:$0xff]
        %v820 = vld [vmem:[#allocation5 + $0x1a8] sm:$0xff]
        %v821 = vld [vmem:[#allocation5 + $0x1b0] sm:$0xff]
        %v822 = vld [vmem:[#allocation5 + $0x1b8] sm:$0xff]
        %v823 = vld [vmem:[#allocation5 + $0x1c0] sm:$0xff]
        %v824 = vld [vmem:[#allocation5 + $0x1c8] sm:$0xff]
        %v825 = vld [vmem:[#allocation5 + $0x1d0] sm:$0xff]
        %v826 = vld [vmem:[#allocation5 + $0x1d8] sm:$0xff]
        %v827 = vld [vmem:[#allocation5 + $0x1e0] sm:$0xff]
        %v828 = vld [vmem:[#allocation5 + $0x1e8] sm:$0xff]
        %v829 = vld [vmem:[#allocation5 + $0x1f0] sm:$0xff]
        %v830 = vld [vmem:[#allocation5 + $0x1f8] sm:$0xff]
        %v831 = vld [vmem:[%s4] sm:$0xf]
        %v833 = vlaneseq
        %v834 = vshrl.u32 %v833, 7
        %v835 = vsub.s32 0, %v834
        %v836 = vrot.slane %v831, %v835
        %v837 = vlaneseq
        %v838 = vshrl.u32 %v837, 7
        %v839 = vsub.s32 1, %v838
        %v840 = vrot.slane %v831, %v839
        %v841 = vlaneseq
        %v842 = vshrl.u32 %v841, 7
        %v843 = vsub.s32 2, %v842
        %v844 = vrot.slane %v831, %v843
        %v845 = vlaneseq
        %v846 = vshrl.u32 %v845, 7
        %v847 = vsub.s32 3, %v846
        %v848 = vrot.slane %v831, %v847
        %853 = vmatprep.subr.mxu0 %v828
        %854 = vmatpush1.msra.mxu0 %v827
        %855 = vmatprep.subr.mxu0 %v824
        %856 = vmatpush1.msra.mxu0 %v823
        %857 = vmatprep.subr.mxu0 %v820
        %858 = vmatpush1.msra.mxu0 %v819
        %859 = vmatprep.subr.mxu0 %v816
        %860 = vmatpush1.msra.mxu0 %v815
        %861 = vmatprep.subr.mxu0 %v812
        %862 = vmatpush1.msra.mxu0 %v811
        %863 = vmatprep.subr.mxu0 %v808
        %864 = vmatpush1.msra.mxu0 %v807
        %865 = vmatprep.subr.mxu0 %v804
        %866 = vmatpush1.msra.mxu0 %v803
        %867 = vmatprep.subr.mxu0 %v800
        %868 = vmatpush1.msra.mxu0 %v799
        %869 = vmatprep.subr.mxu0 %v796
        %870 = vmatpush1.msra.mxu0 %v795
        %871 = vmatprep.subr.mxu0 %v792
        %872 = vmatpush1.msra.mxu0 %v791
        %873 = vmatprep.subr.mxu0 %v788
        %874 = vmatpush1.msra.mxu0 %v787
        %875 = vmatprep.subr.mxu0 %v784
        %876 = vmatpush1.msra.mxu0 %v783
        %877 = vmatprep.subr.mxu0 %v780
        %878 = vmatpush1.msra.mxu0 %v779
        %879 = vmatprep.subr.mxu0 %v776
        %880 = vmatpush1.msra.mxu0 %v775
        %881 = vmatprep.subr.mxu0 %v772
        %882 = vmatpush1.msra.mxu0 %v771
        %883 = vmatprep.subr.mxu0 %v768
        %884 = vmatpush1.msra.mxu0 %v767
        %885 = vmatprep.subr.mxu0 0.0
        %886 = vmatpush2.msra.mxu0 0.0
        %887 = vmatprep.subr.mxu0 0.0
        %888 = vmatpush2.msra.mxu0 0.0
        %889 = vmatprep.subr.mxu0 0.0
        %890 = vmatpush2.msra.mxu0 0.0
        %891 = vmatprep.subr.mxu0 0.0
        %892 = vmatpush2.msra.mxu0 0.0
        %893 = vmatprep.subr.mxu0 0.0
        %894 = vmatpush2.msra.mxu0 0.0
        %895 = vmatprep.subr.mxu0 0.0
        %896 = vmatpush2.msra.mxu0 0.0
        %897 = vmatprep.subr.mxu0 0.0
        %898 = vmatpush2.msra.mxu0 0.0
        %899 = vmatprep.subr.mxu0 0.0
        %900 = vmatpush2.msra.mxu0 0.0
        %901 = vmatprep.subr.mxu0 0.0
        %902 = vmatpush2.msra.mxu0 0.0
        %903 = vmatprep.subr.mxu0 0.0
        %904 = vmatpush2.msra.mxu0 0.0
        %905 = vmatprep.subr.mxu0 0.0
        %906 = vmatpush2.msra.mxu0 0.0
        %907 = vmatprep.subr.mxu0 0.0
        %908 = vmatpush2.msra.mxu0 0.0
        %909 = vmatprep.subr.mxu0 0.0
        %910 = vmatpush2.msra.mxu0 0.0
        %911 = vmatprep.subr.mxu0 0.0
        %912 = vmatpush2.msra.mxu0 0.0
        %913 = vmatprep.subr.mxu0 0.0
        %914 = vmatpush2.msra.mxu0 0.0
        %915 = vmatprep.subr.mxu0 0.0
        %916 = vmatpush2.msra.mxu0 0.0
        %917 = vmatprep.mubr.f32.mxu0 0.0
        %918 = vmatmul.mubr.f32.gmra.mxu0 %v759
        %v919 = vpop.f32.mrf.mxu0
        %v920 = vadd.f32 %v836, %v919
        %v921 = vpop.f32.mrf.mxu0
        %v922 = vadd.f32 %v840, %v921
        %923 = vmatprep.mubr.f32.mxu0 0.0
        %924 = vmatmul.mubr.f32.gmra.mxu0 %v760
        %v925 = vpop.f32.mrf.mxu0
        %v926 = vadd.f32 %v836, %v925
        %v927 = vpop.f32.mrf.mxu0
        %v928 = vadd.f32 %v840, %v927
        %929 = vmatprep.mubr.f32.mxu0 0.0
        %930 = vmatmul.mubr.f32.gmra.mxu0 %v761
        %v931 = vpop.f32.mrf.mxu0
        %v932 = vadd.f32 %v836, %v931
        %v933 = vpop.f32.mrf.mxu0
        %v934 = vadd.f32 %v840, %v933
        %935 = vmatprep.mubr.f32.mxu0 0.0
        %936 = vmatmul.mubr.f32.gmra.mxu0 %v762
        %v937 = vpop.f32.mrf.mxu0
        %v938 = vadd.f32 %v836, %v937
        %v939 = vpop.f32.mrf.mxu0
        %v940 = vadd.f32 %v840, %v939
        %941 = vmatprep.mubr.f32.mxu0 0.0
        %942 = vmatmul.mubr.f32.gmra.mxu0 %v763
        %v943 = vpop.f32.mrf.mxu0
        %v944 = vadd.f32 %v836, %v943
        %v945 = vpop.f32.mrf.mxu0
        %v946 = vadd.f32 %v840, %v945
        %947 = vmatprep.mubr.f32.mxu0 0.0
        %948 = vmatmul.mubr.f32.gmra.mxu0 %v764
        %v949 = vpop.f32.mrf.mxu0
        %v950 = vadd.f32 %v836, %v949
        %v951 = vpop.f32.mrf.mxu0
        %v952 = vadd.f32 %v840, %v951
        %953 = vmatprep.mubr.f32.mxu0 0.0
        %954 = vmatmul.mubr.f32.gmra.mxu0 %v765
        %v955 = vpop.f32.mrf.mxu0
        %v956 = vadd.f32 %v836, %v955
        %v957 = vpop.f32.mrf.mxu0
        %v958 = vadd.f32 %v840, %v957
        %959 = vmatprep.mubr.f32.mxu0 0.0
        %960 = vmatmul.mubr.f32.gmra.mxu0 %v766
        %v961 = vpop.f32.mrf.mxu0
        %v962 = vadd.f32 %v836, %v961
        %v963 = vpop.f32.mrf.mxu0
        %v964 = vadd.f32 %v840, %v963
        %965 = vdwg.mxu0
        %966 = vmatprep.subr.mxu0 %v830
        %967 = vmatpush1.msra.mxu0 %v829
        %968 = vmatprep.subr.mxu0 %v826
        %969 = vmatpush1.msra.mxu0 %v825
        %970 = vmatprep.subr.mxu0 %v822
        %971 = vmatpush1.msra.mxu0 %v821
        %972 = vmatprep.subr.mxu0 %v818
        %973 = vmatpush1.msra.mxu0 %v817
        %974 = vmatprep.subr.mxu0 %v814
        %975 = vmatpush1.msra.mxu0 %v813
        %976 = vmatprep.subr.mxu0 %v810
        %977 = vmatpush1.msra.mxu0 %v809
        %978 = vmatprep.subr.mxu0 %v806
        %979 = vmatpush1.msra.mxu0 %v805
        %980 = vmatprep.subr.mxu0 %v802
        %981 = vmatpush1.msra.mxu0 %v801
        %982 = vmatprep.subr.mxu0 %v798
        %983 = vmatpush1.msra.mxu0 %v797
        %984 = vmatprep.subr.mxu0 %v794
        %985 = vmatpush1.msra.mxu0 %v793
        %986 = vmatprep.subr.mxu0 %v790
        %987 = vmatpush1.msra.mxu0 %v789
        %988 = vmatprep.subr.mxu0 %v786
        %989 = vmatpush1.msra.mxu0 %v785
        %990 = vmatprep.subr.mxu0 %v782
        %991 = vmatpush1.msra.mxu0 %v781
        %992 = vmatprep.subr.mxu0 %v778
        %993 = vmatpush1.msra.mxu0 %v777
        %994 = vmatprep.subr.mxu0 %v774
        %995 = vmatpush1.msra.mxu0 %v773
        %996 = vmatprep.subr.mxu0 %v770
        %997 = vmatpush1.msra.mxu0 %v769
        %998 = vmatprep.subr.mxu0 0.0
        %999 = vmatpush2.msra.mxu0 0.0
        %1000 = vmatprep.subr.mxu0 0.0
        %1001 = vmatpush2.msra.mxu0 0.0
        %1002 = vmatprep.subr.mxu0 0.0
        %1003 = vmatpush2.msra.mxu0 0.0
        %1004 = vmatprep.subr.mxu0 0.0
        %1005 = vmatpush2.msra.mxu0 0.0
        %1006 = vmatprep.subr.mxu0 0.0
        %1007 = vmatpush2.msra.mxu0 0.0
        %1008 = vmatprep.subr.mxu0 0.0
        %1009 = vmatpush2.msra.mxu0 0.0
        %1010 = vmatprep.subr.mxu0 0.0
        %1011 = vmatpush2.msra.mxu0 0.0
        %1012 = vmatprep.subr.mxu0 0.0
        %1013 = vmatpush2.msra.mxu0 0.0
        %1014 = vmatprep.subr.mxu0 0.0
        %1015 = vmatpush2.msra.mxu0 0.0
        %1016 = vmatprep.subr.mxu0 0.0
        %1017 = vmatpush2.msra.mxu0 0.0
        %1018 = vmatprep.subr.mxu0 0.0
        %1019 = vmatpush2.msra.mxu0 0.0
        %1020 = vmatprep.subr.mxu0 0.0
        %1021 = vmatpush2.msra.mxu0 0.0
        %1022 = vmatprep.subr.mxu0 0.0
        %1023 = vmatpush2.msra.mxu0 0.0
        %1024 = vmatprep.subr.mxu0 0.0
        %1025 = vmatpush2.msra.mxu0 0.0
        %1026 = vmatprep.subr.mxu0 0.0
        %1027 = vmatpush2.msra.mxu0 0.0
        %1028 = vmatprep.subr.mxu0 0.0
        %1029 = vmatpush2.msra.mxu0 0.0
        %1030 = vmatprep.mubr.f32.mxu0 0.0
        %1031 = vmatmul.mubr.f32.gmra.mxu0 %v759
        %v1032 = vpop.f32.mrf.mxu0
        %v1033 = vadd.f32 %v844, %v1032
        %v1034 = vpop.f32.mrf.mxu0
        %v1035 = vadd.f32 %v848, %v1034
        %1036 = vmatprep.mubr.f32.mxu0 0.0
        %1037 = vmatmul.mubr.f32.gmra.mxu0 %v760
        %v1038 = vpop.f32.mrf.mxu0
        %v1039 = vadd.f32 %v844, %v1038
        %v1040 = vpop.f32.mrf.mxu0
        %v1041 = vadd.f32 %v848, %v1040
        %1042 = vmatprep.mubr.f32.mxu0 0.0
        %1043 = vmatmul.mubr.f32.gmra.mxu0 %v761
        %v1044 = vpop.f32.mrf.mxu0
        %v1045 = vadd.f32 %v844, %v1044
        %v1046 = vpop.f32.mrf.mxu0
        %v1047 = vadd.f32 %v848, %v1046
        %1048 = vmatprep.mubr.f32.mxu0 0.0
        %1049 = vmatmul.mubr.f32.gmra.mxu0 %v762
        %v1050 = vpop.f32.mrf.mxu0
        %v1051 = vadd.f32 %v844, %v1050
        %v1052 = vpop.f32.mrf.mxu0
        %v1053 = vadd.f32 %v848, %v1052
        %1054 = vmatprep.mubr.f32.mxu0 0.0
        %1055 = vmatmul.mubr.f32.gmra.mxu0 %v763
        %v1056 = vpop.f32.mrf.mxu0
        %v1057 = vadd.f32 %v844, %v1056
        %v1058 = vpop.f32.mrf.mxu0
        %v1059 = vadd.f32 %v848, %v1058
        %1060 = vmatprep.mubr.f32.mxu0 0.0
        %1061 = vmatmul.mubr.f32.gmra.mxu0 %v764
        %v1062 = vpop.f32.mrf.mxu0
        %v1063 = vadd.f32 %v844, %v1062
        %v1064 = vpop.f32.mrf.mxu0
        %v1065 = vadd.f32 %v848, %v1064
        %1066 = vmatprep.mubr.f32.mxu0 0.0
        %1067 = vmatmul.mubr.f32.gmra.mxu0 %v765
        %v1068 = vpop.f32.mrf.mxu0
        %v1069 = vadd.f32 %v844, %v1068
        %v1070 = vpop.f32.mrf.mxu0
        %v1071 = vadd.f32 %v848, %v1070
        %1072 = vmatprep.mubr.f32.mxu0 0.0
        %1073 = vmatmul.mubr.f32.gmra.mxu0 %v766
        %v1074 = vpop.f32.mrf.mxu0
        %v1075 = vadd.f32 %v844, %v1074
        %v1076 = vpop.f32.mrf.mxu0
        %v1077 = vadd.f32 %v848, %v1076
        %1078 = vdwg.mxu0
        %1079 = vst [vmem:[#allocation2] sm:$0xff] %v920
        %1080 = vst [vmem:[#allocation2 + $0x8] sm:$0xff] %v922
        %1081 = vst [vmem:[#allocation2 + $0x10] sm:$0xff] %v1033
        %1082 = vst [vmem:[#allocation2 + $0x18] sm:$0xff] %v1035
        %1083 = vst [vmem:[#allocation2 + $0x20] sm:$0xff] %v926
        %1084 = vst [vmem:[#allocation2 + $0x28] sm:$0xff] %v928
        %1085 = vst [vmem:[#allocation2 + $0x30] sm:$0xff] %v1039
        %1086 = vst [vmem:[#allocation2 + $0x38] sm:$0xff] %v1041
        %1087 = vst [vmem:[#allocation2 + $0x40] sm:$0xff] %v932
        %1088 = vst [vmem:[#allocation2 + $0x48] sm:$0xff] %v934
        %1089 = vst [vmem:[#allocation2 + $0x50] sm:$0xff] %v1045
        %1090 = vst [vmem:[#allocation2 + $0x58] sm:$0xff] %v1047
        %1091 = vst [vmem:[#allocation2 + $0x60] sm:$0xff] %v938
        %1092 = vst [vmem:[#allocation2 + $0x68] sm:$0xff] %v940
        %1093 = vst [vmem:[#allocation2 + $0x70] sm:$0xff] %v1051
        %1094 = vst [vmem:[#allocation2 + $0x78] sm:$0xff] %v1053
        %1095 = vst [vmem:[#allocation2 + $0x80] sm:$0xff] %v944
        %1096 = vst [vmem:[#allocation2 + $0x88] sm:$0xff] %v946
        %1097 = vst [vmem:[#allocation2 + $0x90] sm:$0xff] %v1057
        %1098 = vst [vmem:[#allocation2 + $0x98] sm:$0xff] %v1059
        %1099 = vst [vmem:[#allocation2 + $0xa0] sm:$0xff] %v950
        %1100 = vst [vmem:[#allocation2 + $0xa8] sm:$0xff] %v952
        %1101 = vst [vmem:[#allocation2 + $0xb0] sm:$0xff] %v1063
        %1102 = vst [vmem:[#allocation2 + $0xb8] sm:$0xff] %v1065
        %1103 = vst [vmem:[#allocation2 + $0xc0] sm:$0xff] %v956
        %1104 = vst [vmem:[#allocation2 + $0xc8] sm:$0xff] %v958
        %1105 = vst [vmem:[#allocation2 + $0xd0] sm:$0xff] %v1069
        %1106 = vst [vmem:[#allocation2 + $0xd8] sm:$0xff] %v1071
        %1107 = vst [vmem:[#allocation2 + $0xe0] sm:$0xff] %v962
        %1108 = vst [vmem:[#allocation2 + $0xe8] sm:$0xff] %v964
        %1109 = vst [vmem:[#allocation2 + $0xf0] sm:$0xff] %v1075
        %1110 = vst [vmem:[#allocation2 + $0xf8] sm:$0xff] %v1077
        %v1111 = vld [vmem:[#allocation6] sm:$0xff]
        %v1112 = vld [vmem:[#allocation6 + $0x8] sm:$0xff]
        %v1113 = vld [vmem:[#allocation6 + $0x10] sm:$0xff]
        %v1114 = vld [vmem:[#allocation6 + $0x18] sm:$0xff]
        %v1115 = vld [vmem:[#allocation6 + $0x20] sm:$0xff]
        %v1116 = vld [vmem:[#allocation6 + $0x28] sm:$0xff]
        %v1117 = vld [vmem:[#allocation6 + $0x30] sm:$0xff]
        %v1118 = vld [vmem:[#allocation6 + $0x38] sm:$0xff]
        %v1119 = vld [vmem:[#allocation6 + $0x40] sm:$0xff]
        %v1120 = vld [vmem:[#allocation6 + $0x48] sm:$0xff]
        %v1121 = vld [vmem:[#allocation6 + $0x50] sm:$0xff]
        %v1122 = vld [vmem:[#allocation6 + $0x58] sm:$0xff]
        %v1123 = vld [vmem:[#allocation6 + $0x60] sm:$0xff]
        %v1124 = vld [vmem:[#allocation6 + $0x68] sm:$0xff]
        %v1125 = vld [vmem:[#allocation6 + $0x70] sm:$0xff]
        %v1126 = vld [vmem:[#allocation6 + $0x78] sm:$0xff]
        %v1127 = vld [vmem:[#allocation6 + $0x80] sm:$0xff]
        %v1128 = vld [vmem:[#allocation6 + $0x88] sm:$0xff]
        %v1129 = vld [vmem:[#allocation6 + $0x90] sm:$0xff]
        %v1130 = vld [vmem:[#allocation6 + $0x98] sm:$0xff]
        %v1131 = vld [vmem:[#allocation6 + $0xa0] sm:$0xff]
        %v1132 = vld [vmem:[#allocation6 + $0xa8] sm:$0xff]
        %v1133 = vld [vmem:[#allocation6 + $0xb0] sm:$0xff]
        %v1134 = vld [vmem:[#allocation6 + $0xb8] sm:$0xff]
        %v1135 = vld [vmem:[#allocation6 + $0xc0] sm:$0xff]
        %v1136 = vld [vmem:[#allocation6 + $0xc8] sm:$0xff]
        %v1137 = vld [vmem:[#allocation6 + $0xd0] sm:$0xff]
        %v1138 = vld [vmem:[#allocation6 + $0xd8] sm:$0xff]
        %v1139 = vld [vmem:[#allocation6 + $0xe0] sm:$0xff]
        %v1140 = vld [vmem:[#allocation6 + $0xe8] sm:$0xff]
        %v1141 = vld [vmem:[#allocation6 + $0xf0] sm:$0xff]
        %v1142 = vld [vmem:[#allocation6 + $0xf8] sm:$0xff]
        %v1143 = vld [vmem:[#allocation6 + $0x100] sm:$0xff]
        %v1144 = vld [vmem:[#allocation6 + $0x108] sm:$0xff]
        %v1145 = vld [vmem:[#allocation6 + $0x110] sm:$0xff]
        %v1146 = vld [vmem:[#allocation6 + $0x118] sm:$0xff]
        %v1147 = vld [vmem:[#allocation6 + $0x120] sm:$0xff]
        %v1148 = vld [vmem:[#allocation6 + $0x128] sm:$0xff]
        %v1149 = vld [vmem:[#allocation6 + $0x130] sm:$0xff]
        %v1150 = vld [vmem:[#allocation6 + $0x138] sm:$0xff]
        %v1151 = vld [vmem:[#allocation6 + $0x140] sm:$0xff]
        %v1152 = vld [vmem:[#allocation6 + $0x148] sm:$0xff]
        %v1153 = vld [vmem:[#allocation6 + $0x150] sm:$0xff]
        %v1154 = vld [vmem:[#allocation6 + $0x158] sm:$0xff]
        %v1155 = vld [vmem:[#allocation6 + $0x160] sm:$0xff]
        %v1156 = vld [vmem:[#allocation6 + $0x168] sm:$0xff]
        %v1157 = vld [vmem:[#allocation6 + $0x170] sm:$0xff]
        %v1158 = vld [vmem:[#allocation6 + $0x178] sm:$0xff]
        %v1159 = vld [vmem:[#allocation6 + $0x180] sm:$0xff]
        %v1160 = vld [vmem:[#allocation6 + $0x188] sm:$0xff]
        %v1161 = vld [vmem:[#allocation6 + $0x190] sm:$0xff]
        %v1162 = vld [vmem:[#allocation6 + $0x198] sm:$0xff]
        %v1163 = vld [vmem:[#allocation6 + $0x1a0] sm:$0xff]
        %v1164 = vld [vmem:[#allocation6 + $0x1a8] sm:$0xff]
        %v1165 = vld [vmem:[#allocation6 + $0x1b0] sm:$0xff]
        %v1166 = vld [vmem:[#allocation6 + $0x1b8] sm:$0xff]
        %v1167 = vld [vmem:[#allocation6 + $0x1c0] sm:$0xff]
        %v1168 = vld [vmem:[#allocation6 + $0x1c8] sm:$0xff]
        %v1169 = vld [vmem:[#allocation6 + $0x1d0] sm:$0xff]
        %v1170 = vld [vmem:[#allocation6 + $0x1d8] sm:$0xff]
        %v1171 = vld [vmem:[#allocation6 + $0x1e0] sm:$0xff]
        %v1172 = vld [vmem:[#allocation6 + $0x1e8] sm:$0xff]
        %v1173 = vld [vmem:[#allocation6 + $0x1f0] sm:$0xff]
        %v1174 = vld [vmem:[#allocation6 + $0x1f8] sm:$0xff]
        %v1175 = vld [vmem:[#allocation3] sm:$0xff]
        %v1176 = vld [vmem:[#allocation4] sm:$0xff]
        %v1177 = vld [vmem:[#allocation2] sm:$0xff]
        %v1178 = vld [vmem:[#allocation2 + $0x8] sm:$0xff]
        %v1179 = vld [vmem:[#allocation2 + $0x10] sm:$0xff]
        %v1180 = vld [vmem:[#allocation2 + $0x18] sm:$0xff]
        %1181 = vmatprep.subr.mxu0 %v1172
        %1182 = vmatpush1.msra.mxu0 %v1171
        %1183 = vmatprep.subr.mxu0 %v1168
        %1184 = vmatpush1.msra.mxu0 %v1167
        %1185 = vmatprep.subr.mxu0 %v1164
        %1186 = vmatpush1.msra.mxu0 %v1163
        %1187 = vmatprep.subr.mxu0 %v1160
        %1188 = vmatpush1.msra.mxu0 %v1159
        %1189 = vmatprep.subr.mxu0 %v1156
        %1190 = vmatpush1.msra.mxu0 %v1155
        %1191 = vmatprep.subr.mxu0 %v1152
        %1192 = vmatpush1.msra.mxu0 %v1151
        %1193 = vmatprep.subr.mxu0 %v1148
        %1194 = vmatpush1.msra.mxu0 %v1147
        %1195 = vmatprep.subr.mxu0 %v1144
        %1196 = vmatpush1.msra.mxu0 %v1143
        %1197 = vmatprep.subr.mxu0 %v1140
        %1198 = vmatpush1.msra.mxu0 %v1139
        %1199 = vmatprep.subr.mxu0 %v1136
        %1200 = vmatpush1.msra.mxu0 %v1135
        %1201 = vmatprep.subr.mxu0 %v1132
        %1202 = vmatpush1.msra.mxu0 %v1131
        %1203 = vmatprep.subr.mxu0 %v1128
        %1204 = vmatpush1.msra.mxu0 %v1127
        %1205 = vmatprep.subr.mxu0 %v1124
        %1206 = vmatpush1.msra.mxu0 %v1123
        %1207 = vmatprep.subr.mxu0 %v1120
        %1208 = vmatpush1.msra.mxu0 %v1119
        %1209 = vmatprep.subr.mxu0 %v1116
        %1210 = vmatpush1.msra.mxu0 %v1115
        %1211 = vmatprep.subr.mxu0 %v1112
        %1212 = vmatpush1.msra.mxu0 %v1111
        %1213 = vmatprep.subr.mxu0 0.0
        %1214 = vmatpush2.msra.mxu0 0.0
        %1215 = vmatprep.subr.mxu0 0.0
        %1216 = vmatpush2.msra.mxu0 0.0
        %1217 = vmatprep.subr.mxu0 0.0
        %1218 = vmatpush2.msra.mxu0 0.0
        %1219 = vmatprep.subr.mxu0 0.0
        %1220 = vmatpush2.msra.mxu0 0.0
        %1221 = vmatprep.subr.mxu0 0.0
        %1222 = vmatpush2.msra.mxu0 0.0
        %1223 = vmatprep.subr.mxu0 0.0
        %1224 = vmatpush2.msra.mxu0 0.0
        %1225 = vmatprep.subr.mxu0 0.0
        %1226 = vmatpush2.msra.mxu0 0.0
        %1227 = vmatprep.subr.mxu0 0.0
        %1228 = vmatpush2.msra.mxu0 0.0
        %1229 = vmatprep.subr.mxu0 0.0
        %1230 = vmatpush2.msra.mxu0 0.0
        %1231 = vmatprep.subr.mxu0 0.0
        %1232 = vmatpush2.msra.mxu0 0.0
        %1233 = vmatprep.subr.mxu0 0.0
        %1234 = vmatpush2.msra.mxu0 0.0
        %1235 = vmatprep.subr.mxu0 0.0
        %1236 = vmatpush2.msra.mxu0 0.0
        %1237 = vmatprep.subr.mxu0 0.0
        %1238 = vmatpush2.msra.mxu0 0.0
        %1239 = vmatprep.subr.mxu0 0.0
        %1240 = vmatpush2.msra.mxu0 0.0
        %1241 = vmatprep.subr.mxu0 0.0
        %1242 = vmatpush2.msra.mxu0 0.0
        %1243 = vmatprep.subr.mxu0 0.0
        %1244 = vmatpush2.msra.mxu0 0.0
        %1245 = vmatprep.mubr.f32.mxu0 0.0
        %1246 = vmatmul.mubr.f32.gmra.mxu0 %v1175
        %v1247 = vpop.f32.mrf.mxu0
        %v1248 = vadd.f32 0.0, %v1247
        %v1249 = vpop.f32.mrf.mxu0
        %v1250 = vadd.f32 0.0, %v1249
        %1251 = vdwg.mxu0
        %1252 = vmatprep.subr.mxu0 %v1174
        %1253 = vmatpush1.msra.mxu0 %v1173
        %1254 = vmatprep.subr.mxu0 %v1170
        %1255 = vmatpush1.msra.mxu0 %v1169
        %1256 = vmatprep.subr.mxu0 %v1166
        %1257 = vmatpush1.msra.mxu0 %v1165
        %1258 = vmatprep.subr.mxu0 %v1162
        %1259 = vmatpush1.msra.mxu0 %v1161
        %1260 = vmatprep.subr.mxu0 %v1158
        %1261 = vmatpush1.msra.mxu0 %v1157
        %1262 = vmatprep.subr.mxu0 %v1154
        %1263 = vmatpush1.msra.mxu0 %v1153
        %1264 = vmatprep.subr.mxu0 %v1150
        %1265 = vmatpush1.msra.mxu0 %v1149
        %1266 = vmatprep.subr.mxu0 %v1146
        %1267 = vmatpush1.msra.mxu0 %v1145
        %1268 = vmatprep.subr.mxu0 %v1142
        %1269 = vmatpush1.msra.mxu0 %v1141
        %1270 = vmatprep.subr.mxu0 %v1138
        %1271 = vmatpush1.msra.mxu0 %v1137
        %1272 = vmatprep.subr.mxu0 %v1134
        %1273 = vmatpush1.msra.mxu0 %v1133
        %1274 = vmatprep.subr.mxu0 %v1130
        %1275 = vmatpush1.msra.mxu0 %v1129
        %1276 = vmatprep.subr.mxu0 %v1126
        %1277 = vmatpush1.msra.mxu0 %v1125
        %1278 = vmatprep.subr.mxu0 %v1122
        %1279 = vmatpush1.msra.mxu0 %v1121
        %1280 = vmatprep.subr.mxu0 %v1118
        %1281 = vmatpush1.msra.mxu0 %v1117
        %1282 = vmatprep.subr.mxu0 %v1114
        %1283 = vmatpush1.msra.mxu0 %v1113
        %1284 = vmatprep.subr.mxu0 0.0
        %1285 = vmatpush2.msra.mxu0 0.0
        %1286 = vmatprep.subr.mxu0 0.0
        %1287 = vmatpush2.msra.mxu0 0.0
        %1288 = vmatprep.subr.mxu0 0.0
        %1289 = vmatpush2.msra.mxu0 0.0
        %1290 = vmatprep.subr.mxu0 0.0
        %1291 = vmatpush2.msra.mxu0 0.0
        %1292 = vmatprep.subr.mxu0 0.0
        %1293 = vmatpush2.msra.mxu0 0.0
        %1294 = vmatprep.subr.mxu0 0.0
        %1295 = vmatpush2.msra.mxu0 0.0
        %1296 = vmatprep.subr.mxu0 0.0
        %1297 = vmatpush2.msra.mxu0 0.0
        %1298 = vmatprep.subr.mxu0 0.0
        %1299 = vmatpush2.msra.mxu0 0.0
        %1300 = vmatprep.subr.mxu0 0.0
        %1301 = vmatpush2.msra.mxu0 0.0
        %1302 = vmatprep.subr.mxu0 0.0
        %1303 = vmatpush2.msra.mxu0 0.0
        %1304 = vmatprep.subr.mxu0 0.0
        %1305 = vmatpush2.msra.mxu0 0.0
        %1306 = vmatprep.subr.mxu0 0.0
        %1307 = vmatpush2.msra.mxu0 0.0
        %1308 = vmatprep.subr.mxu0 0.0
        %1309 = vmatpush2.msra.mxu0 0.0
        %1310 = vmatprep.subr.mxu0 0.0
        %1311 = vmatpush2.msra.mxu0 0.0
        %1312 = vmatprep.subr.mxu0 0.0
        %1313 = vmatpush2.msra.mxu0 0.0
        %1314 = vmatprep.subr.mxu0 0.0
        %1315 = vmatpush2.msra.mxu0 0.0
        %1316 = vmatprep.mubr.f32.mxu0 0.0
        %1317 = vmatmul.mubr.f32.gmra.mxu0 %v1175
        %v1318 = vpop.f32.mrf.mxu0
        %v1319 = vadd.f32 0.0, %v1318
        %v1320 = vpop.f32.mrf.mxu0
        %v1321 = vadd.f32 0.0, %v1320
        %1322 = vdwg.mxu0
        %v1323 = vadd.f32 %v1177, %v1248
        %v1324 = vadd.f32 %v1178, %v1250
        %v1325 = vadd.f32 %v1179, %v1319
        %v1326 = vadd.f32 %v1180, %v1321
        %v1327 = vmul.f32 %v1323, 0.5
        %v1328 = vtanh.pop %v1327
        %v1329 = vadd.f32 %v1328, 1.0
        %v1330 = vmul.f32 %v1329, 0.5
        %v1331 = vmul.f32 %v1324, 0.5
        %v1332 = vtanh.pop %v1331
        %v1333 = vadd.f32 %v1332, 1.0
        %v1334 = vmul.f32 %v1333, 0.5
        %v1335 = vtanh.pop %v1325
        %v1336 = vmul.f32 %v1326, 0.5
        %v1337 = vtanh.pop %v1336
        %v1338 = vadd.f32 %v1337, 1.0
        %v1339 = vmul.f32 %v1338, 0.5
        %v1340 = vmul.f32 %v1334, %v1176
        %v1341 = vmul.f32 %v1330, %v1335
        %v1342 = vadd.f32 %v1340, %v1341
        %v1343 = vtanh.pop %v1342
        %v1344 = vmul.f32 %v1339, %v1343
        %v1345 = vld [vmem:[%s363] sm:$0xff]
        %v1346 = vsub.f32 %v1344, %v1175
        %1348 = vset.pattern.permute.xlu0 0
        %1349 = vperm.xlu0 %1348, %v1345
        %v1350 = vpop.permute.xlu0 %1349
        %v1352 = vmul.f32 %v1350, %v1346
        %v1353 = vadd.f32 %v1175, %v1352
        %v1354 = vsub.f32 %v1342, %v1176
        %v1355 = vmul.f32 %v1350, %v1354
        %v1356 = vadd.f32 %v1176, %v1355
        %1357 = vst [vmem:[#allocation3] sm:$0xff] %v1353
        %1358 = vst [vmem:[#allocation4] sm:$0xff] %v1356
        %1359 = vst [vmem:[%s390] sm:$0xff] %v1353
        %v1360 = vld [vmem:[#allocation3] sm:$0xff]
        %v1361 = vld [vmem:[#allocation4] sm:$0xff]
        %s1362 = scalar_lea.vmem [#allocation2], 32
        %v1363 = vld [vmem:[%s1362] sm:$0xff]
        %v1364 = vld [vmem:[%s1362 + $0x8] sm:$0xff]
        %v1365 = vld [vmem:[%s1362 + $0x10] sm:$0xff]
        %v1366 = vld [vmem:[%s1362 + $0x18] sm:$0xff]
        %1367 = vmatprep.subr.mxu0 %v1172
        %1368 = vmatpush1.msra.mxu0 %v1171
        %1369 = vmatprep.subr.mxu0 %v1168
        %1370 = vmatpush1.msra.mxu0 %v1167
        %1371 = vmatprep.subr.mxu0 %v1164
        %1372 = vmatpush1.msra.mxu0 %v1163
        %1373 = vmatprep.subr.mxu0 %v1160
        %1374 = vmatpush1.msra.mxu0 %v1159
        %1375 = vmatprep.subr.mxu0 %v1156
        %1376 = vmatpush1.msra.mxu0 %v1155
        %1377 = vmatprep.subr.mxu0 %v1152
        %1378 = vmatpush1.msra.mxu0 %v1151
        %1379 = vmatprep.subr.mxu0 %v1148
        %1380 = vmatpush1.msra.mxu0 %v1147
        %1381 = vmatprep.subr.mxu0 %v1144
        %1382 = vmatpush1.msra.mxu0 %v1143
        %1383 = vmatprep.subr.mxu0 %v1140
        %1384 = vmatpush1.msra.mxu0 %v1139
        %1385 = vmatprep.subr.mxu0 %v1136
        %1386 = vmatpush1.msra.mxu0 %v1135
        %1387 = vmatprep.subr.mxu0 %v1132
        %1388 = vmatpush1.msra.mxu0 %v1131
        %1389 = vmatprep.subr.mxu0 %v1128
        %1390 = vmatpush1.msra.mxu0 %v1127
        %1391 = vmatprep.subr.mxu0 %v1124
        %1392 = vmatpush1.msra.mxu0 %v1123
        %1393 = vmatprep.subr.mxu0 %v1120
        %1394 = vmatpush1.msra.mxu0 %v1119
        %1395 = vmatprep.subr.mxu0 %v1116
        %1396 = vmatpush1.msra.mxu0 %v1115
        %1397 = vmatprep.subr.mxu0 %v1112
        %1398 = vmatpush1.msra.mxu0 %v1111
        %1399 = vmatprep.subr.mxu0 0.0
        %1400 = vmatpush2.msra.mxu0 0.0
        %1401 = vmatprep.subr.mxu0 0.0
        %1402 = vmatpush2.msra.mxu0 0.0
        %1403 = vmatprep.subr.mxu0 0.0
        %1404 = vmatpush2.msra.mxu0 0.0
        %1405 = vmatprep.subr.mxu0 0.0
        %1406 = vmatpush2.msra.mxu0 0.0
        %1407 = vmatprep.subr.mxu0 0.0
        %1408 = vmatpush2.msra.mxu0 0.0
        %1409 = vmatprep.subr.mxu0 0.0
        %1410 = vmatpush2.msra.mxu0 0.0
        %1411 = vmatprep.subr.mxu0 0.0
        %1412 = vmatpush2.msra.mxu0 0.0
        %1413 = vmatprep.subr.mxu0 0.0
        %1414 = vmatpush2.msra.mxu0 0.0
        %1415 = vmatprep.subr.mxu0 0.0
        %1416 = vmatpush2.msra.mxu0 0.0
        %1417 = vmatprep.subr.mxu0 0.0
        %1418 = vmatpush2.msra.mxu0 0.0
        %1419 = vmatprep.subr.mxu0 0.0
        %1420 = vmatpush2.msra.mxu0 0.0
        %1421 = vmatprep.subr.mxu0 0.0
        %1422 = vmatpush2.msra.mxu0 0.0
        %1423 = vmatprep.subr.mxu0 0.0
        %1424 = vmatpush2.msra.mxu0 0.0
        %1425 = vmatprep.subr.mxu0 0.0
        %1426 = vmatpush2.msra.mxu0 0.0
        %1427 = vmatprep.subr.mxu0 0.0
        %1428 = vmatpush2.msra.mxu0 0.0
        %1429 = vmatprep.subr.mxu0 0.0
        %1430 = vmatpush2.msra.mxu0 0.0
        %1431 = vmatprep.mubr.f32.mxu0 0.0
        %1432 = vmatmul.mubr.f32.gmra.mxu0 %v1360
        %v1433 = vpop.f32.mrf.mxu0
        %v1434 = vadd.f32 0.0, %v1433
        %v1435 = vpop.f32.mrf.mxu0
        %v1436 = vadd.f32 0.0, %v1435
        %1437 = vdwg.mxu0
        %1438 = vmatprep.subr.mxu0 %v1174
        %1439 = vmatpush1.msra.mxu0 %v1173
        %1440 = vmatprep.subr.mxu0 %v1170
        %1441 = vmatpush1.msra.mxu0 %v1169
        %1442 = vmatprep.subr.mxu0 %v1166
        %1443 = vmatpush1.msra.mxu0 %v1165
        %1444 = vmatprep.subr.mxu0 %v1162
        %1445 = vmatpush1.msra.mxu0 %v1161
        %1446 = vmatprep.subr.mxu0 %v1158
        %1447 = vmatpush1.msra.mxu0 %v1157
        %1448 = vmatprep.subr.mxu0 %v1154
        %1449 = vmatpush1.msra.mxu0 %v1153
        %1450 = vmatprep.subr.mxu0 %v1150
        %1451 = vmatpush1.msra.mxu0 %v1149
        %1452 = vmatprep.subr.mxu0 %v1146
        %1453 = vmatpush1.msra.mxu0 %v1145
        %1454 = vmatprep.subr.mxu0 %v1142
        %1455 = vmatpush1.msra.mxu0 %v1141
        %1456 = vmatprep.subr.mxu0 %v1138
        %1457 = vmatpush1.msra.mxu0 %v1137
        %1458 = vmatprep.subr.mxu0 %v1134
        %1459 = vmatpush1.msra.mxu0 %v1133
        %1460 = vmatprep.subr.mxu0 %v1130
        %1461 = vmatpush1.msra.mxu0 %v1129
        %1462 = vmatprep.subr.mxu0 %v1126
        %1463 = vmatpush1.msra.mxu0 %v1125
        %1464 = vmatprep.subr.mxu0 %v1122
        %1465 = vmatpush1.msra.mxu0 %v1121
        %1466 = vmatprep.subr.mxu0 %v1118
        %1467 = vmatpush1.msra.mxu0 %v1117
        %1468 = vmatprep.subr.mxu0 %v1114
        %1469 = vmatpush1.msra.mxu0 %v1113
        %1470 = vmatprep.subr.mxu0 0.0
        %1471 = vmatpush2.msra.mxu0 0.0
        %1472 = vmatprep.subr.mxu0 0.0
        %1473 = vmatpush2.msra.mxu0 0.0
        %1474 = vmatprep.subr.mxu0 0.0
        %1475 = vmatpush2.msra.mxu0 0.0
        %1476 = vmatprep.subr.mxu0 0.0
        %1477 = vmatpush2.msra.mxu0 0.0
        %1478 = vmatprep.subr.mxu0 0.0
        %1479 = vmatpush2.msra.mxu0 0.0
        %1480 = vmatprep.subr.mxu0 0.0
        %1481 = vmatpush2.msra.mxu0 0.0
        %1482 = vmatprep.subr.mxu0 0.0
        %1483 = vmatpush2.msra.mxu0 0.0
        %1484 = vmatprep.subr.mxu0 0.0
        %1485 = vmatpush2.msra.mxu0 0.0
        %1486 = vmatprep.subr.mxu0 0.0
        %1487 = vmatpush2.msra.mxu0 0.0
        %1488 = vmatprep.subr.mxu0 0.0
        %1489 = vmatpush2.msra.mxu0 0.0
        %1490 = vmatprep.subr.mxu0 0.0
        %1491 = vmatpush2.msra.mxu0 0.0
        %1492 = vmatprep.subr.mxu0 0.0
        %1493 = vmatpush2.msra.mxu0 0.0
        %1494 = vmatprep.subr.mxu0 0.0
        %1495 = vmatpush2.msra.mxu0 0.0
        %1496 = vmatprep.subr.mxu0 0.0
        %1497 = vmatpush2.msra.mxu0 0.0
        %1498 = vmatprep.subr.mxu0 0.0
        %1499 = vmatpush2.msra.mxu0 0.0
        %1500 = vmatprep.subr.mxu0 0.0
        %1501 = vmatpush2.msra.mxu0 0.0
        %1502 = vmatprep.mubr.f32.mxu0 0.0
        %1503 = vmatmul.mubr.f32.gmra.mxu0 %v1360
        %v1504 = vpop.f32.mrf.mxu0
        %v1505 = vadd.f32 0.0, %v1504
        %v1506 = vpop.f32.mrf.mxu0
        %v1507 = vadd.f32 0.0, %v1506
        %1508 = vdwg.mxu0
        %v1509 = vadd.f32 %v1363, %v1434
        %v1510 = vadd.f32 %v1364, %v1436
        %v1511 = vadd.f32 %v1365, %v1505
        %v1512 = vadd.f32 %v1366, %v1507
        %v1513 = vmul.f32 %v1509, 0.5
        %v1514 = vtanh.pop %v1513
        %v1515 = vadd.f32 %v1514, 1.0
        %v1516 = vmul.f32 %v1515, 0.5
        %v1517 = vmul.f32 %v1510, 0.5
        %v1518 = vtanh.pop %v1517
        %v1519 = vadd.f32 %v1518, 1.0
        %v1520 = vmul.f32 %v1519, 0.5
        %v1521 = vtanh.pop %v1511
        %v1522 = vmul.f32 %v1512, 0.5
        %v1523 = vtanh.pop %v1522
        %v1524 = vadd.f32 %v1523, 1.0
        %v1525 = vmul.f32 %v1524, 0.5
        %v1526 = vmul.f32 %v1520, %v1361
        %v1527 = vmul.f32 %v1516, %v1521
        %v1528 = vadd.f32 %v1526, %v1527
        %v1529 = vtanh.pop %v1528
        %v1530 = vmul.f32 %v1525, %v1529
        %s1531 = scalar_lea.vmem %s363, 8 [#allocation9]
        %v1532 = vld [vmem:[%s1531] sm:$0xff]
        %v1533 = vsub.f32 %v1530, %v1360
        %1535 = vset.pattern.permute.xlu0 0
        %1536 = vperm.xlu0 %1535, %v1532
        %v1537 = vpop.permute.xlu0 %1536
        %v1539 = vmul.f32 %v1537, %v1533
        %v1540 = vadd.f32 %v1360, %v1539
        %v1541 = vsub.f32 %v1528, %v1361
        %v1542 = vmul.f32 %v1537, %v1541
        %v1543 = vadd.f32 %v1361, %v1542
        %1544 = vst [vmem:[#allocation3] sm:$0xff] %v1540
        %1545 = vst [vmem:[#allocation4] sm:$0xff] %v1543
        %s1546 = scalar_lea.vmem %s390, 8 [#allocation10]
        %1547 = vst [vmem:[%s1546] sm:$0xff] %v1540
        %v1548 = vld [vmem:[#allocation3] sm:$0xff]
        %v1549 = vld [vmem:[#allocation4] sm:$0xff]
        %s1550 = scalar_lea.vmem [#allocation2], 64
        %v1551 = vld [vmem:[%s1550] sm:$0xff]
        %v1552 = vld [vmem:[%s1550 + $0x8] sm:$0xff]
        %v1553 = vld [vmem:[%s1550 + $0x10] sm:$0xff]
        %v1554 = vld [vmem:[%s1550 + $0x18] sm:$0xff]
        %1555 = vmatprep.subr.mxu0 %v1172
        %1556 = vmatpush1.msra.mxu0 %v1171
        %1557 = vmatprep.subr.mxu0 %v1168
        %1558 = vmatpush1.msra.mxu0 %v1167
        %1559 = vmatprep.subr.mxu0 %v1164
        %1560 = vmatpush1.msra.mxu0 %v1163
        %1561 = vmatprep.subr.mxu0 %v1160
        %1562 = vmatpush1.msra.mxu0 %v1159
        %1563 = vmatprep.subr.mxu0 %v1156
        %1564 = vmatpush1.msra.mxu0 %v1155
        %1565 = vmatprep.subr.mxu0 %v1152
        %1566 = vmatpush1.msra.mxu0 %v1151
        %1567 = vmatprep.subr.mxu0 %v1148
        %1568 = vmatpush1.msra.mxu0 %v1147
        %1569 = vmatprep.subr.mxu0 %v1144
        %1570 = vmatpush1.msra.mxu0 %v1143
        %1571 = vmatprep.subr.mxu0 %v1140
        %1572 = vmatpush1.msra.mxu0 %v1139
        %1573 = vmatprep.subr.mxu0 %v1136
        %1574 = vmatpush1.msra.mxu0 %v1135
        %1575 = vmatprep.subr.mxu0 %v1132
        %1576 = vmatpush1.msra.mxu0 %v1131
        %1577 = vmatprep.subr.mxu0 %v1128
        %1578 = vmatpush1.msra.mxu0 %v1127
        %1579 = vmatprep.subr.mxu0 %v1124
        %1580 = vmatpush1.msra.mxu0 %v1123
        %1581 = vmatprep.subr.mxu0 %v1120
        %1582 = vmatpush1.msra.mxu0 %v1119
        %1583 = vmatprep.subr.mxu0 %v1116
        %1584 = vmatpush1.msra.mxu0 %v1115
        %1585 = vmatprep.subr.mxu0 %v1112
        %1586 = vmatpush1.msra.mxu0 %v1111
        %1587 = vmatprep.subr.mxu0 0.0
        %1588 = vmatpush2.msra.mxu0 0.0
        %1589 = vmatprep.subr.mxu0 0.0
        %1590 = vmatpush2.msra.mxu0 0.0
        %1591 = vmatprep.subr.mxu0 0.0
        %1592 = vmatpush2.msra.mxu0 0.0
        %1593 = vmatprep.subr.mxu0 0.0
        %1594 = vmatpush2.msra.mxu0 0.0
        %1595 = vmatprep.subr.mxu0 0.0
        %1596 = vmatpush2.msra.mxu0 0.0
        %1597 = vmatprep.subr.mxu0 0.0
        %1598 = vmatpush2.msra.mxu0 0.0
        %1599 = vmatprep.subr.mxu0 0.0
        %1600 = vmatpush2.msra.mxu0 0.0
        %1601 = vmatprep.subr.mxu0 0.0
        %1602 = vmatpush2.msra.mxu0 0.0
        %1603 = vmatprep.subr.mxu0 0.0
        %1604 = vmatpush2.msra.mxu0 0.0
        %1605 = vmatprep.subr.mxu0 0.0
        %1606 = vmatpush2.msra.mxu0 0.0
        %1607 = vmatprep.subr.mxu0 0.0
        %1608 = vmatpush2.msra.mxu0 0.0
        %1609 = vmatprep.subr.mxu0 0.0
        %1610 = vmatpush2.msra.mxu0 0.0
        %1611 = vmatprep.subr.mxu0 0.0
        %1612 = vmatpush2.msra.mxu0 0.0
        %1613 = vmatprep.subr.mxu0 0.0
        %1614 = vmatpush2.msra.mxu0 0.0
        %1615 = vmatprep.subr.mxu0 0.0
        %1616 = vmatpush2.msra.mxu0 0.0
        %1617 = vmatprep.subr.mxu0 0.0
        %1618 = vmatpush2.msra.mxu0 0.0
        %1619 = vmatprep.mubr.f32.mxu0 0.0
        %1620 = vmatmul.mubr.f32.gmra.mxu0 %v1548
        %v1621 = vpop.f32.mrf.mxu0
        %v1622 = vadd.f32 0.0, %v1621
        %v1623 = vpop.f32.mrf.mxu0
        %v1624 = vadd.f32 0.0, %v1623
        %1625 = vdwg.mxu0
        %1626 = vmatprep.subr.mxu0 %v1174
        %1627 = vmatpush1.msra.mxu0 %v1173
        %1628 = vmatprep.subr.mxu0 %v1170
        %1629 = vmatpush1.msra.mxu0 %v1169
        %1630 = vmatprep.subr.mxu0 %v1166
        %1631 = vmatpush1.msra.mxu0 %v1165
        %1632 = vmatprep.subr.mxu0 %v1162
        %1633 = vmatpush1.msra.mxu0 %v1161
        %1634 = vmatprep.subr.mxu0 %v1158
        %1635 = vmatpush1.msra.mxu0 %v1157
        %1636 = vmatprep.subr.mxu0 %v1154
        %1637 = vmatpush1.msra.mxu0 %v1153
        %1638 = vmatprep.subr.mxu0 %v1150
        %1639 = vmatpush1.msra.mxu0 %v1149
        %1640 = vmatprep.subr.mxu0 %v1146
        %1641 = vmatpush1.msra.mxu0 %v1145
        %1642 = vmatprep.subr.mxu0 %v1142
        %1643 = vmatpush1.msra.mxu0 %v1141
        %1644 = vmatprep.subr.mxu0 %v1138
        %1645 = vmatpush1.msra.mxu0 %v1137
        %1646 = vmatprep.subr.mxu0 %v1134
        %1647 = vmatpush1.msra.mxu0 %v1133
        %1648 = vmatprep.subr.mxu0 %v1130
        %1649 = vmatpush1.msra.mxu0 %v1129
        %1650 = vmatprep.subr.mxu0 %v1126
        %1651 = vmatpush1.msra.mxu0 %v1125
        %1652 = vmatprep.subr.mxu0 %v1122
        %1653 = vmatpush1.msra.mxu0 %v1121
        %1654 = vmatprep.subr.mxu0 %v1118
        %1655 = vmatpush1.msra.mxu0 %v1117
        %1656 = vmatprep.subr.mxu0 %v1114
        %1657 = vmatpush1.msra.mxu0 %v1113
        %1658 = vmatprep.subr.mxu0 0.0
        %1659 = vmatpush2.msra.mxu0 0.0
        %1660 = vmatprep.subr.mxu0 0.0
        %1661 = vmatpush2.msra.mxu0 0.0
        %1662 = vmatprep.subr.mxu0 0.0
        %1663 = vmatpush2.msra.mxu0 0.0
        %1664 = vmatprep.subr.mxu0 0.0
        %1665 = vmatpush2.msra.mxu0 0.0
        %1666 = vmatprep.subr.mxu0 0.0
        %1667 = vmatpush2.msra.mxu0 0.0
        %1668 = vmatprep.subr.mxu0 0.0
        %1669 = vmatpush2.msra.mxu0 0.0
        %1670 = vmatprep.subr.mxu0 0.0
        %1671 = vmatpush2.msra.mxu0 0.0
        %1672 = vmatprep.subr.mxu0 0.0
        %1673 = vmatpush2.msra.mxu0 0.0
        %1674 = vmatprep.subr.mxu0 0.0
        %1675 = vmatpush2.msra.mxu0 0.0
        %1676 = vmatprep.subr.mxu0 0.0
        %1677 = vmatpush2.msra.mxu0 0.0
        %1678 = vmatprep.subr.mxu0 0.0
        %1679 = vmatpush2.msra.mxu0 0.0
        %1680 = vmatprep.subr.mxu0 0.0
        %1681 = vmatpush2.msra.mxu0 0.0
        %1682 = vmatprep.subr.mxu0 0.0
        %1683 = vmatpush2.msra.mxu0 0.0
        %1684 = vmatprep.subr.mxu0 0.0
        %1685 = vmatpush2.msra.mxu0 0.0
        %1686 = vmatprep.subr.mxu0 0.0
        %1687 = vmatpush2.msra.mxu0 0.0
        %1688 = vmatprep.subr.mxu0 0.0
        %1689 = vmatpush2.msra.mxu0 0.0
        %1690 = vmatprep.mubr.f32.mxu0 0.0
        %1691 = vmatmul.mubr.f32.gmra.mxu0 %v1548
        %v1692 = vpop.f32.mrf.mxu0
        %v1693 = vadd.f32 0.0, %v1692
        %v1694 = vpop.f32.mrf.mxu0
        %v1695 = vadd.f32 0.0, %v1694
        %1696 = vdwg.mxu0
        %v1697 = vadd.f32 %v1551, %v1622
        %v1698 = vadd.f32 %v1552, %v1624
        %v1699 = vadd.f32 %v1553, %v1693
        %v1700 = vadd.f32 %v1554, %v1695
        %v1701 = vmul.f32 %v1697, 0.5
        %v1702 = vtanh.pop %v1701
        %v1703 = vadd.f32 %v1702, 1.0
        %v1704 = vmul.f32 %v1703, 0.5
        %v1705 = vmul.f32 %v1698, 0.5
        %v1706 = vtanh.pop %v1705
        %v1707 = vadd.f32 %v1706, 1.0
        %v1708 = vmul.f32 %v1707, 0.5
        %v1709 = vtanh.pop %v1699
        %v1710 = vmul.f32 %v1700, 0.5
        %v1711 = vtanh.pop %v1710
        %v1712 = vadd.f32 %v1711, 1.0
        %v1713 = vmul.f32 %v1712, 0.5
        %v1714 = vmul.f32 %v1708, %v1549
        %v1715 = vmul.f32 %v1704, %v1709
        %v1716 = vadd.f32 %v1714, %v1715
        %v1717 = vtanh.pop %v1716
        %v1718 = vmul.f32 %v1713, %v1717
        %s1719 = scalar_lea.vmem %s363, 16 [#allocation9]
        %v1720 = vld [vmem:[%s1719] sm:$0xff]
        %v1721 = vsub.f32 %v1718, %v1548
        %1723 = vset.pattern.permute.xlu0 0
        %1724 = vperm.xlu0 %1723, %v1720
        %v1725 = vpop.permute.xlu0 %1724
        %v1727 = vmul.f32 %v1725, %v1721
        %v1728 = vadd.f32 %v1548, %v1727
        %v1729 = vsub.f32 %v1716, %v1549
        %v1730 = vmul.f32 %v1725, %v1729
        %v1731 = vadd.f32 %v1549, %v1730
        %1732 = vst [vmem:[#allocation3] sm:$0xff] %v1728
        %1733 = vst [vmem:[#allocation4] sm:$0xff] %v1731
        %s1734 = scalar_lea.vmem %s390, 16 [#allocation10]
        %1735 = vst [vmem:[%s1734] sm:$0xff] %v1728
        %v1736 = vld [vmem:[#allocation3] sm:$0xff]
        %v1737 = vld [vmem:[#allocation4] sm:$0xff]
        %s1738 = scalar_lea.vmem [#allocation2], 96
        %v1739 = vld [vmem:[%s1738] sm:$0xff]
        %v1740 = vld [vmem:[%s1738 + $0x8] sm:$0xff]
        %v1741 = vld [vmem:[%s1738 + $0x10] sm:$0xff]
        %v1742 = vld [vmem:[%s1738 + $0x18] sm:$0xff]
        %1743 = vmatprep.subr.mxu0 %v1172
        %1744 = vmatpush1.msra.mxu0 %v1171
        %1745 = vmatprep.subr.mxu0 %v1168
        %1746 = vmatpush1.msra.mxu0 %v1167
        %1747 = vmatprep.subr.mxu0 %v1164
        %1748 = vmatpush1.msra.mxu0 %v1163
        %1749 = vmatprep.subr.mxu0 %v1160
        %1750 = vmatpush1.msra.mxu0 %v1159
        %1751 = vmatprep.subr.mxu0 %v1156
        %1752 = vmatpush1.msra.mxu0 %v1155
        %1753 = vmatprep.subr.mxu0 %v1152
        %1754 = vmatpush1.msra.mxu0 %v1151
        %1755 = vmatprep.subr.mxu0 %v1148
        %1756 = vmatpush1.msra.mxu0 %v1147
        %1757 = vmatprep.subr.mxu0 %v1144
        %1758 = vmatpush1.msra.mxu0 %v1143
        %1759 = vmatprep.subr.mxu0 %v1140
        %1760 = vmatpush1.msra.mxu0 %v1139
        %1761 = vmatprep.subr.mxu0 %v1136
        %1762 = vmatpush1.msra.mxu0 %v1135
        %1763 = vmatprep.subr.mxu0 %v1132
        %1764 = vmatpush1.msra.mxu0 %v1131
        %1765 = vmatprep.subr.mxu0 %v1128
        %1766 = vmatpush1.msra.mxu0 %v1127
        %1767 = vmatprep.subr.mxu0 %v1124
        %1768 = vmatpush1.msra.mxu0 %v1123
        %1769 = vmatprep.subr.mxu0 %v1120
        %1770 = vmatpush1.msra.mxu0 %v1119
        %1771 = vmatprep.subr.mxu0 %v1116
        %1772 = vmatpush1.msra.mxu0 %v1115
        %1773 = vmatprep.subr.mxu0 %v1112
        %1774 = vmatpush1.msra.mxu0 %v1111
        %1775 = vmatprep.subr.mxu0 0.0
        %1776 = vmatpush2.msra.mxu0 0.0
        %1777 = vmatprep.subr.mxu0 0.0
        %1778 = vmatpush2.msra.mxu0 0.0
        %1779 = vmatprep.subr.mxu0 0.0
        %1780 = vmatpush2.msra.mxu0 0.0
        %1781 = vmatprep.subr.mxu0 0.0
        %1782 = vmatpush2.msra.mxu0 0.0
        %1783 = vmatprep.subr.mxu0 0.0
        %1784 = vmatpush2.msra.mxu0 0.0
        %1785 = vmatprep.subr.mxu0 0.0
        %1786 = vmatpush2.msra.mxu0 0.0
        %1787 = vmatprep.subr.mxu0 0.0
        %1788 = vmatpush2.msra.mxu0 0.0
        %1789 = vmatprep.subr.mxu0 0.0
        %1790 = vmatpush2.msra.mxu0 0.0
        %1791 = vmatprep.subr.mxu0 0.0
        %1792 = vmatpush2.msra.mxu0 0.0
        %1793 = vmatprep.subr.mxu0 0.0
        %1794 = vmatpush2.msra.mxu0 0.0
        %1795 = vmatprep.subr.mxu0 0.0
        %1796 = vmatpush2.msra.mxu0 0.0
        %1797 = vmatprep.subr.mxu0 0.0
        %1798 = vmatpush2.msra.mxu0 0.0
        %1799 = vmatprep.subr.mxu0 0.0
        %1800 = vmatpush2.msra.mxu0 0.0
        %1801 = vmatprep.subr.mxu0 0.0
        %1802 = vmatpush2.msra.mxu0 0.0
        %1803 = vmatprep.subr.mxu0 0.0
        %1804 = vmatpush2.msra.mxu0 0.0
        %1805 = vmatprep.subr.mxu0 0.0
        %1806 = vmatpush2.msra.mxu0 0.0
        %1807 = vmatprep.mubr.f32.mxu0 0.0
        %1808 = vmatmul.mubr.f32.gmra.mxu0 %v1736
        %v1809 = vpop.f32.mrf.mxu0
        %v1810 = vadd.f32 0.0, %v1809
        %v1811 = vpop.f32.mrf.mxu0
        %v1812 = vadd.f32 0.0, %v1811
        %1813 = vdwg.mxu0
        %1814 = vmatprep.subr.mxu0 %v1174
        %1815 = vmatpush1.msra.mxu0 %v1173
        %1816 = vmatprep.subr.mxu0 %v1170
        %1817 = vmatpush1.msra.mxu0 %v1169
        %1818 = vmatprep.subr.mxu0 %v1166
        %1819 = vmatpush1.msra.mxu0 %v1165
        %1820 = vmatprep.subr.mxu0 %v1162
        %1821 = vmatpush1.msra.mxu0 %v1161
        %1822 = vmatprep.subr.mxu0 %v1158
        %1823 = vmatpush1.msra.mxu0 %v1157
        %1824 = vmatprep.subr.mxu0 %v1154
        %1825 = vmatpush1.msra.mxu0 %v1153
        %1826 = vmatprep.subr.mxu0 %v1150
        %1827 = vmatpush1.msra.mxu0 %v1149
        %1828 = vmatprep.subr.mxu0 %v1146
        %1829 = vmatpush1.msra.mxu0 %v1145
        %1830 = vmatprep.subr.mxu0 %v1142
        %1831 = vmatpush1.msra.mxu0 %v1141
        %1832 = vmatprep.subr.mxu0 %v1138
        %1833 = vmatpush1.msra.mxu0 %v1137
        %1834 = vmatprep.subr.mxu0 %v1134
        %1835 = vmatpush1.msra.mxu0 %v1133
        %1836 = vmatprep.subr.mxu0 %v1130
        %1837 = vmatpush1.msra.mxu0 %v1129
        %1838 = vmatprep.subr.mxu0 %v1126
        %1839 = vmatpush1.msra.mxu0 %v1125
        %1840 = vmatprep.subr.mxu0 %v1122
        %1841 = vmatpush1.msra.mxu0 %v1121
        %1842 = vmatprep.subr.mxu0 %v1118
        %1843 = vmatpush1.msra.mxu0 %v1117
        %1844 = vmatprep.subr.mxu0 %v1114
        %1845 = vmatpush1.msra.mxu0 %v1113
        %1846 = vmatprep.subr.mxu0 0.0
        %1847 = vmatpush2.msra.mxu0 0.0
        %1848 = vmatprep.subr.mxu0 0.0
        %1849 = vmatpush2.msra.mxu0 0.0
        %1850 = vmatprep.subr.mxu0 0.0
        %1851 = vmatpush2.msra.mxu0 0.0
        %1852 = vmatprep.subr.mxu0 0.0
        %1853 = vmatpush2.msra.mxu0 0.0
        %1854 = vmatprep.subr.mxu0 0.0
        %1855 = vmatpush2.msra.mxu0 0.0
        %1856 = vmatprep.subr.mxu0 0.0
        %1857 = vmatpush2.msra.mxu0 0.0
        %1858 = vmatprep.subr.mxu0 0.0
        %1859 = vmatpush2.msra.mxu0 0.0
        %1860 = vmatprep.subr.mxu0 0.0
        %1861 = vmatpush2.msra.mxu0 0.0
        %1862 = vmatprep.subr.mxu0 0.0
        %1863 = vmatpush2.msra.mxu0 0.0
        %1864 = vmatprep.subr.mxu0 0.0
        %1865 = vmatpush2.msra.mxu0 0.0
        %1866 = vmatprep.subr.mxu0 0.0
        %1867 = vmatpush2.msra.mxu0 0.0
        %1868 = vmatprep.subr.mxu0 0.0
        %1869 = vmatpush2.msra.mxu0 0.0
        %1870 = vmatprep.subr.mxu0 0.0
        %1871 = vmatpush2.msra.mxu0 0.0
        %1872 = vmatprep.subr.mxu0 0.0
        %1873 = vmatpush2.msra.mxu0 0.0
        %1874 = vmatprep.subr.mxu0 0.0
        %1875 = vmatpush2.msra.mxu0 0.0
        %1876 = vmatprep.subr.mxu0 0.0
        %1877 = vmatpush2.msra.mxu0 0.0
        %1878 = vmatprep.mubr.f32.mxu0 0.0
        %1879 = vmatmul.mubr.f32.gmra.mxu0 %v1736
        %v1880 = vpop.f32.mrf.mxu0
        %v1881 = vadd.f32 0.0, %v1880
        %v1882 = vpop.f32.mrf.mxu0
        %v1883 = vadd.f32 0.0, %v1882
        %1884 = vdwg.mxu0
        %v1885 = vadd.f32 %v1739, %v1810
        %v1886 = vadd.f32 %v1740, %v1812
        %v1887 = vadd.f32 %v1741, %v1881
        %v1888 = vadd.f32 %v1742, %v1883
        %v1889 = vmul.f32 %v1885, 0.5
        %v1890 = vtanh.pop %v1889
        %v1891 = vadd.f32 %v1890, 1.0
        %v1892 = vmul.f32 %v1891, 0.5
        %v1893 = vmul.f32 %v1886, 0.5
        %v1894 = vtanh.pop %v1893
        %v1895 = vadd.f32 %v1894, 1.0
        %v1896 = vmul.f32 %v1895, 0.5
        %v1897 = vtanh.pop %v1887
        %v1898 = vmul.f32 %v1888, 0.5
        %v1899 = vtanh.pop %v1898
        %v1900 = vadd.f32 %v1899, 1.0
        %v1901 = vmul.f32 %v1900, 0.5
        %v1902 = vmul.f32 %v1896, %v1737
        %v1903 = vmul.f32 %v1892, %v1897
        %v1904 = vadd.f32 %v1902, %v1903
        %v1905 = vtanh.pop %v1904
        %v1906 = vmul.f32 %v1901, %v1905
        %s1907 = scalar_lea.vmem %s363, 24 [#allocation9]
        %v1908 = vld [vmem:[%s1907] sm:$0xff]
        %v1909 = vsub.f32 %v1906, %v1736
        %1911 = vset.pattern.permute.xlu0 0
        %1912 = vperm.xlu0 %1911, %v1908
        %v1913 = vpop.permute.xlu0 %1912
        %v1915 = vmul.f32 %v1913, %v1909
        %v1916 = vadd.f32 %v1736, %v1915
        %v1917 = vsub.f32 %v1904, %v1737
        %v1918 = vmul.f32 %v1913, %v1917
        %v1919 = vadd.f32 %v1737, %v1918
        %1920 = vst [vmem:[#allocation3] sm:$0xff] %v1916
        %1921 = vst [vmem:[#allocation4] sm:$0xff] %v1919
        %s1922 = scalar_lea.vmem %s390, 24 [#allocation10]
        %1923 = vst [vmem:[%s1922] sm:$0xff] %v1916
        %v1924 = vld [vmem:[#allocation3] sm:$0xff]
        %v1925 = vld [vmem:[#allocation4] sm:$0xff]
        %s1926 = scalar_lea.vmem [#allocation2], 128
        %v1927 = vld [vmem:[%s1926] sm:$0xff]
        %v1928 = vld [vmem:[%s1926 + $0x8] sm:$0xff]
        %v1929 = vld [vmem:[%s1926 + $0x10] sm:$0xff]
        %v1930 = vld [vmem:[%s1926 + $0x18] sm:$0xff]
        %1931 = vmatprep.subr.mxu0 %v1172
        %1932 = vmatpush1.msra.mxu0 %v1171
        %1933 = vmatprep.subr.mxu0 %v1168
        %1934 = vmatpush1.msra.mxu0 %v1167
        %1935 = vmatprep.subr.mxu0 %v1164
        %1936 = vmatpush1.msra.mxu0 %v1163
        %1937 = vmatprep.subr.mxu0 %v1160
        %1938 = vmatpush1.msra.mxu0 %v1159
        %1939 = vmatprep.subr.mxu0 %v1156
        %1940 = vmatpush1.msra.mxu0 %v1155
        %1941 = vmatprep.subr.mxu0 %v1152
        %1942 = vmatpush1.msra.mxu0 %v1151
        %1943 = vmatprep.subr.mxu0 %v1148
        %1944 = vmatpush1.msra.mxu0 %v1147
        %1945 = vmatprep.subr.mxu0 %v1144
        %1946 = vmatpush1.msra.mxu0 %v1143
        %1947 = vmatprep.subr.mxu0 %v1140
        %1948 = vmatpush1.msra.mxu0 %v1139
        %1949 = vmatprep.subr.mxu0 %v1136
        %1950 = vmatpush1.msra.mxu0 %v1135
        %1951 = vmatprep.subr.mxu0 %v1132
        %1952 = vmatpush1.msra.mxu0 %v1131
        %1953 = vmatprep.subr.mxu0 %v1128
        %1954 = vmatpush1.msra.mxu0 %v1127
        %1955 = vmatprep.subr.mxu0 %v1124
        %1956 = vmatpush1.msra.mxu0 %v1123
        %1957 = vmatprep.subr.mxu0 %v1120
        %1958 = vmatpush1.msra.mxu0 %v1119
        %1959 = vmatprep.subr.mxu0 %v1116
        %1960 = vmatpush1.msra.mxu0 %v1115
        %1961 = vmatprep.subr.mxu0 %v1112
        %1962 = vmatpush1.msra.mxu0 %v1111
        %1963 = vmatprep.subr.mxu0 0.0
        %1964 = vmatpush2.msra.mxu0 0.0
        %1965 = vmatprep.subr.mxu0 0.0
        %1966 = vmatpush2.msra.mxu0 0.0
        %1967 = vmatprep.subr.mxu0 0.0
        %1968 = vmatpush2.msra.mxu0 0.0
        %1969 = vmatprep.subr.mxu0 0.0
        %1970 = vmatpush2.msra.mxu0 0.0
        %1971 = vmatprep.subr.mxu0 0.0
        %1972 = vmatpush2.msra.mxu0 0.0
        %1973 = vmatprep.subr.mxu0 0.0
        %1974 = vmatpush2.msra.mxu0 0.0
        %1975 = vmatprep.subr.mxu0 0.0
        %1976 = vmatpush2.msra.mxu0 0.0
        %1977 = vmatprep.subr.mxu0 0.0
        %1978 = vmatpush2.msra.mxu0 0.0
        %1979 = vmatprep.subr.mxu0 0.0
        %1980 = vmatpush2.msra.mxu0 0.0
        %1981 = vmatprep.subr.mxu0 0.0
        %1982 = vmatpush2.msra.mxu0 0.0
        %1983 = vmatprep.subr.mxu0 0.0
        %1984 = vmatpush2.msra.mxu0 0.0
        %1985 = vmatprep.subr.mxu0 0.0
        %1986 = vmatpush2.msra.mxu0 0.0
        %1987 = vmatprep.subr.mxu0 0.0
        %1988 = vmatpush2.msra.mxu0 0.0
        %1989 = vmatprep.subr.mxu0 0.0
        %1990 = vmatpush2.msra.mxu0 0.0
        %1991 = vmatprep.subr.mxu0 0.0
        %1992 = vmatpush2.msra.mxu0 0.0
        %1993 = vmatprep.subr.mxu0 0.0
        %1994 = vmatpush2.msra.mxu0 0.0
        %1995 = vmatprep.mubr.f32.mxu0 0.0
        %1996 = vmatmul.mubr.f32.gmra.mxu0 %v1924
        %v1997 = vpop.f32.mrf.mxu0
        %v1998 = vadd.f32 0.0, %v1997
        %v1999 = vpop.f32.mrf.mxu0
        %v2000 = vadd.f32 0.0, %v1999
        %2001 = vdwg.mxu0
        %2002 = vmatprep.subr.mxu0 %v1174
        %2003 = vmatpush1.msra.mxu0 %v1173
        %2004 = vmatprep.subr.mxu0 %v1170
        %2005 = vmatpush1.msra.mxu0 %v1169
        %2006 = vmatprep.subr.mxu0 %v1166
        %2007 = vmatpush1.msra.mxu0 %v1165
        %2008 = vmatprep.subr.mxu0 %v1162
        %2009 = vmatpush1.msra.mxu0 %v1161
        %2010 = vmatprep.subr.mxu0 %v1158
        %2011 = vmatpush1.msra.mxu0 %v1157
        %2012 = vmatprep.subr.mxu0 %v1154
        %2013 = vmatpush1.msra.mxu0 %v1153
        %2014 = vmatprep.subr.mxu0 %v1150
        %2015 = vmatpush1.msra.mxu0 %v1149
        %2016 = vmatprep.subr.mxu0 %v1146
        %2017 = vmatpush1.msra.mxu0 %v1145
        %2018 = vmatprep.subr.mxu0 %v1142
        %2019 = vmatpush1.msra.mxu0 %v1141
        %2020 = vmatprep.subr.mxu0 %v1138
        %2021 = vmatpush1.msra.mxu0 %v1137
        %2022 = vmatprep.subr.mxu0 %v1134
        %2023 = vmatpush1.msra.mxu0 %v1133
        %2024 = vmatprep.subr.mxu0 %v1130
        %2025 = vmatpush1.msra.mxu0 %v1129
        %2026 = vmatprep.subr.mxu0 %v1126
        %2027 = vmatpush1.msra.mxu0 %v1125
        %2028 = vmatprep.subr.mxu0 %v1122
        %2029 = vmatpush1.msra.mxu0 %v1121
        %2030 = vmatprep.subr.mxu0 %v1118
        %2031 = vmatpush1.msra.mxu0 %v1117
        %2032 = vmatprep.subr.mxu0 %v1114
        %2033 = vmatpush1.msra.mxu0 %v1113
        %2034 = vmatprep.subr.mxu0 0.0
        %2035 = vmatpush2.msra.mxu0 0.0
        %2036 = vmatprep.subr.mxu0 0.0
        %2037 = vmatpush2.msra.mxu0 0.0
        %2038 = vmatprep.subr.mxu0 0.0
        %2039 = vmatpush2.msra.mxu0 0.0
        %2040 = vmatprep.subr.mxu0 0.0
        %2041 = vmatpush2.msra.mxu0 0.0
        %2042 = vmatprep.subr.mxu0 0.0
        %2043 = vmatpush2.msra.mxu0 0.0
        %2044 = vmatprep.subr.mxu0 0.0
        %2045 = vmatpush2.msra.mxu0 0.0
        %2046 = vmatprep.subr.mxu0 0.0
        %2047 = vmatpush2.msra.mxu0 0.0
        %2048 = vmatprep.subr.mxu0 0.0
        %2049 = vmatpush2.msra.mxu0 0.0
        %2050 = vmatprep.subr.mxu0 0.0
        %2051 = vmatpush2.msra.mxu0 0.0
        %2052 = vmatprep.subr.mxu0 0.0
        %2053 = vmatpush2.msra.mxu0 0.0
        %2054 = vmatprep.subr.mxu0 0.0
        %2055 = vmatpush2.msra.mxu0 0.0
        %2056 = vmatprep.subr.mxu0 0.0
        %2057 = vmatpush2.msra.mxu0 0.0
        %2058 = vmatprep.subr.mxu0 0.0
        %2059 = vmatpush2.msra.mxu0 0.0
        %2060 = vmatprep.subr.mxu0 0.0
        %2061 = vmatpush2.msra.mxu0 0.0
        %2062 = vmatprep.subr.mxu0 0.0
        %2063 = vmatpush2.msra.mxu0 0.0
        %2064 = vmatprep.subr.mxu0 0.0
        %2065 = vmatpush2.msra.mxu0 0.0
        %2066 = vmatprep.mubr.f32.mxu0 0.0
        %2067 = vmatmul.mubr.f32.gmra.mxu0 %v1924
        %v2068 = vpop.f32.mrf.mxu0
        %v2069 = vadd.f32 0.0, %v2068
        %v2070 = vpop.f32.mrf.mxu0
        %v2071 = vadd.f32 0.0, %v2070
        %2072 = vdwg.mxu0
        %v2073 = vadd.f32 %v1927, %v1998
        %v2074 = vadd.f32 %v1928, %v2000
        %v2075 = vadd.f32 %v1929, %v2069
        %v2076 = vadd.f32 %v1930, %v2071
        %v2077 = vmul.f32 %v2073, 0.5
        %v2078 = vtanh.pop %v2077
        %v2079 = vadd.f32 %v2078, 1.0
        %v2080 = vmul.f32 %v2079, 0.5
        %v2081 = vmul.f32 %v2074, 0.5
        %v2082 = vtanh.pop %v2081
        %v2083 = vadd.f32 %v2082, 1.0
        %v2084 = vmul.f32 %v2083, 0.5
        %v2085 = vtanh.pop %v2075
        %v2086 = vmul.f32 %v2076, 0.5
        %v2087 = vtanh.pop %v2086
        %v2088 = vadd.f32 %v2087, 1.0
        %v2089 = vmul.f32 %v2088, 0.5
        %v2090 = vmul.f32 %v2084, %v1925
        %v2091 = vmul.f32 %v2080, %v2085
        %v2092 = vadd.f32 %v2090, %v2091
        %v2093 = vtanh.pop %v2092
        %v2094 = vmul.f32 %v2089, %v2093
        %s2095 = scalar_lea.vmem %s363, 32 [#allocation9]
        %v2096 = vld [vmem:[%s2095] sm:$0xff]
        %v2097 = vsub.f32 %v2094, %v1924
        %2099 = vset.pattern.permute.xlu0 0
        %2100 = vperm.xlu0 %2099, %v2096
        %v2101 = vpop.permute.xlu0 %2100
        %v2103 = vmul.f32 %v2101, %v2097
        %v2104 = vadd.f32 %v1924, %v2103
        %v2105 = vsub.f32 %v2092, %v1925
        %v2106 = vmul.f32 %v2101, %v2105
        %v2107 = vadd.f32 %v1925, %v2106
        %2108 = vst [vmem:[#allocation3] sm:$0xff] %v2104
        %2109 = vst [vmem:[#allocation4] sm:$0xff] %v2107
        %s2110 = scalar_lea.vmem %s390, 32 [#allocation10]
        %2111 = vst [vmem:[%s2110] sm:$0xff] %v2104
        %v2112 = vld [vmem:[#allocation3] sm:$0xff]
        %v2113 = vld [vmem:[#allocation4] sm:$0xff]
        %s2114 = scalar_lea.vmem [#allocation2], 160
        %v2115 = vld [vmem:[%s2114] sm:$0xff]
        %v2116 = vld [vmem:[%s2114 + $0x8] sm:$0xff]
        %v2117 = vld [vmem:[%s2114 + $0x10] sm:$0xff]
        %v2118 = vld [vmem:[%s2114 + $0x18] sm:$0xff]
        %2119 = vmatprep.subr.mxu0 %v1172
        %2120 = vmatpush1.msra.mxu0 %v1171
        %2121 = vmatprep.subr.mxu0 %v1168
        %2122 = vmatpush1.msra.mxu0 %v1167
        %2123 = vmatprep.subr.mxu0 %v1164
        %2124 = vmatpush1.msra.mxu0 %v1163
        %2125 = vmatprep.subr.mxu0 %v1160
        %2126 = vmatpush1.msra.mxu0 %v1159
        %2127 = vmatprep.subr.mxu0 %v1156
        %2128 = vmatpush1.msra.mxu0 %v1155
        %2129 = vmatprep.subr.mxu0 %v1152
        %2130 = vmatpush1.msra.mxu0 %v1151
        %2131 = vmatprep.subr.mxu0 %v1148
        %2132 = vmatpush1.msra.mxu0 %v1147
        %2133 = vmatprep.subr.mxu0 %v1144
        %2134 = vmatpush1.msra.mxu0 %v1143
        %2135 = vmatprep.subr.mxu0 %v1140
        %2136 = vmatpush1.msra.mxu0 %v1139
        %2137 = vmatprep.subr.mxu0 %v1136
        %2138 = vmatpush1.msra.mxu0 %v1135
        %2139 = vmatprep.subr.mxu0 %v1132
        %2140 = vmatpush1.msra.mxu0 %v1131
        %2141 = vmatprep.subr.mxu0 %v1128
        %2142 = vmatpush1.msra.mxu0 %v1127
        %2143 = vmatprep.subr.mxu0 %v1124
        %2144 = vmatpush1.msra.mxu0 %v1123
        %2145 = vmatprep.subr.mxu0 %v1120
        %2146 = vmatpush1.msra.mxu0 %v1119
        %2147 = vmatprep.subr.mxu0 %v1116
        %2148 = vmatpush1.msra.mxu0 %v1115
        %2149 = vmatprep.subr.mxu0 %v1112
        %2150 = vmatpush1.msra.mxu0 %v1111
        %2151 = vmatprep.subr.mxu0 0.0
        %2152 = vmatpush2.msra.mxu0 0.0
        %2153 = vmatprep.subr.mxu0 0.0
        %2154 = vmatpush2.msra.mxu0 0.0
        %2155 = vmatprep.subr.mxu0 0.0
        %2156 = vmatpush2.msra.mxu0 0.0
        %2157 = vmatprep.subr.mxu0 0.0
        %2158 = vmatpush2.msra.mxu0 0.0
        %2159 = vmatprep.subr.mxu0 0.0
        %2160 = vmatpush2.msra.mxu0 0.0
        %2161 = vmatprep.subr.mxu0 0.0
        %2162 = vmatpush2.msra.mxu0 0.0
        %2163 = vmatprep.subr.mxu0 0.0
        %2164 = vmatpush2.msra.mxu0 0.0
        %2165 = vmatprep.subr.mxu0 0.0
        %2166 = vmatpush2.msra.mxu0 0.0
        %2167 = vmatprep.subr.mxu0 0.0
        %2168 = vmatpush2.msra.mxu0 0.0
        %2169 = vmatprep.subr.mxu0 0.0
        %2170 = vmatpush2.msra.mxu0 0.0
        %2171 = vmatprep.subr.mxu0 0.0
        %2172 = vmatpush2.msra.mxu0 0.0
        %2173 = vmatprep.subr.mxu0 0.0
        %2174 = vmatpush2.msra.mxu0 0.0
        %2175 = vmatprep.subr.mxu0 0.0
        %2176 = vmatpush2.msra.mxu0 0.0
        %2177 = vmatprep.subr.mxu0 0.0
        %2178 = vmatpush2.msra.mxu0 0.0
        %2179 = vmatprep.subr.mxu0 0.0
        %2180 = vmatpush2.msra.mxu0 0.0
        %2181 = vmatprep.subr.mxu0 0.0
        %2182 = vmatpush2.msra.mxu0 0.0
        %2183 = vmatprep.mubr.f32.mxu0 0.0
        %2184 = vmatmul.mubr.f32.gmra.mxu0 %v2112
        %v2185 = vpop.f32.mrf.mxu0
        %v2186 = vadd.f32 0.0, %v2185
        %v2187 = vpop.f32.mrf.mxu0
        %v2188 = vadd.f32 0.0, %v2187
        %2189 = vdwg.mxu0
        %2190 = vmatprep.subr.mxu0 %v1174
        %2191 = vmatpush1.msra.mxu0 %v1173
        %2192 = vmatprep.subr.mxu0 %v1170
        %2193 = vmatpush1.msra.mxu0 %v1169
        %2194 = vmatprep.subr.mxu0 %v1166
        %2195 = vmatpush1.msra.mxu0 %v1165
        %2196 = vmatprep.subr.mxu0 %v1162
        %2197 = vmatpush1.msra.mxu0 %v1161
        %2198 = vmatprep.subr.mxu0 %v1158
        %2199 = vmatpush1.msra.mxu0 %v1157
        %2200 = vmatprep.subr.mxu0 %v1154
        %2201 = vmatpush1.msra.mxu0 %v1153
        %2202 = vmatprep.subr.mxu0 %v1150
        %2203 = vmatpush1.msra.mxu0 %v1149
        %2204 = vmatprep.subr.mxu0 %v1146
        %2205 = vmatpush1.msra.mxu0 %v1145
        %2206 = vmatprep.subr.mxu0 %v1142
        %2207 = vmatpush1.msra.mxu0 %v1141
        %2208 = vmatprep.subr.mxu0 %v1138
        %2209 = vmatpush1.msra.mxu0 %v1137
        %2210 = vmatprep.subr.mxu0 %v1134
        %2211 = vmatpush1.msra.mxu0 %v1133
        %2212 = vmatprep.subr.mxu0 %v1130
        %2213 = vmatpush1.msra.mxu0 %v1129
        %2214 = vmatprep.subr.mxu0 %v1126
        %2215 = vmatpush1.msra.mxu0 %v1125
        %2216 = vmatprep.subr.mxu0 %v1122
        %2217 = vmatpush1.msra.mxu0 %v1121
        %2218 = vmatprep.subr.mxu0 %v1118
        %2219 = vmatpush1.msra.mxu0 %v1117
        %2220 = vmatprep.subr.mxu0 %v1114
        %2221 = vmatpush1.msra.mxu0 %v1113
        %2222 = vmatprep.subr.mxu0 0.0
        %2223 = vmatpush2.msra.mxu0 0.0
        %2224 = vmatprep.subr.mxu0 0.0
        %2225 = vmatpush2.msra.mxu0 0.0
        %2226 = vmatprep.subr.mxu0 0.0
        %2227 = vmatpush2.msra.mxu0 0.0
        %2228 = vmatprep.subr.mxu0 0.0
        %2229 = vmatpush2.msra.mxu0 0.0
        %2230 = vmatprep.subr.mxu0 0.0
        %2231 = vmatpush2.msra.mxu0 0.0
        %2232 = vmatprep.subr.mxu0 0.0
        %2233 = vmatpush2.msra.mxu0 0.0
        %2234 = vmatprep.subr.mxu0 0.0
        %2235 = vmatpush2.msra.mxu0 0.0
        %2236 = vmatprep.subr.mxu0 0.0
        %2237 = vmatpush2.msra.mxu0 0.0
        %2238 = vmatprep.subr.mxu0 0.0
        %2239 = vmatpush2.msra.mxu0 0.0
        %2240 = vmatprep.subr.mxu0 0.0
        %2241 = vmatpush2.msra.mxu0 0.0
        %2242 = vmatprep.subr.mxu0 0.0
        %2243 = vmatpush2.msra.mxu0 0.0
        %2244 = vmatprep.subr.mxu0 0.0
        %2245 = vmatpush2.msra.mxu0 0.0
        %2246 = vmatprep.subr.mxu0 0.0
        %2247 = vmatpush2.msra.mxu0 0.0
        %2248 = vmatprep.subr.mxu0 0.0
        %2249 = vmatpush2.msra.mxu0 0.0
        %2250 = vmatprep.subr.mxu0 0.0
        %2251 = vmatpush2.msra.mxu0 0.0
        %2252 = vmatprep.subr.mxu0 0.0
        %2253 = vmatpush2.msra.mxu0 0.0
        %2254 = vmatprep.mubr.f32.mxu0 0.0
        %2255 = vmatmul.mubr.f32.gmra.mxu0 %v2112
        %v2256 = vpop.f32.mrf.mxu0
        %v2257 = vadd.f32 0.0, %v2256
        %v2258 = vpop.f32.mrf.mxu0
        %v2259 = vadd.f32 0.0, %v2258
        %2260 = vdwg.mxu0
        %v2261 = vadd.f32 %v2115, %v2186
        %v2262 = vadd.f32 %v2116, %v2188
        %v2263 = vadd.f32 %v2117, %v2257
        %v2264 = vadd.f32 %v2118, %v2259
        %v2265 = vmul.f32 %v2261, 0.5
        %v2266 = vtanh.pop %v2265
        %v2267 = vadd.f32 %v2266, 1.0
        %v2268 = vmul.f32 %v2267, 0.5
        %v2269 = vmul.f32 %v2262, 0.5
        %v2270 = vtanh.pop %v2269
        %v2271 = vadd.f32 %v2270, 1.0
        %v2272 = vmul.f32 %v2271, 0.5
        %v2273 = vtanh.pop %v2263
        %v2274 = vmul.f32 %v2264, 0.5
        %v2275 = vtanh.pop %v2274
        %v2276 = vadd.f32 %v2275, 1.0
        %v2277 = vmul.f32 %v2276, 0.5
        %v2278 = vmul.f32 %v2272, %v2113
        %v2279 = vmul.f32 %v2268, %v2273
        %v2280 = vadd.f32 %v2278, %v2279
        %v2281 = vtanh.pop %v2280
        %v2282 = vmul.f32 %v2277, %v2281
        %s2283 = scalar_lea.vmem %s363, 40 [#allocation9]
        %v2284 = vld [vmem:[%s2283] sm:$0xff]
        %v2285 = vsub.f32 %v2282, %v2112
        %2287 = vset.pattern.permute.xlu0 0
        %2288 = vperm.xlu0 %2287, %v2284
        %v2289 = vpop.permute.xlu0 %2288
        %v2291 = vmul.f32 %v2289, %v2285
        %v2292 = vadd.f32 %v2112, %v2291
        %v2293 = vsub.f32 %v2280, %v2113
        %v2294 = vmul.f32 %v2289, %v2293
        %v2295 = vadd.f32 %v2113, %v2294
        %2296 = vst [vmem:[#allocation3] sm:$0xff] %v2292
        %2297 = vst [vmem:[#allocation4] sm:$0xff] %v2295
        %s2298 = scalar_lea.vmem %s390, 40 [#allocation10]
        %2299 = vst [vmem:[%s2298] sm:$0xff] %v2292
        %v2300 = vld [vmem:[#allocation3] sm:$0xff]
        %v2301 = vld [vmem:[#allocation4] sm:$0xff]
        %s2302 = scalar_lea.vmem [#allocation2], 192
        %v2303 = vld [vmem:[%s2302] sm:$0xff]
        %v2304 = vld [vmem:[%s2302 + $0x8] sm:$0xff]
        %v2305 = vld [vmem:[%s2302 + $0x10] sm:$0xff]
        %v2306 = vld [vmem:[%s2302 + $0x18] sm:$0xff]
        %2307 = vmatprep.subr.mxu0 %v1172
        %2308 = vmatpush1.msra.mxu0 %v1171
        %2309 = vmatprep.subr.mxu0 %v1168
        %2310 = vmatpush1.msra.mxu0 %v1167
        %2311 = vmatprep.subr.mxu0 %v1164
        %2312 = vmatpush1.msra.mxu0 %v1163
        %2313 = vmatprep.subr.mxu0 %v1160
        %2314 = vmatpush1.msra.mxu0 %v1159
        %2315 = vmatprep.subr.mxu0 %v1156
        %2316 = vmatpush1.msra.mxu0 %v1155
        %2317 = vmatprep.subr.mxu0 %v1152
        %2318 = vmatpush1.msra.mxu0 %v1151
        %2319 = vmatprep.subr.mxu0 %v1148
        %2320 = vmatpush1.msra.mxu0 %v1147
        %2321 = vmatprep.subr.mxu0 %v1144
        %2322 = vmatpush1.msra.mxu0 %v1143
        %2323 = vmatprep.subr.mxu0 %v1140
        %2324 = vmatpush1.msra.mxu0 %v1139
        %2325 = vmatprep.subr.mxu0 %v1136
        %2326 = vmatpush1.msra.mxu0 %v1135
        %2327 = vmatprep.subr.mxu0 %v1132
        %2328 = vmatpush1.msra.mxu0 %v1131
        %2329 = vmatprep.subr.mxu0 %v1128
        %2330 = vmatpush1.msra.mxu0 %v1127
        %2331 = vmatprep.subr.mxu0 %v1124
        %2332 = vmatpush1.msra.mxu0 %v1123
        %2333 = vmatprep.subr.mxu0 %v1120
        %2334 = vmatpush1.msra.mxu0 %v1119
        %2335 = vmatprep.subr.mxu0 %v1116
        %2336 = vmatpush1.msra.mxu0 %v1115
        %2337 = vmatprep.subr.mxu0 %v1112
        %2338 = vmatpush1.msra.mxu0 %v1111
        %2339 = vmatprep.subr.mxu0 0.0
        %2340 = vmatpush2.msra.mxu0 0.0
        %2341 = vmatprep.subr.mxu0 0.0
        %2342 = vmatpush2.msra.mxu0 0.0
        %2343 = vmatprep.subr.mxu0 0.0
        %2344 = vmatpush2.msra.mxu0 0.0
        %2345 = vmatprep.subr.mxu0 0.0
        %2346 = vmatpush2.msra.mxu0 0.0
        %2347 = vmatprep.subr.mxu0 0.0
        %2348 = vmatpush2.msra.mxu0 0.0
        %2349 = vmatprep.subr.mxu0 0.0
        %2350 = vmatpush2.msra.mxu0 0.0
        %2351 = vmatprep.subr.mxu0 0.0
        %2352 = vmatpush2.msra.mxu0 0.0
        %2353 = vmatprep.subr.mxu0 0.0
        %2354 = vmatpush2.msra.mxu0 0.0
        %2355 = vmatprep.subr.mxu0 0.0
        %2356 = vmatpush2.msra.mxu0 0.0
        %2357 = vmatprep.subr.mxu0 0.0
        %2358 = vmatpush2.msra.mxu0 0.0
        %2359 = vmatprep.subr.mxu0 0.0
        %2360 = vmatpush2.msra.mxu0 0.0
        %2361 = vmatprep.subr.mxu0 0.0
        %2362 = vmatpush2.msra.mxu0 0.0
        %2363 = vmatprep.subr.mxu0 0.0
        %2364 = vmatpush2.msra.mxu0 0.0
        %2365 = vmatprep.subr.mxu0 0.0
        %2366 = vmatpush2.msra.mxu0 0.0
        %2367 = vmatprep.subr.mxu0 0.0
        %2368 = vmatpush2.msra.mxu0 0.0
        %2369 = vmatprep.subr.mxu0 0.0
        %2370 = vmatpush2.msra.mxu0 0.0
        %2371 = vmatprep.mubr.f32.mxu0 0.0
        %2372 = vmatmul.mubr.f32.gmra.mxu0 %v2300
        %v2373 = vpop.f32.mrf.mxu0
        %v2374 = vadd.f32 0.0, %v2373
        %v2375 = vpop.f32.mrf.mxu0
        %v2376 = vadd.f32 0.0, %v2375
        %2377 = vdwg.mxu0
        %2378 = vmatprep.subr.mxu0 %v1174
        %2379 = vmatpush1.msra.mxu0 %v1173
        %2380 = vmatprep.subr.mxu0 %v1170
        %2381 = vmatpush1.msra.mxu0 %v1169
        %2382 = vmatprep.subr.mxu0 %v1166
        %2383 = vmatpush1.msra.mxu0 %v1165
        %2384 = vmatprep.subr.mxu0 %v1162
        %2385 = vmatpush1.msra.mxu0 %v1161
        %2386 = vmatprep.subr.mxu0 %v1158
        %2387 = vmatpush1.msra.mxu0 %v1157
        %2388 = vmatprep.subr.mxu0 %v1154
        %2389 = vmatpush1.msra.mxu0 %v1153
        %2390 = vmatprep.subr.mxu0 %v1150
        %2391 = vmatpush1.msra.mxu0 %v1149
        %2392 = vmatprep.subr.mxu0 %v1146
        %2393 = vmatpush1.msra.mxu0 %v1145
        %2394 = vmatprep.subr.mxu0 %v1142
        %2395 = vmatpush1.msra.mxu0 %v1141
        %2396 = vmatprep.subr.mxu0 %v1138
        %2397 = vmatpush1.msra.mxu0 %v1137
        %2398 = vmatprep.subr.mxu0 %v1134
        %2399 = vmatpush1.msra.mxu0 %v1133
        %2400 = vmatprep.subr.mxu0 %v1130
        %2401 = vmatpush1.msra.mxu0 %v1129
        %2402 = vmatprep.subr.mxu0 %v1126
        %2403 = vmatpush1.msra.mxu0 %v1125
        %2404 = vmatprep.subr.mxu0 %v1122
        %2405 = vmatpush1.msra.mxu0 %v1121
        %2406 = vmatprep.subr.mxu0 %v1118
        %2407 = vmatpush1.msra.mxu0 %v1117
        %2408 = vmatprep.subr.mxu0 %v1114
        %2409 = vmatpush1.msra.mxu0 %v1113
        %2410 = vmatprep.subr.mxu0 0.0
        %2411 = vmatpush2.msra.mxu0 0.0
        %2412 = vmatprep.subr.mxu0 0.0
        %2413 = vmatpush2.msra.mxu0 0.0
        %2414 = vmatprep.subr.mxu0 0.0
        %2415 = vmatpush2.msra.mxu0 0.0
        %2416 = vmatprep.subr.mxu0 0.0
        %2417 = vmatpush2.msra.mxu0 0.0
        %2418 = vmatprep.subr.mxu0 0.0
        %2419 = vmatpush2.msra.mxu0 0.0
        %2420 = vmatprep.subr.mxu0 0.0
        %2421 = vmatpush2.msra.mxu0 0.0
        %2422 = vmatprep.subr.mxu0 0.0
        %2423 = vmatpush2.msra.mxu0 0.0
        %2424 = vmatprep.subr.mxu0 0.0
        %2425 = vmatpush2.msra.mxu0 0.0
        %2426 = vmatprep.subr.mxu0 0.0
        %2427 = vmatpush2.msra.mxu0 0.0
        %2428 = vmatprep.subr.mxu0 0.0
        %2429 = vmatpush2.msra.mxu0 0.0
        %2430 = vmatprep.subr.mxu0 0.0
        %2431 = vmatpush2.msra.mxu0 0.0
        %2432 = vmatprep.subr.mxu0 0.0
        %2433 = vmatpush2.msra.mxu0 0.0
        %2434 = vmatprep.subr.mxu0 0.0
        %2435 = vmatpush2.msra.mxu0 0.0
        %2436 = vmatprep.subr.mxu0 0.0
        %2437 = vmatpush2.msra.mxu0 0.0
        %2438 = vmatprep.subr.mxu0 0.0
        %2439 = vmatpush2.msra.mxu0 0.0
        %2440 = vmatprep.subr.mxu0 0.0
        %2441 = vmatpush2.msra.mxu0 0.0
        %2442 = vmatprep.mubr.f32.mxu0 0.0
        %2443 = vmatmul.mubr.f32.gmra.mxu0 %v2300
        %v2444 = vpop.f32.mrf.mxu0
        %v2445 = vadd.f32 0.0, %v2444
        %v2446 = vpop.f32.mrf.mxu0
        %v2447 = vadd.f32 0.0, %v2446
        %2448 = vdwg.mxu0
        %v2449 = vadd.f32 %v2303, %v2374
        %v2450 = vadd.f32 %v2304, %v2376
        %v2451 = vadd.f32 %v2305, %v2445
        %v2452 = vadd.f32 %v2306, %v2447
        %v2453 = vmul.f32 %v2449, 0.5
        %v2454 = vtanh.pop %v2453
        %v2455 = vadd.f32 %v2454, 1.0
        %v2456 = vmul.f32 %v2455, 0.5
        %v2457 = vmul.f32 %v2450, 0.5
        %v2458 = vtanh.pop %v2457
        %v2459 = vadd.f32 %v2458, 1.0
        %v2460 = vmul.f32 %v2459, 0.5
        %v2461 = vtanh.pop %v2451
        %v2462 = vmul.f32 %v2452, 0.5
        %v2463 = vtanh.pop %v2462
        %v2464 = vadd.f32 %v2463, 1.0
        %v2465 = vmul.f32 %v2464, 0.5
        %v2466 = vmul.f32 %v2460, %v2301
        %v2467 = vmul.f32 %v2456, %v2461
        %v2468 = vadd.f32 %v2466, %v2467
        %v2469 = vtanh.pop %v2468
        %v2470 = vmul.f32 %v2465, %v2469
        %s2471 = scalar_lea.vmem %s363, 48 [#allocation9]
        %v2472 = vld [vmem:[%s2471] sm:$0xff]
        %v2473 = vsub.f32 %v2470, %v2300
        %2475 = vset.pattern.permute.xlu0 0
        %2476 = vperm.xlu0 %2475, %v2472
        %v2477 = vpop.permute.xlu0 %2476
        %v2479 = vmul.f32 %v2477, %v2473
        %v2480 = vadd.f32 %v2300, %v2479
        %v2481 = vsub.f32 %v2468, %v2301
        %v2482 = vmul.f32 %v2477, %v2481
        %v2483 = vadd.f32 %v2301, %v2482
        %2484 = vst [vmem:[#allocation3] sm:$0xff] %v2480
        %2485 = vst [vmem:[#allocation4] sm:$0xff] %v2483
        %s2486 = scalar_lea.vmem %s390, 48 [#allocation10]
        %2487 = vst [vmem:[%s2486] sm:$0xff] %v2480
        %v2488 = vld [vmem:[#allocation3] sm:$0xff]
        %v2489 = vld [vmem:[#allocation4] sm:$0xff]
        %s2490 = scalar_lea.vmem [#allocation2], 224
        %v2491 = vld [vmem:[%s2490] sm:$0xff]
        %v2492 = vld [vmem:[%s2490 + $0x8] sm:$0xff]
        %v2493 = vld [vmem:[%s2490 + $0x10] sm:$0xff]
        %v2494 = vld [vmem:[%s2490 + $0x18] sm:$0xff]
        %2495 = vmatprep.subr.mxu0 %v1172
        %2496 = vmatpush1.msra.mxu0 %v1171
        %2497 = vmatprep.subr.mxu0 %v1168
        %2498 = vmatpush1.msra.mxu0 %v1167
        %2499 = vmatprep.subr.mxu0 %v1164
        %2500 = vmatpush1.msra.mxu0 %v1163
        %2501 = vmatprep.subr.mxu0 %v1160
        %2502 = vmatpush1.msra.mxu0 %v1159
        %2503 = vmatprep.subr.mxu0 %v1156
        %2504 = vmatpush1.msra.mxu0 %v1155
        %2505 = vmatprep.subr.mxu0 %v1152
        %2506 = vmatpush1.msra.mxu0 %v1151
        %2507 = vmatprep.subr.mxu0 %v1148
        %2508 = vmatpush1.msra.mxu0 %v1147
        %2509 = vmatprep.subr.mxu0 %v1144
        %2510 = vmatpush1.msra.mxu0 %v1143
        %2511 = vmatprep.subr.mxu0 %v1140
        %2512 = vmatpush1.msra.mxu0 %v1139
        %2513 = vmatprep.subr.mxu0 %v1136
        %2514 = vmatpush1.msra.mxu0 %v1135
        %2515 = vmatprep.subr.mxu0 %v1132
        %2516 = vmatpush1.msra.mxu0 %v1131
        %2517 = vmatprep.subr.mxu0 %v1128
        %2518 = vmatpush1.msra.mxu0 %v1127
        %2519 = vmatprep.subr.mxu0 %v1124
        %2520 = vmatpush1.msra.mxu0 %v1123
        %2521 = vmatprep.subr.mxu0 %v1120
        %2522 = vmatpush1.msra.mxu0 %v1119
        %2523 = vmatprep.subr.mxu0 %v1116
        %2524 = vmatpush1.msra.mxu0 %v1115
        %2525 = vmatprep.subr.mxu0 %v1112
        %2526 = vmatpush1.msra.mxu0 %v1111
        %2527 = vmatprep.subr.mxu0 0.0
        %2528 = vmatpush2.msra.mxu0 0.0
        %2529 = vmatprep.subr.mxu0 0.0
        %2530 = vmatpush2.msra.mxu0 0.0
        %2531 = vmatprep.subr.mxu0 0.0
        %2532 = vmatpush2.msra.mxu0 0.0
        %2533 = vmatprep.subr.mxu0 0.0
        %2534 = vmatpush2.msra.mxu0 0.0
        %2535 = vmatprep.subr.mxu0 0.0
        %2536 = vmatpush2.msra.mxu0 0.0
        %2537 = vmatprep.subr.mxu0 0.0
        %2538 = vmatpush2.msra.mxu0 0.0
        %2539 = vmatprep.subr.mxu0 0.0
        %2540 = vmatpush2.msra.mxu0 0.0
        %2541 = vmatprep.subr.mxu0 0.0
        %2542 = vmatpush2.msra.mxu0 0.0
        %2543 = vmatprep.subr.mxu0 0.0
        %2544 = vmatpush2.msra.mxu0 0.0
        %2545 = vmatprep.subr.mxu0 0.0
        %2546 = vmatpush2.msra.mxu0 0.0
        %2547 = vmatprep.subr.mxu0 0.0
        %2548 = vmatpush2.msra.mxu0 0.0
        %2549 = vmatprep.subr.mxu0 0.0
        %2550 = vmatpush2.msra.mxu0 0.0
        %2551 = vmatprep.subr.mxu0 0.0
        %2552 = vmatpush2.msra.mxu0 0.0
        %2553 = vmatprep.subr.mxu0 0.0
        %2554 = vmatpush2.msra.mxu0 0.0
        %2555 = vmatprep.subr.mxu0 0.0
        %2556 = vmatpush2.msra.mxu0 0.0
        %2557 = vmatprep.subr.mxu0 0.0
        %2558 = vmatpush2.msra.mxu0 0.0
        %2559 = vmatprep.mubr.f32.mxu0 0.0
        %2560 = vmatmul.mubr.f32.gmra.mxu0 %v2488
        %v2561 = vpop.f32.mrf.mxu0
        %v2562 = vadd.f32 0.0, %v2561
        %v2563 = vpop.f32.mrf.mxu0
        %v2564 = vadd.f32 0.0, %v2563
        %2565 = vdwg.mxu0
        %2566 = vmatprep.subr.mxu0 %v1174
        %2567 = vmatpush1.msra.mxu0 %v1173
        %2568 = vmatprep.subr.mxu0 %v1170
        %2569 = vmatpush1.msra.mxu0 %v1169
        %2570 = vmatprep.subr.mxu0 %v1166
        %2571 = vmatpush1.msra.mxu0 %v1165
        %2572 = vmatprep.subr.mxu0 %v1162
        %2573 = vmatpush1.msra.mxu0 %v1161
        %2574 = vmatprep.subr.mxu0 %v1158
        %2575 = vmatpush1.msra.mxu0 %v1157
        %2576 = vmatprep.subr.mxu0 %v1154
        %2577 = vmatpush1.msra.mxu0 %v1153
        %2578 = vmatprep.subr.mxu0 %v1150
        %2579 = vmatpush1.msra.mxu0 %v1149
        %2580 = vmatprep.subr.mxu0 %v1146
        %2581 = vmatpush1.msra.mxu0 %v1145
        %2582 = vmatprep.subr.mxu0 %v1142
        %2583 = vmatpush1.msra.mxu0 %v1141
        %2584 = vmatprep.subr.mxu0 %v1138
        %2585 = vmatpush1.msra.mxu0 %v1137
        %2586 = vmatprep.subr.mxu0 %v1134
        %2587 = vmatpush1.msra.mxu0 %v1133
        %2588 = vmatprep.subr.mxu0 %v1130
        %2589 = vmatpush1.msra.mxu0 %v1129
        %2590 = vmatprep.subr.mxu0 %v1126
        %2591 = vmatpush1.msra.mxu0 %v1125
        %2592 = vmatprep.subr.mxu0 %v1122
        %2593 = vmatpush1.msra.mxu0 %v1121
        %2594 = vmatprep.subr.mxu0 %v1118
        %2595 = vmatpush1.msra.mxu0 %v1117
        %2596 = vmatprep.subr.mxu0 %v1114
        %2597 = vmatpush1.msra.mxu0 %v1113
        %2598 = vmatprep.subr.mxu0 0.0
        %2599 = vmatpush2.msra.mxu0 0.0
        %2600 = vmatprep.subr.mxu0 0.0
        %2601 = vmatpush2.msra.mxu0 0.0
        %2602 = vmatprep.subr.mxu0 0.0
        %2603 = vmatpush2.msra.mxu0 0.0
        %2604 = vmatprep.subr.mxu0 0.0
        %2605 = vmatpush2.msra.mxu0 0.0
        %2606 = vmatprep.subr.mxu0 0.0
        %2607 = vmatpush2.msra.mxu0 0.0
        %2608 = vmatprep.subr.mxu0 0.0
        %2609 = vmatpush2.msra.mxu0 0.0
        %2610 = vmatprep.subr.mxu0 0.0
        %2611 = vmatpush2.msra.mxu0 0.0
        %2612 = vmatprep.subr.mxu0 0.0
        %2613 = vmatpush2.msra.mxu0 0.0
        %2614 = vmatprep.subr.mxu0 0.0
        %2615 = vmatpush2.msra.mxu0 0.0
        %2616 = vmatprep.subr.mxu0 0.0
        %2617 = vmatpush2.msra.mxu0 0.0
        %2618 = vmatprep.subr.mxu0 0.0
        %2619 = vmatpush2.msra.mxu0 0.0
        %2620 = vmatprep.subr.mxu0 0.0
        %2621 = vmatpush2.msra.mxu0 0.0
        %2622 = vmatprep.subr.mxu0 0.0
        %2623 = vmatpush2.msra.mxu0 0.0
        %2624 = vmatprep.subr.mxu0 0.0
        %2625 = vmatpush2.msra.mxu0 0.0
        %2626 = vmatprep.subr.mxu0 0.0
        %2627 = vmatpush2.msra.mxu0 0.0
        %2628 = vmatprep.subr.mxu0 0.0
        %2629 = vmatpush2.msra.mxu0 0.0
        %2630 = vmatprep.mubr.f32.mxu0 0.0
        %2631 = vmatmul.mubr.f32.gmra.mxu0 %v2488
        %v2632 = vpop.f32.mrf.mxu0
        %v2633 = vadd.f32 0.0, %v2632
        %v2634 = vpop.f32.mrf.mxu0
        %v2635 = vadd.f32 0.0, %v2634
        %2636 = vdwg.mxu0
        %v2637 = vadd.f32 %v2491, %v2562
        %v2638 = vadd.f32 %v2492, %v2564
        %v2639 = vadd.f32 %v2493, %v2633
        %v2640 = vadd.f32 %v2494, %v2635
        %v2641 = vmul.f32 %v2637, 0.5
        %v2642 = vtanh.pop %v2641
        %v2643 = vadd.f32 %v2642, 1.0
        %v2644 = vmul.f32 %v2643, 0.5
        %v2645 = vmul.f32 %v2638, 0.5
        %v2646 = vtanh.pop %v2645
        %v2647 = vadd.f32 %v2646, 1.0
        %v2648 = vmul.f32 %v2647, 0.5
        %v2649 = vtanh.pop %v2639
        %v2650 = vmul.f32 %v2640, 0.5
        %v2651 = vtanh.pop %v2650
        %v2652 = vadd.f32 %v2651, 1.0
        %v2653 = vmul.f32 %v2652, 0.5
        %v2654 = vmul.f32 %v2648, %v2489
        %v2655 = vmul.f32 %v2644, %v2649
        %v2656 = vadd.f32 %v2654, %v2655
        %v2657 = vtanh.pop %v2656
        %v2658 = vmul.f32 %v2653, %v2657
        %s2659 = scalar_lea.vmem %s363, 56 [#allocation9]
        %v2660 = vld [vmem:[%s2659] sm:$0xff]
        %v2661 = vsub.f32 %v2658, %v2488
        %2663 = vset.pattern.permute.xlu0 0
        %2664 = vperm.xlu0 %2663, %v2660
        %v2665 = vpop.permute.xlu0 %2664
        %v2667 = vmul.f32 %v2665, %v2661
        %v2668 = vadd.f32 %v2488, %v2667
        %v2669 = vsub.f32 %v2656, %v2489
        %v2670 = vmul.f32 %v2665, %v2669
        %v2671 = vadd.f32 %v2489, %v2670
        %2672 = vst [vmem:[#allocation3] sm:$0xff] %v2668
        %2673 = vst [vmem:[#allocation4] sm:$0xff] %v2671
        %s2674 = scalar_lea.vmem %s390, 56 [#allocation10]
        %2675 = vst [vmem:[%s2674] sm:$0xff] %v2668
        %s2676 = sand.u32 %s159, 1
        %s2677 = sand.u32 %s159, 1
        %s2678 = smul.addr %s2677, 64
        %s2679 = scalar_lea.vmem [#allocation10], %s2678
        // Predicated region
        $region189: #{lstm_rnn_forward.1} parent=107 // pred_check
          %p2680 = pneg %p169
        $region190: #{lstm_rnn_forward.1} parent=107 // pred_check_branch
          %2682 = sbr.rel (%p2680) target = $region192
        $region191: #{lstm_rnn_forward.1} parent=107 // pred_region
          %s2683 = smul.u32 8, %s23
          %s2684 = smul.addr %s2683, 2
          %s2685 = sadd.s32 %s22, %s2684
          %s2686 = smul.addr %s2685, 8
          %s2687 = scalar_lea.vmem %s7, %s2686
          // Predicated region
          $region193: #{lstm_rnn_forward.1} parent=191 // pred_check
            _
          $region194: #{lstm_rnn_forward.1} parent=191 // pred_check_branch
            %2689 = sbr.rel (0) target = $region196
          $region195: #{lstm_rnn_forward.1} parent=191 // pred_region
            // Predicated region
            $region197: #{lstm_rnn_forward.1} parent=195 // pred_check
              _
            $region198: #{lstm_rnn_forward.1} parent=195 // pred_check_branch
              %2691 = sbr.rel (0) target = $region200
            $region199: #{lstm_rnn_forward.1} parent=195 // pred_region
              // Predicated region
              $region212: #{lstm_rnn_forward.1} parent=199 // pred_check
                _
              $region213: #{lstm_rnn_forward.1} parent=199 // pred_check_branch
                %2721 = sbr.rel (0) target = $region215
              $region214: #{lstm_rnn_forward.1} parent=199 // pred_region
                loop: start=0, step=1, limit=1
                $region216: #{lstm_rnn_forward.1} parent=214 // loop_pre_header
                  _
                $region217: #{lstm_rnn_forward.1} parent=214 // loop_header
                  %s2723 = sphi 0, %s2727
                  %p2724 = scmp.ge.s32.totalorder %s2723, 1
                  %s2728 = sphi %s2679, %s2679
                  %s2729 = sphi %s2687, %s2687
                $region218: #{lstm_rnn_forward.1} parent=214 // loop_header_branch
                  %2726 = sbr.rel (%p2724) target = $region222
                $region219: #{lstm_rnn_forward.1} parent=214 // loop_body
                  %v2730 = vld [vmem:[%s2728] sm:$0xff]
                  %2731 = vst [vmem:[%s2729] sm:$0xff] %v2730
                  %v2732 = vld [vmem:[%s2728 + $0x8] sm:$0xff]
                  %2733 = vst [vmem:[%s2729 + $0x10] sm:$0xff] %v2732
                  %v2734 = vld [vmem:[%s2728 + $0x10] sm:$0xff]
                  %2735 = vst [vmem:[%s2729 + $0x20] sm:$0xff] %v2734
                  %v2736 = vld [vmem:[%s2728 + $0x18] sm:$0xff]
                  %2737 = vst [vmem:[%s2729 + $0x30] sm:$0xff] %v2736
                  %v2738 = vld [vmem:[%s2728 + $0x20] sm:$0xff]
                  %2739 = vst [vmem:[%s2729 + $0x40] sm:$0xff] %v2738
                  %v2740 = vld [vmem:[%s2728 + $0x28] sm:$0xff]
                  %2741 = vst [vmem:[%s2729 + $0x50] sm:$0xff] %v2740
                  %v2742 = vld [vmem:[%s2728 + $0x30] sm:$0xff]
                  %2743 = vst [vmem:[%s2729 + $0x60] sm:$0xff] %v2742
                  %v2744 = vld [vmem:[%s2728 + $0x38] sm:$0xff]
                  %2745 = vst [vmem:[%s2729 + $0x70] sm:$0xff] %v2744
                $region220: #{lstm_rnn_forward.1} parent=214 // loop_footer
                  %s2727 = sadd.s32 1, %s2723
                $region221: #{lstm_rnn_forward.1} parent=214 // loop_footer_branch
                  %2722 = sbr.rel target = $region217
                $region222: #{lstm_rnn_forward.1} parent=214 // loop_exit
                  _
              $region215: #{lstm_rnn_forward.1} parent=199 // pred_fallthru
                _
              // Predicated region
              $region223: #{lstm_rnn_forward.1} parent=199 // pred_check
                _
              $region224: #{lstm_rnn_forward.1} parent=199 // pred_check_branch
                %2747 = sbr.rel target = $region226
              $region225: #{lstm_rnn_forward.1} parent=199 // pred_region
                _
              $region226: #{lstm_rnn_forward.1} parent=199 // pred_fallthru
                _
            $region200: #{lstm_rnn_forward.1} parent=195 // pred_fallthru
              _
            // Predicated region
            $region201: #{lstm_rnn_forward.1} parent=195 // pred_check
              _
            $region202: #{lstm_rnn_forward.1} parent=195 // pred_check_branch
              %2693 = sbr.rel target = $region204
            $region203: #{lstm_rnn_forward.1} parent=195 // pred_region
              %s2695 = ssub.s32 256, 1
              loop: start=0, step=1, limit=1
              $region205: #{lstm_rnn_forward.1} parent=203 // loop_pre_header
                _
              $region206: #{lstm_rnn_forward.1} parent=203 // loop_header
                %s2697 = sphi 0, %s2701
                %p2698 = scmp.ge.s32.totalorder %s2697, 1
                %s2702 = sphi %s2679, %s2679
                %s2703 = sphi %s2687, %s2687
              $region207: #{lstm_rnn_forward.1} parent=203 // loop_header_branch
                %2700 = sbr.rel (%p2698) target = $region211
              $region208: #{lstm_rnn_forward.1} parent=203 // loop_body
                %v2704 = vld [vmem:[%s2702] sm:%s2695]
                %2705 = vst [vmem:[%s2703] sm:%s2695] %v2704
                %v2706 = vld [vmem:[%s2702 + $0x8] sm:%s2695]
                %2707 = vst [vmem:[%s2703 + $0x10] sm:%s2695] %v2706
                %v2708 = vld [vmem:[%s2702 + $0x10] sm:%s2695]
                %2709 = vst [vmem:[%s2703 + $0x20] sm:%s2695] %v2708
                %v2710 = vld [vmem:[%s2702 + $0x18] sm:%s2695]
                %2711 = vst [vmem:[%s2703 + $0x30] sm:%s2695] %v2710
                %v2712 = vld [vmem:[%s2702 + $0x20] sm:%s2695]
                %2713 = vst [vmem:[%s2703 + $0x40] sm:%s2695] %v2712
                %v2714 = vld [vmem:[%s2702 + $0x28] sm:%s2695]
                %2715 = vst [vmem:[%s2703 + $0x50] sm:%s2695] %v2714
                %v2716 = vld [vmem:[%s2702 + $0x30] sm:%s2695]
                %2717 = vst [vmem:[%s2703 + $0x60] sm:%s2695] %v2716
                %v2718 = vld [vmem:[%s2702 + $0x38] sm:%s2695]
                %2719 = vst [vmem:[%s2703 + $0x70] sm:%s2695] %v2718
              $region209: #{lstm_rnn_forward.1} parent=203 // loop_footer
                %s2701 = sadd.s32 1, %s2697
              $region210: #{lstm_rnn_forward.1} parent=203 // loop_footer_branch
                %2696 = sbr.rel target = $region206
              $region211: #{lstm_rnn_forward.1} parent=203 // loop_exit
                _
            $region204: #{lstm_rnn_forward.1} parent=195 // pred_fallthru
              _
          $region196: #{lstm_rnn_forward.1} parent=191 // pred_fallthru
            _
          %2748 = vnop
        $region192: #{lstm_rnn_forward.1} parent=107 // pred_fallthru
          _
      $region108: #{lstm_rnn_forward.1} parent=5 // pred_fallthru
        _
      %p2749 = scmp.le.s32.totalorder 2, %s13
      // Predicated region
      $region227: #{lstm_rnn_forward.1} parent=5 // pred_check
        %p2750 = pneg %p2749
      $region228: #{lstm_rnn_forward.1} parent=5 // pred_check_branch
        %2752 = sbr.rel (%p2750) target = $region230
      $region229: #{lstm_rnn_forward.1} parent=5 // pred_region
        %s2753 = ssub.s32 %s13, 2
        // Predicated region
        $region231: #{lstm_rnn_forward.1} parent=229 // pred_check
          %p2754 = pneg %p175
        $region232: #{lstm_rnn_forward.1} parent=229 // pred_check_branch
          %2756 = sbr.rel (%p2754) target = $region234
        $region233: #{lstm_rnn_forward.1} parent=229 // pred_region
          %s2757 = sand.u32 %s160, 1
          %s2758 = sand.u32 %s160, 1
          %s2759 = smul.addr %s2758, 64
          %s2760 = scalar_lea.vmem [#allocation10], %s2759
        $region234: #{lstm_rnn_forward.1} parent=229 // pred_fallthru
          _
      $region230: #{lstm_rnn_forward.1} parent=5 // pred_fallthru
        _
    $region6: #{lstm_rnn_forward.1} parent=1 // loop_footer
      %s17 = sadd.s32 1, %s13
    $region7: #{lstm_rnn_forward.1} parent=1 // loop_footer_branch
      %12 = sbr.rel target = $region3
    $region8: #{lstm_rnn_forward.1} parent=1 // loop_exit
      _
  %2761 = vsyncmov [#allocation7]
  %s2762 = vpop.sfrf %2761
  %p2763 = scmp.eq.s32.totalorder %s2762, 0
  %p2764 = pneg %p2763
  %2766 = shalt.err (%p2764)
  %s2767 = scalar_lea.sflag [#allocation7], 1
  %2768 = vsyncmov %s2767
  %s2769 = vpop.sfrf %2768
  %p2770 = scmp.eq.s32.totalorder %s2769, 0
  %p2771 = pneg %p2770
  %2773 = shalt.err (%p2771)

</llo_original>
